<compile_context>
chip_gen: v5e
topology: v5e:2x2
jax: 0.10.0
libtpu: 0.0.40
codegen_flags: <defaults>
</compile_context>

<pallas_src>
import math
import functools

import jax
import jax.numpy as jnp
import numpy as np
from jax.experimental import pallas as pl
from jax.experimental.pallas import tpu as pltpu


# ------------------------------------------------------------------ kernel

def fused_forward_kernel(src_ref, params_ref, pe_ref,
                         we_ref, be_ref, wp_ref, bp_ref,
                         wq_ref, bq_ref, wk_ref, bk_ref, wv_ref, bv_ref,
                         wo_ref, bo_ref, g1_ref, be1_ref,
                         w1_ref, b1_ref, w2_ref, b2_ref, g2_ref, be2_ref,
                         wd_ref, bd_ref,
                         out_ref, x_ref,
                         *, bt, S, E, nhead, head_dim):
    bf16 = jnp.bfloat16
    M = bt * S
    l = pl.program_id(1)
    scale = 1.0 / math.sqrt(head_dim)

    def layer_norm(y, g, b):
        mu = jnp.mean(y, axis=-1, keepdims=True)
        var = jnp.mean((y - mu) ** 2, axis=-1, keepdims=True)
        return (y - mu) * jax.lax.rsqrt(var + 1e-5) * g + b

    # ---- embed + param embed + positional enc + tanh (first layer step) ----
    @pl.when(l == 0)
    def _():
        src = src_ref[...].reshape(M, -1).astype(bf16)
        src_emb = jnp.dot(src, we_ref[...],
                          preferred_element_type=jnp.float32) + be_ref[...]
        prm = params_ref[...].reshape(bt, -1).astype(bf16)
        p_emb = jnp.dot(prm, wp_ref[...],
                        preferred_element_type=jnp.float32) + bp_ref[...]
        x0 = src_emb.reshape(bt, S, E) + p_emb[:, None, :] + pe_ref[...]
        x_ref[...] = jnp.tanh(x0).reshape(M, E)

    # ------------- one encoder layer (this grid step's streamed weights) ----
    x = x_ref[...]                                                # (M, E) f32
    xb = x.astype(bf16)
    q = (jnp.dot(xb, wq_ref[0], preferred_element_type=jnp.float32)
         + bq_ref[0]) * scale                        # fold 1/sqrt(hd) into q
    k = jnp.dot(xb, wk_ref[0], preferred_element_type=jnp.float32) + bk_ref[0]
    v = jnp.dot(xb, wv_ref[0], preferred_element_type=jnp.float32) + bv_ref[0]

    wo = wo_ref[0]                                               # (E, E) bf16
    attn = jnp.zeros((M, E), jnp.float32)
    for h in range(nhead):                          # static unroll over heads
        sl = slice(h * head_dim, (h + 1) * head_dim)
        qh = q[:, sl].reshape(bt, S, head_dim).astype(bf16)
        kh = k[:, sl].reshape(bt, S, head_dim).astype(bf16)
        vh = v[:, sl].reshape(bt, S, head_dim).astype(bf16)
        s = jnp.einsum('bqd,bkd->bqk', qh, kh,
                       preferred_element_type=jnp.float32)
        s = s - jnp.max(s, axis=-1, keepdims=True)
        p = jnp.exp(s)
        inv = pl.reciprocal(jnp.sum(p, axis=-1, keepdims=True), approx=True)
        o = jnp.einsum('bqk,bkd->bqd', p.astype(bf16), vh,
                       preferred_element_type=jnp.float32) * inv
        # fuse away the head concat: project each head through its W_o rows
        attn = attn + jnp.dot(o.reshape(M, head_dim).astype(bf16),
                              wo[sl, :], preferred_element_type=jnp.float32)
    attn = attn + bo_ref[0]

    # post-norm TransformerEncoderLayer (norm_first=False), relu FFN
    x1 = layer_norm(x + attn, g1_ref[0], be1_ref[0])
    h1 = jnp.maximum(
        jnp.dot(x1.astype(bf16), w1_ref[0],
                preferred_element_type=jnp.float32) + b1_ref[0], 0.0)
    ff = jnp.dot(h1.astype(bf16), w2_ref[0],
                 preferred_element_type=jnp.float32) + b2_ref[0]
    x2 = layer_norm(x1 + ff, g2_ref[0], be2_ref[0])
    x_ref[...] = x2

    # ---------------- mean pool over sequence + decode (last layer step) ----
    @pl.when(l == pl.num_programs(1) - 1)
    def _():
        pooled = jnp.mean(x2.reshape(bt, S, E), axis=1)            # (bt, E)
        out = jnp.dot(pooled.astype(bf16), wd_ref[...],
                      preferred_element_type=jnp.float32) + bd_ref[...]
        out_ref[...] = out.reshape(bt, 1, -1)


# ----------------------------------------------------------------- wrapper

def _pick_bt(B, S, E, F):
    """Largest batch block dividing B that (a) leaves >=2 'parallel' blocks
    (v7x megacore) and (b) keeps f32 activations under a small VMEM budget."""
    budget = 8 * (1 << 20)
    bt = 1
    while True:
        nxt = bt * 2
        if nxt > B or B % nxt != 0:
            break
        if B // nxt < 2:
            break
        if nxt * S * (E + F) * 4 * 2 > budget:
            break
        bt = nxt
    return bt


def _pad_axis(a, axis, mult=128):
    size = a.shape[axis]
    pad = (-size) % mult
    if pad == 0:
        return a
    cfg = [(0, 0)] * a.ndim
    cfg[axis] = (0, pad)
    return jnp.pad(a, cfg)


def spectrum_transformer_forward(src, params_vec, w, nhead):
    B, S, Din = src.shape
    Dp = params_vec.shape[1]
    E = w["we"].shape[1]
    O = w["wd"].shape[1]
    L = len(w["layers"])
    F = w["layers"][0]["w1"].shape[1]
    head_dim = E // nhead
    bf16, f32 = jnp.bfloat16, jnp.float32

    # ---- lane-pad tiny trailing dims with zeros (result is unchanged) ------
    src_p = _pad_axis(src, -1)                                   # (B,S,Din_p)
    params3 = _pad_axis(params_vec[:, None, :], -1)              # (B,1,Dp_p)
    we = _pad_axis(w["we"], 0).astype(bf16)                      # (Din_p,E)
    wp = _pad_axis(w["wp"], 0).astype(bf16)                      # (Dp_p,E)
    wd = _pad_axis(w["wd"], 1).astype(bf16)                      # (E,O_p)
    bd = _pad_axis(w["bd"], 1).astype(f32)                       # (1,O_p)
    be, bp = w["be"].astype(f32), w["bp"].astype(f32)
    Din_p, Dp_p, O_p = src_p.shape[-1], params3.shape[-1], wd.shape[-1]

    pe3 = w["pe"][:B][:, None, :].astype(f32)   # pe indexed by batch (as ref)

    # ---- per-layer weights stacked on a leading layer axis, bf16 matmuls ---
    layers = w["layers"]

    def stack(name, dtype):
        return jnp.stack([lp[name] for lp in layers]).astype(dtype)

    wq, wk, wv, wo = (stack(n, bf16) for n in ("wq", "wk", "wv", "wo"))
    w1, w2 = stack("w1", bf16), stack("w2", bf16)
    bq, bk, bv, bo = (stack(n, f32) for n in ("bq", "bk", "bv", "bo"))
    b1, b2 = stack("b1", f32), stack("b2", f32)
    g1, be1, g2, be2 = (stack(n, f32) for n in ("g1", "be1", "g2", "be2"))

    bt = _pick_bt(B, S, E, F)
    nb = pl.cdiv(B, bt)
    grid = (nb, L)

    def batched(shape):
        nd = len(shape) - 1
        return pl.BlockSpec(shape, lambda b, l, nd=nd: (b,) + (0,) * nd)

    def invariant(shape):
        nd = len(shape)
        return pl.BlockSpec(shape, lambda b, l, nd=nd: (0,) * nd)

    def per_layer(shape):
        nd = len(shape)
        return pl.BlockSpec((1,) + shape, lambda b, l, nd=nd: (l,) + (0,) * nd)

    # ---- scoped VMEM sized to the real working set (one streamed layer) ----
    per_layer_bytes = (4 * E * E + 2 * E * F) * 2          # bf16, one layer
    invariant_bytes = (Din_p * E + Dp_p * E + E * O_p) * 2
    act_bytes = bt * S * (F + 8 * E) * 4 + bt * nhead * S * S * 4
    est = 2 * (2 * per_layer_bytes) + 2 * invariant_bytes + 4 * act_bytes
    vmem_limit = int(min(max(est + (4 << 20), 32 << 20), 64 << 20))

    kern = functools.partial(fused_forward_kernel, bt=bt, S=S, E=E,
                             nhead=nhead, head_dim=head_dim)

    out3 = pl.pallas_call(
        kern,
        out_shape=jax.ShapeDtypeStruct((B, 1, O_p), jnp.float32),
        grid=grid,
        in_specs=[
            batched((bt, S, Din_p)),
            batched((bt, 1, Dp_p)),
            batched((bt, 1, E)),
            invariant((Din_p, E)), invariant((1, E)),
            invariant((Dp_p, E)), invariant((1, E)),
            per_layer((E, E)), per_layer((1, E)),      # wq, bq
            per_layer((E, E)), per_layer((1, E)),      # wk, bk
            per_layer((E, E)), per_layer((1, E)),      # wv, bv
            per_layer((E, E)), per_layer((1, E)),      # wo, bo
            per_layer((1, E)), per_layer((1, E)),      # g1, be1
            per_layer((E, F)), per_layer((1, F)),      # w1, b1
            per_layer((F, E)), per_layer((1, E)),      # w2, b2
            per_layer((1, E)), per_layer((1, E)),      # g2, be2
            invariant((E, O_p)), invariant((1, O_p)),
        ],
        out_specs=batched((bt, 1, O_p)),
        scratch_shapes=[pltpu.VMEM((bt * S, E), jnp.float32)],
        compiler_params=pltpu.CompilerParams(
            dimension_semantics=("parallel", "arbitrary"),
            vmem_limit_bytes=vmem_limit),
    )(src_p, params3, pe3, we, be, wp, bp,
      wq, bq, wk, bk, wv, bv, wo, bo, g1, be1, w1, b1, w2, b2, g2, be2,
      wd, bd)

    return out3.reshape(B, O_p)[:, :O]


# -------------------------------------------------------- params / reference

def make_pe(max_len, d_model):
    position = jnp.arange(max_len, dtype=jnp.float32)[:, None]
    div_term = jnp.exp(jnp.arange(0, d_model, 2, dtype=jnp.float32)
                       * (-math.log(10000.0) / d_model))
    pe = jnp.zeros((max_len, d_model), jnp.float32)
    pe = pe.at[:, 0::2].set(jnp.sin(position * div_term))
    pe = pe.at[:, 1::2].set(jnp.cos(position * div_term))
    return pe


def init_weights(key, input_dim, param_dim, output_dim, nhead, num_layers,
                 dim_ff=2048, max_len=5000):
    embed_dim = ((input_dim - 1) // nhead + 1) * nhead

    def lin(k, fi, fo):
        k1, k2 = jax.random.split(k)
        wgt = jax.random.normal(k1, (fi, fo), jnp.float32) / math.sqrt(fi)
        bia = jax.random.normal(k2, (1, fo), jnp.float32) * 0.01
        return wgt, bia

    keys = jax.random.split(key, 3 + num_layers)
    we, be = lin(keys[0], input_dim, embed_dim)
    wp, bp = lin(keys[1], param_dim, embed_dim)
    wd, bd = lin(keys[2], embed_dim, output_dim)

    layers = []
    for li in range(num_layers):
        lk = jax.random.split(keys[3 + li], 6)
        wq, bq = lin(lk[0], embed_dim, embed_dim)
        wk_, bk = lin(lk[1], embed_dim, embed_dim)
        wv, bv = lin(lk[2], embed_dim, embed_dim)
        wo, bo = lin(lk[3], embed_dim, embed_dim)
        w1, b1 = lin(lk[4], embed_dim, dim_ff)
        w2, b2 = lin(lk[5], dim_ff, embed_dim)
        ones = jnp.ones((1, embed_dim), jnp.float32)
        zeros = jnp.zeros((1, embed_dim), jnp.float32)
        layers.append(dict(wq=wq, wk=wk_, wv=wv, bq=bq, bk=bk, bv=bv,
                           wo=wo, bo=bo, g1=ones, be1=zeros,
                           w1=w1, b1=b1, w2=w2, b2=b2, g2=ones, be2=zeros))

    return dict(we=we, be=be, wp=wp, bp=bp, wd=wd, bd=bd,
                pe=make_pe(max_len, embed_dim), layers=layers), embed_dim


def reference_forward(src, params_vec, w, nhead, mm_dtype=jnp.float32):
    """Plain-JAX reference.  mm_dtype=f32 -> faithful f32 reference of the
    PyTorch module; mm_dtype=bf16 -> mirrors the kernel's MXU dtype."""
    B, S, _ = src.shape
    E = w["we"].shape[1]
    hd = E // nhead
    f32 = jnp.float32

    def mm(a, b):
        return jnp.dot(a.astype(mm_dtype), b.astype(mm_dtype),
                       preferred_element_type=f32)

    def layer_norm(y, g, b):
        mu = jnp.mean(y, axis=-1, keepdims=True)
        var = jnp.mean((y - mu) ** 2, axis=-1, keepdims=True)
        return (y - mu) * jax.lax.rsqrt(var + 1e-5) * g + b

    x = mm(src, w["we"]) + w["be"] + (mm(params_vec, w["wp"]) + w["bp"])[:, None, :]
    x = x + w["pe"][:B][:, None, :]
    x = jnp.tanh(x)
    scale = 1.0 / math.sqrt(hd)
    for lp in w["layers"]:
        q = ((mm(x, lp["wq"]) + lp["bq"]) * scale).reshape(B, S, nhead, hd)
        k = (mm(x, lp["wk"]) + lp["bk"]).reshape(B, S, nhead, hd)
        v = (mm(x, lp["wv"]) + lp["bv"]).reshape(B, S, nhead, hd)
        s = jnp.einsum("bqhd,bkhd->bhqk", q.astype(mm_dtype), k.astype(mm_dtype),
                       preferred_element_type=f32)
        s = s - jnp.max(s, axis=-1, keepdims=True)
        p = jnp.exp(s)
        denom = jnp.sum(p, axis=-1, keepdims=True)
        o = jnp.einsum("bhqk,bkhd->bqhd", p.astype(mm_dtype), v.astype(mm_dtype),
                       preferred_element_type=f32)
        o = o / jnp.transpose(denom, (0, 2, 1, 3))
        a = mm(o.reshape(B, S, E), lp["wo"]) + lp["bo"]
        x = layer_norm(x + a, lp["g1"], lp["be1"])
        h1 = jnp.maximum(mm(x, lp["w1"]) + lp["b1"], 0.0)
        f = mm(h1, lp["w2"]) + lp["b2"]
        x = layer_norm(x + f, lp["g2"], lp["be2"])
    return mm(x.mean(axis=1), w["wd"]) + w["bd"]


# --------------------------------------------------------------------- main

if __name__ == "__main__":
    B, S = 2, 8
    input_dim, param_dim, output_dim = 30, 5, 6
    nhead, num_encoder_layers = 4, 2

    key = jax.random.PRNGKey(0)
    kw, ks, kp = jax.random.split(key, 3)
    weights, embed_dim = init_weights(kw, input_dim, param_dim, output_dim,
                                      nhead, num_encoder_layers)
    src = jax.random.normal(ks, (B, S, input_dim), jnp.float32)
    params_vec = jax.random.normal(kp, (B, param_dim), jnp.float32)

    out = spectrum_transformer_forward(src, params_vec, weights, nhead)
    out = jax.block_until_ready(out)
    assert out.shape == (B, output_dim)

    # tight check against a bf16-matmul reference (same MXU dtype as kernel)
    ref_bf16 = jax.block_until_ready(
        reference_forward(src, params_vec, weights, nhead, jnp.bfloat16))
    np.testing.assert_allclose(np.asarray(out), np.asarray(ref_bf16),
                               rtol=1e-2, atol=1e-2)

    # loose check against the pure-f32 reference (bf16 MXU math in kernel)
    ref_f32 = jax.block_until_ready(
        reference_forward(src, params_vec, weights, nhead, jnp.float32))
    np.testing.assert_allclose(np.asarray(out), np.asarray(ref_f32),
                               rtol=1e-1, atol=1e-1)
    print("KERNEL_OK")
</pallas_src>

<mosaic_0001>
module attributes {stable_mosaic.version = 11 : i64} {
  func.func @fused_forward_kernel(%arg0: i32, %arg1: i32, %arg2: memref<1x8x128xf32, #tpu.memory_space<vmem>>, %arg3: memref<1x1x128xf32, #tpu.memory_space<vmem>>, %arg4: memref<1x1x32xf32, #tpu.memory_space<vmem>>, %arg5: memref<128x32xbf16, #tpu.memory_space<vmem>>, %arg6: memref<1x32xf32, #tpu.memory_space<vmem>>, %arg7: memref<128x32xbf16, #tpu.memory_space<vmem>>, %arg8: memref<1x32xf32, #tpu.memory_space<vmem>>, %arg9: memref<1x32x32xbf16, #tpu.memory_space<vmem>>, %arg10: memref<1x1x32xf32, #tpu.memory_space<vmem>>, %arg11: memref<1x32x32xbf16, #tpu.memory_space<vmem>>, %arg12: memref<1x1x32xf32, #tpu.memory_space<vmem>>, %arg13: memref<1x32x32xbf16, #tpu.memory_space<vmem>>, %arg14: memref<1x1x32xf32, #tpu.memory_space<vmem>>, %arg15: memref<1x32x32xbf16, #tpu.memory_space<vmem>>, %arg16: memref<1x1x32xf32, #tpu.memory_space<vmem>>, %arg17: memref<1x1x32xf32, #tpu.memory_space<vmem>>, %arg18: memref<1x1x32xf32, #tpu.memory_space<vmem>>, %arg19: memref<1x32x2048xbf16, #tpu.memory_space<vmem>>, %arg20: memref<1x1x2048xf32, #tpu.memory_space<vmem>>, %arg21: memref<1x2048x32xbf16, #tpu.memory_space<vmem>>, %arg22: memref<1x1x32xf32, #tpu.memory_space<vmem>>, %arg23: memref<1x1x32xf32, #tpu.memory_space<vmem>>, %arg24: memref<1x1x32xf32, #tpu.memory_space<vmem>>, %arg25: memref<32x128xbf16, #tpu.memory_space<vmem>>, %arg26: memref<1x128xf32, #tpu.memory_space<vmem>>, %arg27: memref<1x1x128xf32, #tpu.memory_space<vmem>>, %arg28: memref<8x32xf32, #tpu.memory_space<vmem>>) attributes {dimension_semantics = [#tpu.dimension_semantics<parallel>, #tpu.dimension_semantics<arbitrary>], iteration_bounds = array<i64: 2, 2>, scalar_prefetch = 0 : i64, scratch_operands = 1 : i64, tpu.core_type = #tpu.core_type<tc>, window_params = [{transform_indices = @transform_0, window_bounds = array<i64: 1, 8, 128>}, {transform_indices = @transform_1, window_bounds = array<i64: 1, 1, 128>}, {transform_indices = @transform_2, window_bounds = array<i64: 1, 1, 32>}, {pipeline_mode = #tpu.pipeline_mode<synchronous>, transform_indices = @transform_3, window_bounds = array<i64: 128, 32>}, {pipeline_mode = #tpu.pipeline_mode<synchronous>, transform_indices = @transform_4, window_bounds = array<i64: 1, 32>}, {pipeline_mode = #tpu.pipeline_mode<synchronous>, transform_indices = @transform_5, window_bounds = array<i64: 128, 32>}, {pipeline_mode = #tpu.pipeline_mode<synchronous>, transform_indices = @transform_6, window_bounds = array<i64: 1, 32>}, {transform_indices = @transform_7, window_bounds = array<i64: 1, 32, 32>}, {transform_indices = @transform_8, window_bounds = array<i64: 1, 1, 32>}, {transform_indices = @transform_9, window_bounds = array<i64: 1, 32, 32>}, {transform_indices = @transform_10, window_bounds = array<i64: 1, 1, 32>}, {transform_indices = @transform_11, window_bounds = array<i64: 1, 32, 32>}, {transform_indices = @transform_12, window_bounds = array<i64: 1, 1, 32>}, {transform_indices = @transform_13, window_bounds = array<i64: 1, 32, 32>}, {transform_indices = @transform_14, window_bounds = array<i64: 1, 1, 32>}, {transform_indices = @transform_15, window_bounds = array<i64: 1, 1, 32>}, {transform_indices = @transform_16, window_bounds = array<i64: 1, 1, 32>}, {transform_indices = @transform_17, window_bounds = array<i64: 1, 32, 2048>}, {transform_indices = @transform_18, window_bounds = array<i64: 1, 1, 2048>}, {transform_indices = @transform_19, window_bounds = array<i64: 1, 2048, 32>}, {transform_indices = @transform_20, window_bounds = array<i64: 1, 1, 32>}, {transform_indices = @transform_21, window_bounds = array<i64: 1, 1, 32>}, {transform_indices = @transform_22, window_bounds = array<i64: 1, 1, 32>}, {pipeline_mode = #tpu.pipeline_mode<synchronous>, transform_indices = @transform_23, window_bounds = array<i64: 32, 128>}, {pipeline_mode = #tpu.pipeline_mode<synchronous>, transform_indices = @transform_24, window_bounds = array<i64: 1, 128>}, {transform_indices = @transform_25, window_bounds = array<i64: 1, 1, 128>}]} {
    %c0_i32 = arith.constant 0 : i32
    %0 = arith.cmpi eq, %arg1, %c0_i32 : i32
    %1 = arith.extui %0 : i1 to i32
    %c0_i32_0 = arith.constant 0 : i32
    %2 = arith.cmpi ne, %1, %c0_i32_0 : i32
    scf.if %2 {
      %c0_90 = arith.constant 0 : index
      %c0_91 = arith.constant 0 : index
      %c0_92 = arith.constant 0 : index
      %219 = vector.load %arg2[%c0_90, %c0_91, %c0_92] : memref<1x8x128xf32, #tpu.memory_space<vmem>>, vector<1x8x128xf32>
      %220 = vector.shape_cast %219 : vector<1x8x128xf32> to vector<8x128xf32>
      %221 = arith.truncf %220 : vector<8x128xf32> to vector<8x128xbf16>
      %c0_93 = arith.constant 0 : index
      %c0_94 = arith.constant 0 : index
      %222 = vector.load %arg5[%c0_93, %c0_94] : memref<128x32xbf16, #tpu.memory_space<vmem>>, vector<128x32xbf16>
      %cst_95 = arith.constant dense<0.000000e+00> : vector<8x32xf32>
      %223 = tpu.matmul %221, %222, %cst_95 {dimension_numbers = #tpu.dot_dimension_numbers<[1], [0], [0], [1], [0, 0, 1, 1], [], []>} : vector<8x128xbf16>, vector<128x32xbf16>, vector<8x32xf32> -> vector<8x32xf32>
      %c0_96 = arith.constant 0 : index
      %c0_97 = arith.constant 0 : index
      %224 = vector.load %arg6[%c0_96, %c0_97] : memref<1x32xf32, #tpu.memory_space<vmem>>, vector<1x32xf32>
      %225 = vector.broadcast %224 : vector<1x32xf32> to vector<8x32xf32>
      %226 = arith.addf %223, %225 : vector<8x32xf32>
      %c0_98 = arith.constant 0 : index
      %c0_99 = arith.constant 0 : index
      %c0_100 = arith.constant 0 : index
      %227 = vector.load %arg3[%c0_98, %c0_99, %c0_100] : memref<1x1x128xf32, #tpu.memory_space<vmem>>, vector<1x1x128xf32>
      %228 = vector.shape_cast %227 : vector<1x1x128xf32> to vector<1x128xf32>
      %229 = arith.truncf %228 : vector<1x128xf32> to vector<1x128xbf16>
      %c0_101 = arith.constant 0 : index
      %c0_102 = arith.constant 0 : index
      %230 = vector.load %arg7[%c0_101, %c0_102] : memref<128x32xbf16, #tpu.memory_space<vmem>>, vector<128x32xbf16>
      %cst_103 = arith.constant dense<0.000000e+00> : vector<1x32xf32>
      %231 = tpu.matmul %229, %230, %cst_103 {dimension_numbers = #tpu.dot_dimension_numbers<[1], [0], [0], [1], [0, 0, 1, 1], [], []>} : vector<1x128xbf16>, vector<128x32xbf16>, vector<1x32xf32> -> vector<1x32xf32>
      %c0_104 = arith.constant 0 : index
      %c0_105 = arith.constant 0 : index
      %232 = vector.load %arg8[%c0_104, %c0_105] : memref<1x32xf32, #tpu.memory_space<vmem>>, vector<1x32xf32>
      %233 = arith.addf %231, %232 : vector<1x32xf32>
      %234 = vector.shape_cast %226 : vector<8x32xf32> to vector<1x8x32xf32>
      %235 = vector.shape_cast %233 : vector<1x32xf32> to vector<1x1x32xf32>
      %236 = vector.broadcast %235 : vector<1x1x32xf32> to vector<1x8x32xf32>
      %237 = arith.addf %234, %236 : vector<1x8x32xf32>
      %c0_106 = arith.constant 0 : index
      %c0_107 = arith.constant 0 : index
      %c0_108 = arith.constant 0 : index
      %238 = vector.load %arg4[%c0_106, %c0_107, %c0_108] : memref<1x1x32xf32, #tpu.memory_space<vmem>>, vector<1x1x32xf32>
      %239 = vector.broadcast %238 : vector<1x1x32xf32> to vector<1x8x32xf32>
      %240 = arith.addf %237, %239 : vector<1x8x32xf32>
      %241 = math.tanh %240 : vector<1x8x32xf32>
      %242 = vector.shape_cast %241 : vector<1x8x32xf32> to vector<8x32xf32>
      %c0_109 = arith.constant 0 : index
      %c0_110 = arith.constant 0 : index
      %243 = vector.load %arg28[%c0_109, %c0_110] : memref<8x32xf32, #tpu.memory_space<vmem>>, vector<8x32xf32>
      tpu.vector_store %arg28[%c0_109, %c0_110], %242 {strides = array<i32>} : memref<8x32xf32, #tpu.memory_space<vmem>>, vector<8x32xf32>,
    } else {
    }
    %c0 = arith.constant 0 : index
    %c0_1 = arith.constant 0 : index
    %3 = vector.load %arg28[%c0, %c0_1] : memref<8x32xf32, #tpu.memory_space<vmem>>, vector<8x32xf32>
    %4 = arith.truncf %3 : vector<8x32xf32> to vector<8x32xbf16>
    %c0_2 = arith.constant 0 : index
    %c0_3 = arith.constant 0 : index
    %c0_4 = arith.constant 0 : index
    %5 = vector.load %arg9[%c0_2, %c0_3, %c0_4] : memref<1x32x32xbf16, #tpu.memory_space<vmem>>, vector<1x32x32xbf16>
    %6 = vector.shape_cast %5 : vector<1x32x32xbf16> to vector<32x32xbf16>
    %cst = arith.constant dense<0.000000e+00> : vector<8x32xf32>
    %7 = tpu.matmul %4, %6, %cst {dimension_numbers = #tpu.dot_dimension_numbers<[1], [0], [0], [1], [0, 0, 1, 1], [], []>} : vector<8x32xbf16>, vector<32x32xbf16>, vector<8x32xf32> -> vector<8x32xf32>
    %c0_5 = arith.constant 0 : index
    %c0_6 = arith.constant 0 : index
    %c0_7 = arith.constant 0 : index
    %8 = vector.load %arg10[%c0_5, %c0_6, %c0_7] : memref<1x1x32xf32, #tpu.memory_space<vmem>>, vector<1x1x32xf32>
    %9 = vector.shape_cast %8 : vector<1x1x32xf32> to vector<1x32xf32>
    %10 = vector.broadcast %9 : vector<1x32xf32> to vector<8x32xf32>
    %11 = arith.addf %7, %10 : vector<8x32xf32>
    %cst_8 = arith.constant 0.353553385 : f32
    %12 = vector.broadcast %cst_8 : f32 to vector<8x32xf32>
    %13 = arith.mulf %11, %12 : vector<8x32xf32>
    %c0_9 = arith.constant 0 : index
    %c0_10 = arith.constant 0 : index
    %c0_11 = arith.constant 0 : index
    %14 = vector.load %arg11[%c0_9, %c0_10, %c0_11] : memref<1x32x32xbf16, #tpu.memory_space<vmem>>, vector<1x32x32xbf16>
    %15 = vector.shape_cast %14 : vector<1x32x32xbf16> to vector<32x32xbf16>
    %cst_12 = arith.constant dense<0.000000e+00> : vector<8x32xf32>
    %16 = tpu.matmul %4, %15, %cst_12 {dimension_numbers = #tpu.dot_dimension_numbers<[1], [0], [0], [1], [0, 0, 1, 1], [], []>} : vector<8x32xbf16>, vector<32x32xbf16>, vector<8x32xf32> -> vector<8x32xf32>
    %c0_13 = arith.constant 0 : index
    %c0_14 = arith.constant 0 : index
    %c0_15 = arith.constant 0 : index
    %17 = vector.load %arg12[%c0_13, %c0_14, %c0_15] : memref<1x1x32xf32, #tpu.memory_space<vmem>>, vector<1x1x32xf32>
    %18 = vector.shape_cast %17 : vector<1x1x32xf32> to vector<1x32xf32>
    %19 = vector.broadcast %18 : vector<1x32xf32> to vector<8x32xf32>
    %20 = arith.addf %16, %19 : vector<8x32xf32>
    %c0_16 = arith.constant 0 : index
    %c0_17 = arith.constant 0 : index
    %c0_18 = arith.constant 0 : index
    %21 = vector.load %arg13[%c0_16, %c0_17, %c0_18] : memref<1x32x32xbf16, #tpu.memory_space<vmem>>, vector<1x32x32xbf16>
    %22 = vector.shape_cast %21 : vector<1x32x32xbf16> to vector<32x32xbf16>
    %cst_19 = arith.constant dense<0.000000e+00> : vector<8x32xf32>
    %23 = tpu.matmul %4, %22, %cst_19 {dimension_numbers = #tpu.dot_dimension_numbers<[1], [0], [0], [1], [0, 0, 1, 1], [], []>} : vector<8x32xbf16>, vector<32x32xbf16>, vector<8x32xf32> -> vector<8x32xf32>
    %c0_20 = arith.constant 0 : index
    %c0_21 = arith.constant 0 : index
    %c0_22 = arith.constant 0 : index
    %24 = vector.load %arg14[%c0_20, %c0_21, %c0_22] : memref<1x1x32xf32, #tpu.memory_space<vmem>>, vector<1x1x32xf32>
    %25 = vector.shape_cast %24 : vector<1x1x32xf32> to vector<1x32xf32>
    %26 = vector.broadcast %25 : vector<1x32xf32> to vector<8x32xf32>
    %27 = arith.addf %23, %26 : vector<8x32xf32>
    %c0_23 = arith.constant 0 : index
    %c0_24 = arith.constant 0 : index
    %c0_25 = arith.constant 0 : index
    %28 = vector.load %arg15[%c0_23, %c0_24, %c0_25] : memref<1x32x32xbf16, #tpu.memory_space<vmem>>, vector<1x32x32xbf16>
    %29 = vector.shape_cast %28 : vector<1x32x32xbf16> to vector<32x32xbf16>
    %cst_26 = arith.constant 0.000000e+00 : f32
    %30 = vector.broadcast %cst_26 : f32 to vector<8x32xf32>
    %31 = vector.extract_strided_slice %13 {offsets = [0, 0], sizes = [8, 8], strides = [1, 1]} : vector<8x32xf32> to vector<8x8xf32>
    %32 = vector.shape_cast %31 : vector<8x8xf32> to vector<1x8x8xf32>
    %33 = arith.truncf %32 : vector<1x8x8xf32> to vector<1x8x8xbf16>
    %34 = vector.extract_strided_slice %20 {offsets = [0, 0], sizes = [8, 8], strides = [1, 1]} : vector<8x32xf32> to vector<8x8xf32>
    %35 = vector.shape_cast %34 : vector<8x8xf32> to vector<1x8x8xf32>
    %36 = arith.truncf %35 : vector<1x8x8xf32> to vector<1x8x8xbf16>
    %37 = vector.extract_strided_slice %27 {offsets = [0, 0], sizes = [8, 8], strides = [1, 1]} : vector<8x32xf32> to vector<8x8xf32>
    %38 = vector.shape_cast %37 : vector<8x8xf32> to vector<1x8x8xf32>
    %39 = arith.truncf %38 : vector<1x8x8xf32> to vector<1x8x8xbf16>
    "tpu.trace_start"() <{level = 10 : i32, message = "bqd,bkd->bqk"}> : () -> ()
    %cst_27 = arith.constant dense<0.000000e+00> : vector<1x8x8xf32>
    %40 = tpu.matmul %33, %36, %cst_27 {dimension_numbers = #tpu.dot_dimension_numbers<[2], [2], [1], [1], [0, 0, 0, 1, 1, 1], [0], [0]>} : vector<1x8x8xbf16>, vector<1x8x8xbf16>, vector<1x8x8xf32> -> vector<1x8x8xf32>
    "tpu.trace_stop"() : () -> ()
    %cst_28 = arith.constant dense<0xFF800000> : vector<1x8xf32>
    %41 = vector.multi_reduction <maximumf>, %40, %cst_28 [2] : vector<1x8x8xf32> to vector<1x8xf32>
    %42 = vector.shape_cast %41 : vector<1x8xf32> to vector<1x8x1xf32>
    %43 = vector.broadcast %42 : vector<1x8x1xf32> to vector<1x8x8xf32>
    %44 = arith.subf %40, %43 : vector<1x8x8xf32>
    %45 = math.exp %44 : vector<1x8x8xf32>
    %cst_29 = arith.constant dense<0.000000e+00> : vector<1x8xf32>
    %46 = vector.multi_reduction <add>, %45, %cst_29 [2] : vector<1x8x8xf32> to vector<1x8xf32>
    %47 = vector.shape_cast %46 : vector<1x8xf32> to vector<1x8x1xf32>
    %48 = tpu.reciprocal %47 {approx = true} : vector<1x8x1xf32> -> vector<1x8x1xf32>
    %49 = arith.truncf %45 : vector<1x8x8xf32> to vector<1x8x8xbf16>
    "tpu.trace_start"() <{level = 10 : i32, message = "bqk,bkd->bqd"}> : () -> ()
    %cst_30 = arith.constant dense<0.000000e+00> : vector<1x8x8xf32>
    %50 = tpu.matmul %49, %39, %cst_30 {dimension_numbers = #tpu.dot_dimension_numbers<[2], [1], [1], [2], [0, 0, 0, 1, 1, 2], [0], [0]>} : vector<1x8x8xbf16>, vector<1x8x8xbf16>, vector<1x8x8xf32> -> vector<1x8x8xf32>
    "tpu.trace_stop"() : () -> ()
    %51 = vector.broadcast %48 : vector<1x8x1xf32> to vector<1x8x8xf32>
    %52 = arith.mulf %50, %51 : vector<1x8x8xf32>
    %53 = vector.shape_cast %52 : vector<1x8x8xf32> to vector<8x8xf32>
    %54 = arith.truncf %53 : vector<8x8xf32> to vector<8x8xbf16>
    %55 = vector.extract_strided_slice %29 {offsets = [0, 0], sizes = [8, 32], strides = [1, 1]} : vector<32x32xbf16> to vector<8x32xbf16>
    %cst_31 = arith.constant dense<0.000000e+00> : vector<8x32xf32>
    %56 = tpu.matmul %54, %55, %cst_31 {dimension_numbers = #tpu.dot_dimension_numbers<[1], [0], [0], [1], [0, 0, 1, 1], [], []>} : vector<8x8xbf16>, vector<8x32xbf16>, vector<8x32xf32> -> vector<8x32xf32>
    %57 = arith.addf %30, %56 : vector<8x32xf32>
    %58 = vector.extract_strided_slice %13 {offsets = [0, 8], sizes = [8, 8], strides = [1, 1]} : vector<8x32xf32> to vector<8x8xf32>
    %59 = vector.shape_cast %58 : vector<8x8xf32> to vector<1x8x8xf32>
    %60 = arith.truncf %59 : vector<1x8x8xf32> to vector<1x8x8xbf16>
    %61 = vector.extract_strided_slice %20 {offsets = [0, 8], sizes = [8, 8], strides = [1, 1]} : vector<8x32xf32> to vector<8x8xf32>
    %62 = vector.shape_cast %61 : vector<8x8xf32> to vector<1x8x8xf32>
    %63 = arith.truncf %62 : vector<1x8x8xf32> to vector<1x8x8xbf16>
    %64 = vector.extract_strided_slice %27 {offsets = [0, 8], sizes = [8, 8], strides = [1, 1]} : vector<8x32xf32> to vector<8x8xf32>
    %65 = vector.shape_cast %64 : vector<8x8xf32> to vector<1x8x8xf32>
    %66 = arith.truncf %65 : vector<1x8x8xf32> to vector<1x8x8xbf16>
    "tpu.trace_start"() <{level = 10 : i32, message = "bqd,bkd->bqk"}> : () -> ()
    %cst_32 = arith.constant dense<0.000000e+00> : vector<1x8x8xf32>
    %67 = tpu.matmul %60, %63, %cst_32 {dimension_numbers = #tpu.dot_dimension_numbers<[2], [2], [1], [1], [0, 0, 0, 1, 1, 1], [0], [0]>} : vector<1x8x8xbf16>, vector<1x8x8xbf16>, vector<1x8x8xf32> -> vector<1x8x8xf32>
    "tpu.trace_stop"() : () -> ()
    %cst_33 = arith.constant dense<0xFF800000> : vector<1x8xf32>
    %68 = vector.multi_reduction <maximumf>, %67, %cst_33 [2] : vector<1x8x8xf32> to vector<1x8xf32>
    %69 = vector.shape_cast %68 : vector<1x8xf32> to vector<1x8x1xf32>
    %70 = vector.broadcast %69 : vector<1x8x1xf32> to vector<1x8x8xf32>
    %71 = arith.subf %67, %70 : vector<1x8x8xf32>
    %72 = math.exp %71 : vector<1x8x8xf32>
    %cst_34 = arith.constant dense<0.000000e+00> : vector<1x8xf32>
    %73 = vector.multi_reduction <add>, %72, %cst_34 [2] : vector<1x8x8xf32> to vector<1x8xf32>
    %74 = vector.shape_cast %73 : vector<1x8xf32> to vector<1x8x1xf32>
    %75 = tpu.reciprocal %74 {approx = true} : vector<1x8x1xf32> -> vector<1x8x1xf32>
    %76 = arith.truncf %72 : vector<1x8x8xf32> to vector<1x8x8xbf16>
    "tpu.trace_start"() <{level = 10 : i32, message = "bqk,bkd->bqd"}> : () -> ()
    %cst_35 = arith.constant dense<0.000000e+00> : vector<1x8x8xf32>
    %77 = tpu.matmul %76, %66, %cst_35 {dimension_numbers = #tpu.dot_dimension_numbers<[2], [1], [1], [2], [0, 0, 0, 1, 1, 2], [0], [0]>} : vector<1x8x8xbf16>, vector<1x8x8xbf16>, vector<1x8x8xf32> -> vector<1x8x8xf32>
    "tpu.trace_stop"() : () -> ()
    %78 = vector.broadcast %75 : vector<1x8x1xf32> to vector<1x8x8xf32>
    %79 = arith.mulf %77, %78 : vector<1x8x8xf32>
    %80 = vector.shape_cast %79 : vector<1x8x8xf32> to vector<8x8xf32>
    %81 = arith.truncf %80 : vector<8x8xf32> to vector<8x8xbf16>
    %82 = vector.extract_strided_slice %29 {offsets = [8, 0], sizes = [8, 32], strides = [1, 1]} : vector<32x32xbf16> to vector<8x32xbf16>
    %cst_36 = arith.constant dense<0.000000e+00> : vector<8x32xf32>
    %83 = tpu.matmul %81, %82, %cst_36 {dimension_numbers = #tpu.dot_dimension_numbers<[1], [0], [0], [1], [0, 0, 1, 1], [], []>} : vector<8x8xbf16>, vector<8x32xbf16>, vector<8x32xf32> -> vector<8x32xf32>
    %84 = arith.addf %57, %83 : vector<8x32xf32>
    %85 = vector.extract_strided_slice %13 {offsets = [0, 16], sizes = [8, 8], strides = [1, 1]} : vector<8x32xf32> to vector<8x8xf32>
    %86 = vector.shape_cast %85 : vector<8x8xf32> to vector<1x8x8xf32>
    %87 = arith.truncf %86 : vector<1x8x8xf32> to vector<1x8x8xbf16>
    %88 = vector.extract_strided_slice %20 {offsets = [0, 16], sizes = [8, 8], strides = [1, 1]} : vector<8x32xf32> to vector<8x8xf32>
    %89 = vector.shape_cast %88 : vector<8x8xf32> to vector<1x8x8xf32>
    %90 = arith.truncf %89 : vector<1x8x8xf32> to vector<1x8x8xbf16>
    %91 = vector.extract_strided_slice %27 {offsets = [0, 16], sizes = [8, 8], strides = [1, 1]} : vector<8x32xf32> to vector<8x8xf32>
    %92 = vector.shape_cast %91 : vector<8x8xf32> to vector<1x8x8xf32>
    %93 = arith.truncf %92 : vector<1x8x8xf32> to vector<1x8x8xbf16>
    "tpu.trace_start"() <{level = 10 : i32, message = "bqd,bkd->bqk"}> : () -> ()
    %cst_37 = arith.constant dense<0.000000e+00> : vector<1x8x8xf32>
    %94 = tpu.matmul %87, %90, %cst_37 {dimension_numbers = #tpu.dot_dimension_numbers<[2], [2], [1], [1], [0, 0, 0, 1, 1, 1], [0], [0]>} : vector<1x8x8xbf16>, vector<1x8x8xbf16>, vector<1x8x8xf32> -> vector<1x8x8xf32>
    "tpu.trace_stop"() : () -> ()
    %cst_38 = arith.constant dense<0xFF800000> : vector<1x8xf32>
    %95 = vector.multi_reduction <maximumf>, %94, %cst_38 [2] : vector<1x8x8xf32> to vector<1x8xf32>
    %96 = vector.shape_cast %95 : vector<1x8xf32> to vector<1x8x1xf32>
    %97 = vector.broadcast %96 : vector<1x8x1xf32> to vector<1x8x8xf32>
    %98 = arith.subf %94, %97 : vector<1x8x8xf32>
    %99 = math.exp %98 : vector<1x8x8xf32>
    %cst_39 = arith.constant dense<0.000000e+00> : vector<1x8xf32>
    %100 = vector.multi_reduction <add>, %99, %cst_39 [2] : vector<1x8x8xf32> to vector<1x8xf32>
    %101 = vector.shape_cast %100 : vector<1x8xf32> to vector<1x8x1xf32>
    %102 = tpu.reciprocal %101 {approx = true} : vector<1x8x1xf32> -> vector<1x8x1xf32>
    %103 = arith.truncf %99 : vector<1x8x8xf32> to vector<1x8x8xbf16>
    "tpu.trace_start"() <{level = 10 : i32, message = "bqk,bkd->bqd"}> : () -> ()
    %cst_40 = arith.constant dense<0.000000e+00> : vector<1x8x8xf32>
    %104 = tpu.matmul %103, %93, %cst_40 {dimension_numbers = #tpu.dot_dimension_numbers<[2], [1], [1], [2], [0, 0, 0, 1, 1, 2], [0], [0]>} : vector<1x8x8xbf16>, vector<1x8x8xbf16>, vector<1x8x8xf32> -> vector<1x8x8xf32>
    "tpu.trace_stop"() : () -> ()
    %105 = vector.broadcast %102 : vector<1x8x1xf32> to vector<1x8x8xf32>
    %106 = arith.mulf %104, %105 : vector<1x8x8xf32>
    %107 = vector.shape_cast %106 : vector<1x8x8xf32> to vector<8x8xf32>
    %108 = arith.truncf %107 : vector<8x8xf32> to vector<8x8xbf16>
    %109 = vector.extract_strided_slice %29 {offsets = [16, 0], sizes = [8, 32], strides = [1, 1]} : vector<32x32xbf16> to vector<8x32xbf16>
    %cst_41 = arith.constant dense<0.000000e+00> : vector<8x32xf32>
    %110 = tpu.matmul %108, %109, %cst_41 {dimension_numbers = #tpu.dot_dimension_numbers<[1], [0], [0], [1], [0, 0, 1, 1], [], []>} : vector<8x8xbf16>, vector<8x32xbf16>, vector<8x32xf32> -> vector<8x32xf32>
    %111 = arith.addf %84, %110 : vector<8x32xf32>
    %112 = vector.extract_strided_slice %13 {offsets = [0, 24], sizes = [8, 8], strides = [1, 1]} : vector<8x32xf32> to vector<8x8xf32>
    %113 = vector.shape_cast %112 : vector<8x8xf32> to vector<1x8x8xf32>
    %114 = arith.truncf %113 : vector<1x8x8xf32> to vector<1x8x8xbf16>
    %115 = vector.extract_strided_slice %20 {offsets = [0, 24], sizes = [8, 8], strides = [1, 1]} : vector<8x32xf32> to vector<8x8xf32>
    %116 = vector.shape_cast %115 : vector<8x8xf32> to vector<1x8x8xf32>
    %117 = arith.truncf %116 : vector<1x8x8xf32> to vector<1x8x8xbf16>
    %118 = vector.extract_strided_slice %27 {offsets = [0, 24], sizes = [8, 8], strides = [1, 1]} : vector<8x32xf32> to vector<8x8xf32>
    %119 = vector.shape_cast %118 : vector<8x8xf32> to vector<1x8x8xf32>
    %120 = arith.truncf %119 : vector<1x8x8xf32> to vector<1x8x8xbf16>
    "tpu.trace_start"() <{level = 10 : i32, message = "bqd,bkd->bqk"}> : () -> ()
    %cst_42 = arith.constant dense<0.000000e+00> : vector<1x8x8xf32>
    %121 = tpu.matmul %114, %117, %cst_42 {dimension_numbers = #tpu.dot_dimension_numbers<[2], [2], [1], [1], [0, 0, 0, 1, 1, 1], [0], [0]>} : vector<1x8x8xbf16>, vector<1x8x8xbf16>, vector<1x8x8xf32> -> vector<1x8x8xf32>
    "tpu.trace_stop"() : () -> ()
    %cst_43 = arith.constant dense<0xFF800000> : vector<1x8xf32>
    %122 = vector.multi_reduction <maximumf>, %121, %cst_43 [2] : vector<1x8x8xf32> to vector<1x8xf32>
    %123 = vector.shape_cast %122 : vector<1x8xf32> to vector<1x8x1xf32>
    %124 = vector.broadcast %123 : vector<1x8x1xf32> to vector<1x8x8xf32>
    %125 = arith.subf %121, %124 : vector<1x8x8xf32>
    %126 = math.exp %125 : vector<1x8x8xf32>
    %cst_44 = arith.constant dense<0.000000e+00> : vector<1x8xf32>
    %127 = vector.multi_reduction <add>, %126, %cst_44 [2] : vector<1x8x8xf32> to vector<1x8xf32>
    %128 = vector.shape_cast %127 : vector<1x8xf32> to vector<1x8x1xf32>
    %129 = tpu.reciprocal %128 {approx = true} : vector<1x8x1xf32> -> vector<1x8x1xf32>
    %130 = arith.truncf %126 : vector<1x8x8xf32> to vector<1x8x8xbf16>
    "tpu.trace_start"() <{level = 10 : i32, message = "bqk,bkd->bqd"}> : () -> ()
    %cst_45 = arith.constant dense<0.000000e+00> : vector<1x8x8xf32>
    %131 = tpu.matmul %130, %120, %cst_45 {dimension_numbers = #tpu.dot_dimension_numbers<[2], [1], [1], [2], [0, 0, 0, 1, 1, 2], [0], [0]>} : vector<1x8x8xbf16>, vector<1x8x8xbf16>, vector<1x8x8xf32> -> vector<1x8x8xf32>
    "tpu.trace_stop"() : () -> ()
    %132 = vector.broadcast %129 : vector<1x8x1xf32> to vector<1x8x8xf32>
    %133 = arith.mulf %131, %132 : vector<1x8x8xf32>
    %134 = vector.shape_cast %133 : vector<1x8x8xf32> to vector<8x8xf32>
    %135 = arith.truncf %134 : vector<8x8xf32> to vector<8x8xbf16>
    %136 = vector.extract_strided_slice %29 {offsets = [24, 0], sizes = [8, 32], strides = [1, 1]} : vector<32x32xbf16> to vector<8x32xbf16>
    %cst_46 = arith.constant dense<0.000000e+00> : vector<8x32xf32>
    %137 = tpu.matmul %135, %136, %cst_46 {dimension_numbers = #tpu.dot_dimension_numbers<[1], [0], [0], [1], [0, 0, 1, 1], [], []>} : vector<8x8xbf16>, vector<8x32xbf16>, vector<8x32xf32> -> vector<8x32xf32>
    %138 = arith.addf %111, %137 : vector<8x32xf32>
    %c0_47 = arith.constant 0 : index
    %c0_48 = arith.constant 0 : index
    %c0_49 = arith.constant 0 : index
    %139 = vector.load %arg16[%c0_47, %c0_48, %c0_49] : memref<1x1x32xf32, #tpu.memory_space<vmem>>, vector<1x1x32xf32>
    %140 = vector.shape_cast %139 : vector<1x1x32xf32> to vector<1x32xf32>
    %141 = vector.broadcast %140 : vector<1x32xf32> to vector<8x32xf32>
    %142 = arith.addf %138, %141 : vector<8x32xf32>
    %143 = arith.addf %3, %142 : vector<8x32xf32>
    %c0_50 = arith.constant 0 : index
    %c0_51 = arith.constant 0 : index
    %c0_52 = arith.constant 0 : index
    %144 = vector.load %arg17[%c0_50, %c0_51, %c0_52] : memref<1x1x32xf32, #tpu.memory_space<vmem>>, vector<1x1x32xf32>
    %145 = vector.shape_cast %144 : vector<1x1x32xf32> to vector<1x32xf32>
    %c0_53 = arith.constant 0 : index
    %c0_54 = arith.constant 0 : index
    %c0_55 = arith.constant 0 : index
    %146 = vector.load %arg18[%c0_53, %c0_54, %c0_55] : memref<1x1x32xf32, #tpu.memory_space<vmem>>, vector<1x1x32xf32>
    %147 = vector.shape_cast %146 : vector<1x1x32xf32> to vector<1x32xf32>
    %cst_56 = arith.constant dense<0.000000e+00> : vector<8xf32>
    %148 = vector.multi_reduction <add>, %143, %cst_56 [1] : vector<8x32xf32> to vector<8xf32>
    %149 = vector.shape_cast %148 : vector<8xf32> to vector<8x1xf32>
    %cst_57 = arith.constant 3.200000e+01 : f32
    %150 = vector.broadcast %cst_57 : f32 to vector<8x1xf32>
    %151 = arith.divf %149, %150 : vector<8x1xf32>
    %152 = vector.broadcast %151 : vector<8x1xf32> to vector<8x32xf32>
    %153 = arith.subf %143, %152 : vector<8x32xf32>
    %154 = arith.mulf %153, %153 : vector<8x32xf32>
    %cst_58 = arith.constant dense<0.000000e+00> : vector<8xf32>
    %155 = vector.multi_reduction <add>, %154, %cst_58 [1] : vector<8x32xf32> to vector<8xf32>
    %156 = vector.shape_cast %155 : vector<8xf32> to vector<8x1xf32>
    %cst_59 = arith.constant 3.200000e+01 : f32
    %157 = vector.broadcast %cst_59 : f32 to vector<8x1xf32>
    %158 = arith.divf %156, %157 : vector<8x1xf32>
    %159 = vector.broadcast %151 : vector<8x1xf32> to vector<8x32xf32>
    %160 = arith.subf %143, %159 : vector<8x32xf32>
    %cst_60 = arith.constant 9.99999974E-6 : f32
    %161 = vector.broadcast %cst_60 : f32 to vector<8x1xf32>
    %162 = arith.addf %158, %161 : vector<8x1xf32>
    %163 = math.rsqrt %162 : vector<8x1xf32>
    %164 = vector.broadcast %163 : vector<8x1xf32> to vector<8x32xf32>
    %165 = arith.mulf %160, %164 : vector<8x32xf32>
    %166 = vector.broadcast %145 : vector<1x32xf32> to vector<8x32xf32>
    %167 = arith.mulf %165, %166 : vector<8x32xf32>
    %168 = vector.broadcast %147 : vector<1x32xf32> to vector<8x32xf32>
    %169 = arith.addf %167, %168 : vector<8x32xf32>
    %170 = arith.truncf %169 : vector<8x32xf32> to vector<8x32xbf16>
    %c0_61 = arith.constant 0 : index
    %c0_62 = arith.constant 0 : index
    %c0_63 = arith.constant 0 : index
    %171 = vector.load %arg19[%c0_61, %c0_62, %c0_63] : memref<1x32x2048xbf16, #tpu.memory_space<vmem>>, vector<1x32x2048xbf16>
    %172 = vector.shape_cast %171 : vector<1x32x2048xbf16> to vector<32x2048xbf16>
    %cst_64 = arith.constant dense<0.000000e+00> : vector<8x2048xf32>
    %173 = tpu.matmul %170, %172, %cst_64 {dimension_numbers = #tpu.dot_dimension_numbers<[1], [0], [0], [1], [0, 0, 1, 1], [], []>} : vector<8x32xbf16>, vector<32x2048xbf16>, vector<8x2048xf32> -> vector<8x2048xf32>
    %c0_65 = arith.constant 0 : index
    %c0_66 = arith.constant 0 : index
    %c0_67 = arith.constant 0 : index
    %174 = vector.load %arg20[%c0_65, %c0_66, %c0_67] : memref<1x1x2048xf32, #tpu.memory_space<vmem>>, vector<1x1x2048xf32>
    %175 = vector.shape_cast %174 : vector<1x1x2048xf32> to vector<1x2048xf32>
    %176 = vector.broadcast %175 : vector<1x2048xf32> to vector<8x2048xf32>
    %177 = arith.addf %173, %176 : vector<8x2048xf32>
    %cst_68 = arith.constant 0.000000e+00 : f32
    %178 = vector.broadcast %cst_68 : f32 to vector<8x2048xf32>
    %179 = arith.maximumf %177, %178 : vector<8x2048xf32>
    %180 = arith.truncf %179 : vector<8x2048xf32> to vector<8x2048xbf16>
    %c0_69 = arith.constant 0 : index
    %c0_70 = arith.constant 0 : index
    %c0_71 = arith.constant 0 : index
    %181 = vector.load %arg21[%c0_69, %c0_70, %c0_71] : memref<1x2048x32xbf16, #tpu.memory_space<vmem>>, vector<1x2048x32xbf16>
    %182 = vector.shape_cast %181 : vector<1x2048x32xbf16> to vector<2048x32xbf16>
    %cst_72 = arith.constant dense<0.000000e+00> : vector<8x32xf32>
    %183 = tpu.matmul %180, %182, %cst_72 {dimension_numbers = #tpu.dot_dimension_numbers<[1], [0], [0], [1], [0, 0, 1, 1], [], []>} : vector<8x2048xbf16>, vector<2048x32xbf16>, vector<8x32xf32> -> vector<8x32xf32>
    %c0_73 = arith.constant 0 : index
    %c0_74 = arith.constant 0 : index
    %c0_75 = arith.constant 0 : index
    %184 = vector.load %arg22[%c0_73, %c0_74, %c0_75] : memref<1x1x32xf32, #tpu.memory_space<vmem>>, vector<1x1x32xf32>
    %185 = vector.shape_cast %184 : vector<1x1x32xf32> to vector<1x32xf32>
    %186 = vector.broadcast %185 : vector<1x32xf32> to vector<8x32xf32>
    %187 = arith.addf %183, %186 : vector<8x32xf32>
    %188 = arith.addf %169, %187 : vector<8x32xf32>
    %c0_76 = arith.constant 0 : index
    %c0_77 = arith.constant 0 : index
    %c0_78 = arith.constant 0 : index
    %189 = vector.load %arg23[%c0_76, %c0_77, %c0_78] : memref<1x1x32xf32, #tpu.memory_space<vmem>>, vector<1x1x32xf32>
    %190 = vector.shape_cast %189 : vector<1x1x32xf32> to vector<1x32xf32>
    %c0_79 = arith.constant 0 : index
    %c0_80 = arith.constant 0 : index
    %c0_81 = arith.constant 0 : index
    %191 = vector.load %arg24[%c0_79, %c0_80, %c0_81] : memref<1x1x32xf32, #tpu.memory_space<vmem>>, vector<1x1x32xf32>
    %192 = vector.shape_cast %191 : vector<1x1x32xf32> to vector<1x32xf32>
    %cst_82 = arith.constant dense<0.000000e+00> : vector<8xf32>
    %193 = vector.multi_reduction <add>, %188, %cst_82 [1] : vector<8x32xf32> to vector<8xf32>
    %194 = vector.shape_cast %193 : vector<8xf32> to vector<8x1xf32>
    %cst_83 = arith.constant 3.200000e+01 : f32
    %195 = vector.broadcast %cst_83 : f32 to vector<8x1xf32>
    %196 = arith.divf %194, %195 : vector<8x1xf32>
    %197 = vector.broadcast %196 : vector<8x1xf32> to vector<8x32xf32>
    %198 = arith.subf %188, %197 : vector<8x32xf32>
    %199 = arith.mulf %198, %198 : vector<8x32xf32>
    %cst_84 = arith.constant dense<0.000000e+00> : vector<8xf32>
    %200 = vector.multi_reduction <add>, %199, %cst_84 [1] : vector<8x32xf32> to vector<8xf32>
    %201 = vector.shape_cast %200 : vector<8xf32> to vector<8x1xf32>
    %cst_85 = arith.constant 3.200000e+01 : f32
    %202 = vector.broadcast %cst_85 : f32 to vector<8x1xf32>
    %203 = arith.divf %201, %202 : vector<8x1xf32>
    %204 = vector.broadcast %196 : vector<8x1xf32> to vector<8x32xf32>
    %205 = arith.subf %188, %204 : vector<8x32xf32>
    %cst_86 = arith.constant 9.99999974E-6 : f32
    %206 = vector.broadcast %cst_86 : f32 to vector<8x1xf32>
    %207 = arith.addf %203, %206 : vector<8x1xf32>
    %208 = math.rsqrt %207 : vector<8x1xf32>
    %209 = vector.broadcast %208 : vector<8x1xf32> to vector<8x32xf32>
    %210 = arith.mulf %205, %209 : vector<8x32xf32>
    %211 = vector.broadcast %190 : vector<1x32xf32> to vector<8x32xf32>
    %212 = arith.mulf %210, %211 : vector<8x32xf32>
    %213 = vector.broadcast %192 : vector<1x32xf32> to vector<8x32xf32>
    %214 = arith.addf %212, %213 : vector<8x32xf32>
    %c0_87 = arith.constant 0 : index
    %c0_88 = arith.constant 0 : index
    %215 = vector.load %arg28[%c0_87, %c0_88] : memref<8x32xf32, #tpu.memory_space<vmem>>, vector<8x32xf32>
    tpu.vector_store %arg28[%c0_87, %c0_88], %214 {strides = array<i32>} : memref<8x32xf32, #tpu.memory_space<vmem>>, vector<8x32xf32>,
    %c1_i32 = arith.constant 1 : i32
    %216 = arith.cmpi eq, %arg1, %c1_i32 : i32
    %217 = arith.extui %216 : i1 to i32
    %c0_i32_89 = arith.constant 0 : i32
    %218 = arith.cmpi ne, %217, %c0_i32_89 : i32
    scf.if %218 {
      %219 = vector.shape_cast %214 : vector<8x32xf32> to vector<1x8x32xf32>
      %cst_90 = arith.constant dense<0.000000e+00> : vector<1x32xf32>
      %220 = vector.multi_reduction <add>, %219, %cst_90 [1] : vector<1x8x32xf32> to vector<1x32xf32>
      %cst_91 = arith.constant 8.000000e+00 : f32
      %221 = vector.broadcast %cst_91 : f32 to vector<1x32xf32>
      %222 = arith.divf %220, %221 : vector<1x32xf32>
      %223 = arith.truncf %222 : vector<1x32xf32> to vector<1x32xbf16>
      %c0_92 = arith.constant 0 : index
      %c0_93 = arith.constant 0 : index
      %224 = vector.load %arg25[%c0_92, %c0_93] : memref<32x128xbf16, #tpu.memory_space<vmem>>, vector<32x128xbf16>
      %cst_94 = arith.constant dense<0.000000e+00> : vector<1x128xf32>
      %225 = tpu.matmul %223, %224, %cst_94 {dimension_numbers = #tpu.dot_dimension_numbers<[1], [0], [0], [1], [0, 0, 1, 1], [], []>} : vector<1x32xbf16>, vector<32x128xbf16>, vector<1x128xf32> -> vector<1x128xf32>
      %c0_95 = arith.constant 0 : index
      %c0_96 = arith.constant 0 : index
      %226 = vector.load %arg26[%c0_95, %c0_96] : memref<1x128xf32, #tpu.memory_space<vmem>>, vector<1x128xf32>
      %227 = arith.addf %225, %226 : vector<1x128xf32>
      %228 = vector.shape_cast %227 : vector<1x128xf32> to vector<1x1x128xf32>
      %c0_97 = arith.constant 0 : index
      %c0_98 = arith.constant 0 : index
      %c0_99 = arith.constant 0 : index
      %229 = vector.load %arg27[%c0_97, %c0_98, %c0_99] : memref<1x1x128xf32, #tpu.memory_space<vmem>>, vector<1x1x128xf32>
      tpu.vector_store %arg27[%c0_97, %c0_98, %c0_99], %228 {strides = array<i32>} : memref<1x1x128xf32, #tpu.memory_space<vmem>>, vector<1x1x128xf32>,
    } else {
    }
    return
  }
  func.func @transform_0(%arg0: i32, %arg1: i32) -> (i32, i32, i32) {
    %c0_i32 = arith.constant 0 : i32
    %c0_i32_0 = arith.constant 0 : i32
    %c0_i32_1 = arith.constant 0 : i32
    return %arg0, %c0_i32, %c0_i32_0 : i32, i32, i32
  }
  func.func @transform_1(%arg0: i32, %arg1: i32) -> (i32, i32, i32) {
    %c0_i32 = arith.constant 0 : i32
    %c0_i32_0 = arith.constant 0 : i32
    %c0_i32_1 = arith.constant 0 : i32
    return %arg0, %c0_i32, %c0_i32_0 : i32, i32, i32
  }
  func.func @transform_2(%arg0: i32, %arg1: i32) -> (i32, i32, i32) {
    %c0_i32 = arith.constant 0 : i32
    %c0_i32_0 = arith.constant 0 : i32
    %c0_i32_1 = arith.constant 0 : i32
    return %arg0, %c0_i32, %c0_i32_0 : i32, i32, i32
  }
  func.func @transform_3(%arg0: i32, %arg1: i32) -> (i32, i32) {
    %c0_i32 = arith.constant 0 : i32
    %c0_i32_0 = arith.constant 0 : i32
    %c0_i32_1 = arith.constant 0 : i32
    return %c0_i32, %c0_i32_0 : i32, i32
  }
  func.func @transform_4(%arg0: i32, %arg1: i32) -> (i32, i32) {
    %c0_i32 = arith.constant 0 : i32
    %c0_i32_0 = arith.constant 0 : i32
    %c0_i32_1 = arith.constant 0 : i32
    return %c0_i32, %c0_i32_0 : i32, i32
  }
  func.func @transform_5(%arg0: i32, %arg1: i32) -> (i32, i32) {
    %c0_i32 = arith.constant 0 : i32
    %c0_i32_0 = arith.constant 0 : i32
    %c0_i32_1 = arith.constant 0 : i32
    return %c0_i32, %c0_i32_0 : i32, i32
  }
  func.func @transform_6(%arg0: i32, %arg1: i32) -> (i32, i32) {
    %c0_i32 = arith.constant 0 : i32
    %c0_i32_0 = arith.constant 0 : i32
    %c0_i32_1 = arith.constant 0 : i32
    return %c0_i32, %c0_i32_0 : i32, i32
  }
  func.func @transform_7(%arg0: i32, %arg1: i32) -> (i32, i32, i32) {
    %c0_i32 = arith.constant 0 : i32
    %c0_i32_0 = arith.constant 0 : i32
    %c0_i32_1 = arith.constant 0 : i32
    return %arg1, %c0_i32, %c0_i32_0 : i32, i32, i32
  }
  func.func @transform_8(%arg0: i32, %arg1: i32) -> (i32, i32, i32) {
    %c0_i32 = arith.constant 0 : i32
    %c0_i32_0 = arith.constant 0 : i32
    %c0_i32_1 = arith.constant 0 : i32
    return %arg1, %c0_i32, %c0_i32_0 : i32, i32, i32
  }
  func.func @transform_9(%arg0: i32, %arg1: i32) -> (i32, i32, i32) {
    %c0_i32 = arith.constant 0 : i32
    %c0_i32_0 = arith.constant 0 : i32
    %c0_i32_1 = arith.constant 0 : i32
    return %arg1, %c0_i32, %c0_i32_0 : i32, i32, i32
  }
  func.func @transform_10(%arg0: i32, %arg1: i32) -> (i32, i32, i32) {
    %c0_i32 = arith.constant 0 : i32
    %c0_i32_0 = arith.constant 0 : i32
    %c0_i32_1 = arith.constant 0 : i32
    return %arg1, %c0_i32, %c0_i32_0 : i32, i32, i32
  }
  func.func @transform_11(%arg0: i32, %arg1: i32) -> (i32, i32, i32) {
    %c0_i32 = arith.constant 0 : i32
    %c0_i32_0 = arith.constant 0 : i32
    %c0_i32_1 = arith.constant 0 : i32
    return %arg1, %c0_i32, %c0_i32_0 : i32, i32, i32
  }
  func.func @transform_12(%arg0: i32, %arg1: i32) -> (i32, i32, i32) {
    %c0_i32 = arith.constant 0 : i32
    %c0_i32_0 = arith.constant 0 : i32
    %c0_i32_1 = arith.constant 0 : i32
    return %arg1, %c0_i32, %c0_i32_0 : i32, i32, i32
  }
  func.func @transform_13(%arg0: i32, %arg1: i32) -> (i32, i32, i32) {
    %c0_i32 = arith.constant 0 : i32
    %c0_i32_0 = arith.constant 0 : i32
    %c0_i32_1 = arith.constant 0 : i32
    return %arg1, %c0_i32, %c0_i32_0 : i32, i32, i32
  }
  func.func @transform_14(%arg0: i32, %arg1: i32) -> (i32, i32, i32) {
    %c0_i32 = arith.constant 0 : i32
    %c0_i32_0 = arith.constant 0 : i32
    %c0_i32_1 = arith.constant 0 : i32
    return %arg1, %c0_i32, %c0_i32_0 : i32, i32, i32
  }
  func.func @transform_15(%arg0: i32, %arg1: i32) -> (i32, i32, i32) {
    %c0_i32 = arith.constant 0 : i32
    %c0_i32_0 = arith.constant 0 : i32
    %c0_i32_1 = arith.constant 0 : i32
    return %arg1, %c0_i32, %c0_i32_0 : i32, i32, i32
  }
  func.func @transform_16(%arg0: i32, %arg1: i32) -> (i32, i32, i32) {
    %c0_i32 = arith.constant 0 : i32
    %c0_i32_0 = arith.constant 0 : i32
    %c0_i32_1 = arith.constant 0 : i32
    return %arg1, %c0_i32, %c0_i32_0 : i32, i32, i32
  }
  func.func @transform_17(%arg0: i32, %arg1: i32) -> (i32, i32, i32) {
    %c0_i32 = arith.constant 0 : i32
    %c0_i32_0 = arith.constant 0 : i32
    %c0_i32_1 = arith.constant 0 : i32
    return %arg1, %c0_i32, %c0_i32_0 : i32, i32, i32
  }
  func.func @transform_18(%arg0: i32, %arg1: i32) -> (i32, i32, i32) {
    %c0_i32 = arith.constant 0 : i32
    %c0_i32_0 = arith.constant 0 : i32
    %c0_i32_1 = arith.constant 0 : i32
    return %arg1, %c0_i32, %c0_i32_0 : i32, i32, i32
  }
  func.func @transform_19(%arg0: i32, %arg1: i32) -> (i32, i32, i32) {
    %c0_i32 = arith.constant 0 : i32
    %c0_i32_0 = arith.constant 0 : i32
    %c0_i32_1 = arith.constant 0 : i32
    return %arg1, %c0_i32, %c0_i32_0 : i32, i32, i32
  }
  func.func @transform_20(%arg0: i32, %arg1: i32) -> (i32, i32, i32) {
    %c0_i32 = arith.constant 0 : i32
    %c0_i32_0 = arith.constant 0 : i32
    %c0_i32_1 = arith.constant 0 : i32
    return %arg1, %c0_i32, %c0_i32_0 : i32, i32, i32
  }
  func.func @transform_21(%arg0: i32, %arg1: i32) -> (i32, i32, i32) {
    %c0_i32 = arith.constant 0 : i32
    %c0_i32_0 = arith.constant 0 : i32
    %c0_i32_1 = arith.constant 0 : i32
    return %arg1, %c0_i32, %c0_i32_0 : i32, i32, i32
  }
  func.func @transform_22(%arg0: i32, %arg1: i32) -> (i32, i32, i32) {
    %c0_i32 = arith.constant 0 : i32
    %c0_i32_0 = arith.constant 0 : i32
    %c0_i32_1 = arith.constant 0 : i32
    return %arg1, %c0_i32, %c0_i32_0 : i32, i32, i32
  }
  func.func @transform_23(%arg0: i32, %arg1: i32) -> (i32, i32) {
    %c0_i32 = arith.constant 0 : i32
    %c0_i32_0 = arith.constant 0 : i32
    %c0_i32_1 = arith.constant 0 : i32
    return %c0_i32, %c0_i32_0 : i32, i32
  }
  func.func @transform_24(%arg0: i32, %arg1: i32) -> (i32, i32) {
    %c0_i32 = arith.constant 0 : i32
    %c0_i32_0 = arith.constant 0 : i32
    %c0_i32_1 = arith.constant 0 : i32
    return %c0_i32, %c0_i32_0 : i32, i32
  }
  func.func @transform_25(%arg0: i32, %arg1: i32) -> (i32, i32, i32) {
    %c0_i32 = arith.constant 0 : i32
    %c0_i32_0 = arith.constant 0 : i32
    %c0_i32_1 = arith.constant 0 : i32
    return %arg0, %c0_i32, %c0_i32_0 : i32, i32, i32
  }
}

</mosaic_0001>

<llo_original>
// kernel: tpu_custom_call.1
$region0: #{tpu_custom_call.1}
  #allocation0 [shape = 'u32[]', space=smem, size = 0x4, offset = 0x4, fixed_abs, tag = 'smem constant byte address 0x4 - core index']
  #allocation1 [shape = 'u32[72,128]{1,0:T(1,128)}', space=vmem, size = 0x9000, scoped, tag = 'internal scratch']
  #allocation2 [shape = 'f32[8,32]{1,0:T(8,128)}', space=vmem, size = 0x1000, scoped, tag = 'scratch operand']
  %s0 = inlined_call_operand.vmem [shape: f32[2,8,128], index: 0, kind: input, shape index: {}]
  %s1 = inlined_call_operand.vmem [shape: f32[2,1,128], index: 1, kind: input, shape index: {}]
  %s2 = inlined_call_operand.vmem [shape: f32[2,1,32], index: 2, kind: input, shape index: {}]
  %s3 = inlined_call_operand.vmem [shape: bf16[128,32], index: 3, kind: input, shape index: {}]
  %s4 = inlined_call_operand.vmem [shape: f32[1,32], index: 4, kind: input, shape index: {}]
  %s5 = inlined_call_operand.vmem [shape: bf16[128,32], index: 5, kind: input, shape index: {}]
  %s6 = inlined_call_operand.vmem [shape: f32[1,32], index: 6, kind: input, shape index: {}]
  %s7 = inlined_call_operand.vmem [shape: bf16[2,32,32], index: 7, kind: input, shape index: {}]
  %s8 = inlined_call_operand.vmem [shape: f32[2,1,32], index: 8, kind: input, shape index: {}]
  %s9 = inlined_call_operand.vmem [shape: bf16[2,32,32], index: 9, kind: input, shape index: {}]
  %s10 = inlined_call_operand.vmem [shape: f32[2,1,32], index: 10, kind: input, shape index: {}]
  %s11 = inlined_call_operand.vmem [shape: bf16[2,32,32], index: 11, kind: input, shape index: {}]
  %s12 = inlined_call_operand.vmem [shape: f32[2,1,32], index: 12, kind: input, shape index: {}]
  %s13 = inlined_call_operand.vmem [shape: bf16[2,32,32], index: 13, kind: input, shape index: {}]
  %s14 = inlined_call_operand.vmem [shape: f32[2,1,32], index: 14, kind: input, shape index: {}]
  %s15 = inlined_call_operand.vmem [shape: f32[2,1,32], index: 15, kind: input, shape index: {}]
  %s16 = inlined_call_operand.vmem [shape: f32[2,1,32], index: 16, kind: input, shape index: {}]
  %s17 = inlined_call_operand.vmem [shape: bf16[2,32,2048], index: 17, kind: input, shape index: {}]
  %s18 = inlined_call_operand.vmem [shape: f32[2,1,2048], index: 18, kind: input, shape index: {}]
  %s19 = inlined_call_operand.vmem [shape: bf16[2,2048,32], index: 19, kind: input, shape index: {}]
  %s20 = inlined_call_operand.vmem [shape: f32[2,1,32], index: 20, kind: input, shape index: {}]
  %s21 = inlined_call_operand.vmem [shape: f32[2,1,32], index: 21, kind: input, shape index: {}]
  %s22 = inlined_call_operand.vmem [shape: f32[2,1,32], index: 22, kind: input, shape index: {}]
  %s23 = inlined_call_operand.vmem [shape: bf16[32,128], index: 23, kind: input, shape index: {}]
  %s24 = inlined_call_operand.vmem [shape: f32[1,128], index: 24, kind: input, shape index: {}]
  %s25 = inlined_call_operand.hbm [shape: f32[2,1,128], index: 25, kind: output, shape index: {}]
  %s26 = sld [smem:[#allocation0]]
  $region141: #{tpu_custom_call.1} parent=0
    _
  %s28 = ssub.s32 1, %s26
  %s29 = scalar_select 0, %s28, %s26
  $region1: #{tpu_custom_call.1} parent=0
    #allocation3 [shape = 'u8[1024]{0}', space=vmem, size = 0x400, scoped, tag = 'output window, operand 0']
    #allocation4 [shape = 's32[2]{0}', space=sflag, size = 0x8, scoped, tag = 'scoped memory for tpu_custom_call.1']
    %30 = vsyncpa [#allocation4], 0
    %s31 = scalar_lea.sflag [#allocation4], 1
    %32 = vsyncpa %s31, 0
    loop: start=0, step=1, limit=6
    $region2: #{tpu_custom_call.1} parent=1 // loop_pre_header
      _
    $region3: #{tpu_custom_call.1} parent=1 // loop_header
      %s34 = sphi 0, %s38
      %p35 = scmp.ge.s32.totalorder %s34, 6
      %s41 = sphi 0, %s53
      %s42 = sphi 0, %s49
      %s43 = sphi 0, %s41
      %s44 = sphi 0, %s42
      %s45 = sphi 0, %s43
      %s46 = sphi 0, %s44
      %s56 = sphi 0, %s58
      %s59 = sphi 0, %s56
      %s60 = sphi 0, %s59
      %s76 = sphi 0, %s60
      %s82 = sphi 0, %s84
      %s85 = sphi 0, %s82
      %s86 = sphi 0, %s85
      %s102 = sphi 0, %s86
      %s108 = sphi 0, %s110
      %s111 = sphi 0, %s108
      %s112 = sphi 0, %s111
      %s128 = sphi 0, %s112
      %s132 = sphi 0, %s132
      %s134 = sphi 0, %s132
      %s135 = sphi 0, %s134
      %s149 = sphi 0, %s135
      %s153 = sphi 0, %s153
      %s155 = sphi 0, %s153
      %s156 = sphi 0, %s155
      %s170 = sphi 0, %s156
      %s174 = sphi 0, %s174
      %s176 = sphi 0, %s174
      %s177 = sphi 0, %s176
      %s191 = sphi 0, %s177
      %s195 = sphi 0, %s195
      %s197 = sphi 0, %s195
      %s198 = sphi 0, %s197
      %s212 = sphi 0, %s198
      %s218 = sphi 0, %s220
      %s221 = sphi 0, %s218
      %s222 = sphi 0, %s221
      %s238 = sphi 0, %s222
      %s244 = sphi 0, %s246
      %s247 = sphi 0, %s244
      %s248 = sphi 0, %s247
      %s264 = sphi 0, %s248
      %s270 = sphi 0, %s272
      %s273 = sphi 0, %s270
      %s274 = sphi 0, %s273
      %s290 = sphi 0, %s274
      %s296 = sphi 0, %s298
      %s299 = sphi 0, %s296
      %s300 = sphi 0, %s299
      %s316 = sphi 0, %s300
      %s322 = sphi 0, %s324
      %s325 = sphi 0, %s322
      %s326 = sphi 0, %s325
      %s342 = sphi 0, %s326
      %s348 = sphi 0, %s350
      %s351 = sphi 0, %s348
      %s352 = sphi 0, %s351
      %s368 = sphi 0, %s352
      %s374 = sphi 0, %s376
      %s377 = sphi 0, %s374
      %s378 = sphi 0, %s377
      %s394 = sphi 0, %s378
      %s400 = sphi 0, %s402
      %s403 = sphi 0, %s400
      %s404 = sphi 0, %s403
      %s420 = sphi 0, %s404
      %s426 = sphi 0, %s428
      %s429 = sphi 0, %s426
      %s430 = sphi 0, %s429
      %s446 = sphi 0, %s430
      %s452 = sphi 0, %s454
      %s455 = sphi 0, %s452
      %s456 = sphi 0, %s455
      %s472 = sphi 0, %s456
      %s478 = sphi 0, %s480
      %s481 = sphi 0, %s478
      %s482 = sphi 0, %s481
      %s498 = sphi 0, %s482
      %s504 = sphi 0, %s506
      %s507 = sphi 0, %s504
      %s508 = sphi 0, %s507
      %s524 = sphi 0, %s508
      %s530 = sphi 0, %s532
      %s533 = sphi 0, %s530
      %s534 = sphi 0, %s533
      %s550 = sphi 0, %s534
      %s556 = sphi 0, %s558
      %s559 = sphi 0, %s556
      %s560 = sphi 0, %s559
      %s576 = sphi 0, %s560
      %s582 = sphi 0, %s584
      %s585 = sphi 0, %s582
      %s586 = sphi 0, %s585
      %s602 = sphi 0, %s586
      %s608 = sphi 0, %s610
      %s611 = sphi 0, %s608
      %s612 = sphi 0, %s611
      %s628 = sphi 0, %s612
      %s632 = sphi 0, %s632
      %s634 = sphi 0, %s632
      %s635 = sphi 0, %s634
      %s649 = sphi 0, %s635
      %s653 = sphi 0, %s653
      %s655 = sphi 0, %s653
      %s656 = sphi 0, %s655
      %s670 = sphi 0, %s656
      %s676 = sphi 0, %s678
      %s679 = sphi 0, %s676
      %s680 = sphi 0, %s679
      %s696 = sphi 0, %s680
    $region4: #{tpu_custom_call.1} parent=1 // loop_header_branch
      %37 = sbr.rel (%p35) target = $region8
    $region5: #{tpu_custom_call.1} parent=1 // loop_body
      %s39 = ssub.s32 %s34, 1
      %s40 = ssub.s32 %s34, 2
      %s47 = sadd.s32 1, %s42
      %p48 = scmp.ge.s32.totalorder %s47, 2
      %s49 = scalar_select %p48, 0, %s47
      %s50 = sadd.s32 1, %s41
      %s51 = scalar_select %p48, %s50, %s41
      %p52 = scmp.ge.s32.totalorder %s51, 2
      %s53 = scalar_select %p52, 0, %s51
      %s54 = ssub.s32 %s41, %s53
      %p55 = scmp.eq.s32.totalorder %s54, 0
      %s57 = sadd.s32 %s56, 1
      %s58 = scalar_select %p55, %s56, %s57
      %p61 = pneg %p55
      %p62 = scmp.eq.s32.totalorder %s34, 3
      %p63 = por %p61, %p62
      %p64 = scmp.ne.s32.totalorder %s56, %s59
      %p65 = scmp.eq.s32.totalorder %s34, 0
      %p66 = por %p64, %p65
      %p67 = scmp.ne.s32.totalorder %s56, %s59
      %p68 = scmp.eq.s32.totalorder %s39, 3
      %p69 = por %p67, %p68
      %p70 = scmp.ne.s32.totalorder %s59, %s60
      %p71 = scmp.eq.s32.totalorder %s39, 0
      %p72 = por %p70, %p71
      %p73 = scmp.ne.s32.totalorder %s59, %s60
      %p74 = scmp.eq.s32.totalorder %s40, 3
      %p75 = por %p73, %p74
      %p77 = scmp.ne.s32.totalorder %s60, %s76
      %p78 = scmp.eq.s32.totalorder %s40, 0
      %p79 = por %p77, %p78
      %s80 = ssub.s32 %s41, %s53
      %p81 = scmp.eq.s32.totalorder %s80, 0
      %s83 = sadd.s32 %s82, 1
      %s84 = scalar_select %p81, %s82, %s83
      %p87 = pneg %p81
      %p88 = scmp.eq.s32.totalorder %s34, 3
      %p89 = por %p87, %p88
      %p90 = scmp.ne.s32.totalorder %s82, %s85
      %p91 = scmp.eq.s32.totalorder %s34, 0
      %p92 = por %p90, %p91
      %p93 = scmp.ne.s32.totalorder %s82, %s85
      %p94 = scmp.eq.s32.totalorder %s39, 3
      %p95 = por %p93, %p94
      %p96 = scmp.ne.s32.totalorder %s85, %s86
      %p97 = scmp.eq.s32.totalorder %s39, 0
      %p98 = por %p96, %p97
      %p99 = scmp.ne.s32.totalorder %s85, %s86
      %p100 = scmp.eq.s32.totalorder %s40, 3
      %p101 = por %p99, %p100
      %p103 = scmp.ne.s32.totalorder %s86, %s102
      %p104 = scmp.eq.s32.totalorder %s40, 0
      %p105 = por %p103, %p104
      %s106 = ssub.s32 %s41, %s53
      %p107 = scmp.eq.s32.totalorder %s106, 0
      %s109 = sadd.s32 %s108, 1
      %s110 = scalar_select %p107, %s108, %s109
      %p113 = pneg %p107
      %p114 = scmp.eq.s32.totalorder %s34, 3
      %p115 = por %p113, %p114
      %p116 = scmp.ne.s32.totalorder %s108, %s111
      %p117 = scmp.eq.s32.totalorder %s34, 0
      %p118 = por %p116, %p117
      %p119 = scmp.ne.s32.totalorder %s108, %s111
      %p120 = scmp.eq.s32.totalorder %s39, 3
      %p121 = por %p119, %p120
      %p122 = scmp.ne.s32.totalorder %s111, %s112
      %p123 = scmp.eq.s32.totalorder %s39, 0
      %p124 = por %p122, %p123
      %p125 = scmp.ne.s32.totalorder %s111, %s112
      %p126 = scmp.eq.s32.totalorder %s40, 3
      %p127 = por %p125, %p126
      %p129 = scmp.ne.s32.totalorder %s112, %s128
      %p130 = scmp.eq.s32.totalorder %s40, 0
      %p131 = por %p129, %p130
      %s133 = sadd.s32 %s132, 1
      %p136 = scmp.eq.s32.totalorder %s34, 3
      %p137 = scmp.ne.s32.totalorder %s132, %s134
      %p138 = scmp.eq.s32.totalorder %s34, 0
      %p139 = por %p137, %p138
      %p140 = scmp.ne.s32.totalorder %s132, %s134
      %p141 = scmp.eq.s32.totalorder %s39, 3
      %p142 = por %p140, %p141
      %p143 = scmp.ne.s32.totalorder %s134, %s135
      %p144 = scmp.eq.s32.totalorder %s39, 0
      %p145 = por %p143, %p144
      %p146 = scmp.ne.s32.totalorder %s134, %s135
      %p147 = scmp.eq.s32.totalorder %s40, 3
      %p148 = por %p146, %p147
      %p150 = scmp.ne.s32.totalorder %s135, %s149
      %p151 = scmp.eq.s32.totalorder %s40, 0
      %p152 = por %p150, %p151
      %s154 = sadd.s32 %s153, 1
      %p157 = scmp.eq.s32.totalorder %s34, 3
      %p158 = scmp.ne.s32.totalorder %s153, %s155
      %p159 = scmp.eq.s32.totalorder %s34, 0
      %p160 = por %p158, %p159
      %p161 = scmp.ne.s32.totalorder %s153, %s155
      %p162 = scmp.eq.s32.totalorder %s39, 3
      %p163 = por %p161, %p162
      %p164 = scmp.ne.s32.totalorder %s155, %s156
      %p165 = scmp.eq.s32.totalorder %s39, 0
      %p166 = por %p164, %p165
      %p167 = scmp.ne.s32.totalorder %s155, %s156
      %p168 = scmp.eq.s32.totalorder %s40, 3
      %p169 = por %p167, %p168
      %p171 = scmp.ne.s32.totalorder %s156, %s170
      %p172 = scmp.eq.s32.totalorder %s40, 0
      %p173 = por %p171, %p172
      %s175 = sadd.s32 %s174, 1
      %p178 = scmp.eq.s32.totalorder %s34, 3
      %p179 = scmp.ne.s32.totalorder %s174, %s176
      %p180 = scmp.eq.s32.totalorder %s34, 0
      %p181 = por %p179, %p180
      %p182 = scmp.ne.s32.totalorder %s174, %s176
      %p183 = scmp.eq.s32.totalorder %s39, 3
      %p184 = por %p182, %p183
      %p185 = scmp.ne.s32.totalorder %s176, %s177
      %p186 = scmp.eq.s32.totalorder %s39, 0
      %p187 = por %p185, %p186
      %p188 = scmp.ne.s32.totalorder %s176, %s177
      %p189 = scmp.eq.s32.totalorder %s40, 3
      %p190 = por %p188, %p189
      %p192 = scmp.ne.s32.totalorder %s177, %s191
      %p193 = scmp.eq.s32.totalorder %s40, 0
      %p194 = por %p192, %p193
      %s196 = sadd.s32 %s195, 1
      %p199 = scmp.eq.s32.totalorder %s34, 3
      %p200 = scmp.ne.s32.totalorder %s195, %s197
      %p201 = scmp.eq.s32.totalorder %s34, 0
      %p202 = por %p200, %p201
      %p203 = scmp.ne.s32.totalorder %s195, %s197
      %p204 = scmp.eq.s32.totalorder %s39, 3
      %p205 = por %p203, %p204
      %p206 = scmp.ne.s32.totalorder %s197, %s198
      %p207 = scmp.eq.s32.totalorder %s39, 0
      %p208 = por %p206, %p207
      %p209 = scmp.ne.s32.totalorder %s197, %s198
      %p210 = scmp.eq.s32.totalorder %s40, 3
      %p211 = por %p209, %p210
      %p213 = scmp.ne.s32.totalorder %s198, %s212
      %p214 = scmp.eq.s32.totalorder %s40, 0
      %p215 = por %p213, %p214
      %s216 = ssub.s32 %s42, %s49
      %p217 = scmp.eq.s32.totalorder %s216, 0
      %s219 = sadd.s32 %s218, 1
      %s220 = scalar_select %p217, %s218, %s219
      %p223 = pneg %p217
      %p224 = scmp.eq.s32.totalorder %s34, 3
      %p225 = por %p223, %p224
      %p226 = scmp.ne.s32.totalorder %s218, %s221
      %p227 = scmp.eq.s32.totalorder %s34, 0
      %p228 = por %p226, %p227
      %p229 = scmp.ne.s32.totalorder %s218, %s221
      %p230 = scmp.eq.s32.totalorder %s39, 3
      %p231 = por %p229, %p230
      %p232 = scmp.ne.s32.totalorder %s221, %s222
      %p233 = scmp.eq.s32.totalorder %s39, 0
      %p234 = por %p232, %p233
      %p235 = scmp.ne.s32.totalorder %s221, %s222
      %p236 = scmp.eq.s32.totalorder %s40, 3
      %p237 = por %p235, %p236
      %p239 = scmp.ne.s32.totalorder %s222, %s238
      %p240 = scmp.eq.s32.totalorder %s40, 0
      %p241 = por %p239, %p240
      %s242 = ssub.s32 %s42, %s49
      %p243 = scmp.eq.s32.totalorder %s242, 0
      %s245 = sadd.s32 %s244, 1
      %s246 = scalar_select %p243, %s244, %s245
      %p249 = pneg %p243
      %p250 = scmp.eq.s32.totalorder %s34, 3
      %p251 = por %p249, %p250
      %p252 = scmp.ne.s32.totalorder %s244, %s247
      %p253 = scmp.eq.s32.totalorder %s34, 0
      %p254 = por %p252, %p253
      %p255 = scmp.ne.s32.totalorder %s244, %s247
      %p256 = scmp.eq.s32.totalorder %s39, 3
      %p257 = por %p255, %p256
      %p258 = scmp.ne.s32.totalorder %s247, %s248
      %p259 = scmp.eq.s32.totalorder %s39, 0
      %p260 = por %p258, %p259
      %p261 = scmp.ne.s32.totalorder %s247, %s248
      %p262 = scmp.eq.s32.totalorder %s40, 3
      %p263 = por %p261, %p262
      %p265 = scmp.ne.s32.totalorder %s248, %s264
      %p266 = scmp.eq.s32.totalorder %s40, 0
      %p267 = por %p265, %p266
      %s268 = ssub.s32 %s42, %s49
      %p269 = scmp.eq.s32.totalorder %s268, 0
      %s271 = sadd.s32 %s270, 1
      %s272 = scalar_select %p269, %s270, %s271
      %p275 = pneg %p269
      %p276 = scmp.eq.s32.totalorder %s34, 3
      %p277 = por %p275, %p276
      %p278 = scmp.ne.s32.totalorder %s270, %s273
      %p279 = scmp.eq.s32.totalorder %s34, 0
      %p280 = por %p278, %p279
      %p281 = scmp.ne.s32.totalorder %s270, %s273
      %p282 = scmp.eq.s32.totalorder %s39, 3
      %p283 = por %p281, %p282
      %p284 = scmp.ne.s32.totalorder %s273, %s274
      %p285 = scmp.eq.s32.totalorder %s39, 0
      %p286 = por %p284, %p285
      %p287 = scmp.ne.s32.totalorder %s273, %s274
      %p288 = scmp.eq.s32.totalorder %s40, 3
      %p289 = por %p287, %p288
      %p291 = scmp.ne.s32.totalorder %s274, %s290
      %p292 = scmp.eq.s32.totalorder %s40, 0
      %p293 = por %p291, %p292
      %s294 = ssub.s32 %s42, %s49
      %p295 = scmp.eq.s32.totalorder %s294, 0
      %s297 = sadd.s32 %s296, 1
      %s298 = scalar_select %p295, %s296, %s297
      %p301 = pneg %p295
      %p302 = scmp.eq.s32.totalorder %s34, 3
      %p303 = por %p301, %p302
      %p304 = scmp.ne.s32.totalorder %s296, %s299
      %p305 = scmp.eq.s32.totalorder %s34, 0
      %p306 = por %p304, %p305
      %p307 = scmp.ne.s32.totalorder %s296, %s299
      %p308 = scmp.eq.s32.totalorder %s39, 3
      %p309 = por %p307, %p308
      %p310 = scmp.ne.s32.totalorder %s299, %s300
      %p311 = scmp.eq.s32.totalorder %s39, 0
      %p312 = por %p310, %p311
      %p313 = scmp.ne.s32.totalorder %s299, %s300
      %p314 = scmp.eq.s32.totalorder %s40, 3
      %p315 = por %p313, %p314
      %p317 = scmp.ne.s32.totalorder %s300, %s316
      %p318 = scmp.eq.s32.totalorder %s40, 0
      %p319 = por %p317, %p318
      %s320 = ssub.s32 %s42, %s49
      %p321 = scmp.eq.s32.totalorder %s320, 0
      %s323 = sadd.s32 %s322, 1
      %s324 = scalar_select %p321, %s322, %s323
      %p327 = pneg %p321
      %p328 = scmp.eq.s32.totalorder %s34, 3
      %p329 = por %p327, %p328
      %p330 = scmp.ne.s32.totalorder %s322, %s325
      %p331 = scmp.eq.s32.totalorder %s34, 0
      %p332 = por %p330, %p331
      %p333 = scmp.ne.s32.totalorder %s322, %s325
      %p334 = scmp.eq.s32.totalorder %s39, 3
      %p335 = por %p333, %p334
      %p336 = scmp.ne.s32.totalorder %s325, %s326
      %p337 = scmp.eq.s32.totalorder %s39, 0
      %p338 = por %p336, %p337
      %p339 = scmp.ne.s32.totalorder %s325, %s326
      %p340 = scmp.eq.s32.totalorder %s40, 3
      %p341 = por %p339, %p340
      %p343 = scmp.ne.s32.totalorder %s326, %s342
      %p344 = scmp.eq.s32.totalorder %s40, 0
      %p345 = por %p343, %p344
      %s346 = ssub.s32 %s42, %s49
      %p347 = scmp.eq.s32.totalorder %s346, 0
      %s349 = sadd.s32 %s348, 1
      %s350 = scalar_select %p347, %s348, %s349
      %p353 = pneg %p347
      %p354 = scmp.eq.s32.totalorder %s34, 3
      %p355 = por %p353, %p354
      %p356 = scmp.ne.s32.totalorder %s348, %s351
      %p357 = scmp.eq.s32.totalorder %s34, 0
      %p358 = por %p356, %p357
      %p359 = scmp.ne.s32.totalorder %s348, %s351
      %p360 = scmp.eq.s32.totalorder %s39, 3
      %p361 = por %p359, %p360
      %p362 = scmp.ne.s32.totalorder %s351, %s352
      %p363 = scmp.eq.s32.totalorder %s39, 0
      %p364 = por %p362, %p363
      %p365 = scmp.ne.s32.totalorder %s351, %s352
      %p366 = scmp.eq.s32.totalorder %s40, 3
      %p367 = por %p365, %p366
      %p369 = scmp.ne.s32.totalorder %s352, %s368
      %p370 = scmp.eq.s32.totalorder %s40, 0
      %p371 = por %p369, %p370
      %s372 = ssub.s32 %s42, %s49
      %p373 = scmp.eq.s32.totalorder %s372, 0
      %s375 = sadd.s32 %s374, 1
      %s376 = scalar_select %p373, %s374, %s375
      %p379 = pneg %p373
      %p380 = scmp.eq.s32.totalorder %s34, 3
      %p381 = por %p379, %p380
      %p382 = scmp.ne.s32.totalorder %s374, %s377
      %p383 = scmp.eq.s32.totalorder %s34, 0
      %p384 = por %p382, %p383
      %p385 = scmp.ne.s32.totalorder %s374, %s377
      %p386 = scmp.eq.s32.totalorder %s39, 3
      %p387 = por %p385, %p386
      %p388 = scmp.ne.s32.totalorder %s377, %s378
      %p389 = scmp.eq.s32.totalorder %s39, 0
      %p390 = por %p388, %p389
      %p391 = scmp.ne.s32.totalorder %s377, %s378
      %p392 = scmp.eq.s32.totalorder %s40, 3
      %p393 = por %p391, %p392
      %p395 = scmp.ne.s32.totalorder %s378, %s394
      %p396 = scmp.eq.s32.totalorder %s40, 0
      %p397 = por %p395, %p396
      %s398 = ssub.s32 %s42, %s49
      %p399 = scmp.eq.s32.totalorder %s398, 0
      %s401 = sadd.s32 %s400, 1
      %s402 = scalar_select %p399, %s400, %s401
      %p405 = pneg %p399
      %p406 = scmp.eq.s32.totalorder %s34, 3
      %p407 = por %p405, %p406
      %p408 = scmp.ne.s32.totalorder %s400, %s403
      %p409 = scmp.eq.s32.totalorder %s34, 0
      %p410 = por %p408, %p409
      %p411 = scmp.ne.s32.totalorder %s400, %s403
      %p412 = scmp.eq.s32.totalorder %s39, 3
      %p413 = por %p411, %p412
      %p414 = scmp.ne.s32.totalorder %s403, %s404
      %p415 = scmp.eq.s32.totalorder %s39, 0
      %p416 = por %p414, %p415
      %p417 = scmp.ne.s32.totalorder %s403, %s404
      %p418 = scmp.eq.s32.totalorder %s40, 3
      %p419 = por %p417, %p418
      %p421 = scmp.ne.s32.totalorder %s404, %s420
      %p422 = scmp.eq.s32.totalorder %s40, 0
      %p423 = por %p421, %p422
      %s424 = ssub.s32 %s42, %s49
      %p425 = scmp.eq.s32.totalorder %s424, 0
      %s427 = sadd.s32 %s426, 1
      %s428 = scalar_select %p425, %s426, %s427
      %p431 = pneg %p425
      %p432 = scmp.eq.s32.totalorder %s34, 3
      %p433 = por %p431, %p432
      %p434 = scmp.ne.s32.totalorder %s426, %s429
      %p435 = scmp.eq.s32.totalorder %s34, 0
      %p436 = por %p434, %p435
      %p437 = scmp.ne.s32.totalorder %s426, %s429
      %p438 = scmp.eq.s32.totalorder %s39, 3
      %p439 = por %p437, %p438
      %p440 = scmp.ne.s32.totalorder %s429, %s430
      %p441 = scmp.eq.s32.totalorder %s39, 0
      %p442 = por %p440, %p441
      %p443 = scmp.ne.s32.totalorder %s429, %s430
      %p444 = scmp.eq.s32.totalorder %s40, 3
      %p445 = por %p443, %p444
      %p447 = scmp.ne.s32.totalorder %s430, %s446
      %p448 = scmp.eq.s32.totalorder %s40, 0
      %p449 = por %p447, %p448
      %s450 = ssub.s32 %s42, %s49
      %p451 = scmp.eq.s32.totalorder %s450, 0
      %s453 = sadd.s32 %s452, 1
      %s454 = scalar_select %p451, %s452, %s453
      %p457 = pneg %p451
      %p458 = scmp.eq.s32.totalorder %s34, 3
      %p459 = por %p457, %p458
      %p460 = scmp.ne.s32.totalorder %s452, %s455
      %p461 = scmp.eq.s32.totalorder %s34, 0
      %p462 = por %p460, %p461
      %p463 = scmp.ne.s32.totalorder %s452, %s455
      %p464 = scmp.eq.s32.totalorder %s39, 3
      %p465 = por %p463, %p464
      %p466 = scmp.ne.s32.totalorder %s455, %s456
      %p467 = scmp.eq.s32.totalorder %s39, 0
      %p468 = por %p466, %p467
      %p469 = scmp.ne.s32.totalorder %s455, %s456
      %p470 = scmp.eq.s32.totalorder %s40, 3
      %p471 = por %p469, %p470
      %p473 = scmp.ne.s32.totalorder %s456, %s472
      %p474 = scmp.eq.s32.totalorder %s40, 0
      %p475 = por %p473, %p474
      %s476 = ssub.s32 %s42, %s49
      %p477 = scmp.eq.s32.totalorder %s476, 0
      %s479 = sadd.s32 %s478, 1
      %s480 = scalar_select %p477, %s478, %s479
      %p483 = pneg %p477
      %p484 = scmp.eq.s32.totalorder %s34, 3
      %p485 = por %p483, %p484
      %p486 = scmp.ne.s32.totalorder %s478, %s481
      %p487 = scmp.eq.s32.totalorder %s34, 0
      %p488 = por %p486, %p487
      %p489 = scmp.ne.s32.totalorder %s478, %s481
      %p490 = scmp.eq.s32.totalorder %s39, 3
      %p491 = por %p489, %p490
      %p492 = scmp.ne.s32.totalorder %s481, %s482
      %p493 = scmp.eq.s32.totalorder %s39, 0
      %p494 = por %p492, %p493
      %p495 = scmp.ne.s32.totalorder %s481, %s482
      %p496 = scmp.eq.s32.totalorder %s40, 3
      %p497 = por %p495, %p496
      %p499 = scmp.ne.s32.totalorder %s482, %s498
      %p500 = scmp.eq.s32.totalorder %s40, 0
      %p501 = por %p499, %p500
      %s502 = ssub.s32 %s42, %s49
      %p503 = scmp.eq.s32.totalorder %s502, 0
      %s505 = sadd.s32 %s504, 1
      %s506 = scalar_select %p503, %s504, %s505
      %p509 = pneg %p503
      %p510 = scmp.eq.s32.totalorder %s34, 3
      %p511 = por %p509, %p510
      %p512 = scmp.ne.s32.totalorder %s504, %s507
      %p513 = scmp.eq.s32.totalorder %s34, 0
      %p514 = por %p512, %p513
      %p515 = scmp.ne.s32.totalorder %s504, %s507
      %p516 = scmp.eq.s32.totalorder %s39, 3
      %p517 = por %p515, %p516
      %p518 = scmp.ne.s32.totalorder %s507, %s508
      %p519 = scmp.eq.s32.totalorder %s39, 0
      %p520 = por %p518, %p519
      %p521 = scmp.ne.s32.totalorder %s507, %s508
      %p522 = scmp.eq.s32.totalorder %s40, 3
      %p523 = por %p521, %p522
      %p525 = scmp.ne.s32.totalorder %s508, %s524
      %p526 = scmp.eq.s32.totalorder %s40, 0
      %p527 = por %p525, %p526
      %s528 = ssub.s32 %s42, %s49
      %p529 = scmp.eq.s32.totalorder %s528, 0
      %s531 = sadd.s32 %s530, 1
      %s532 = scalar_select %p529, %s530, %s531
      %p535 = pneg %p529
      %p536 = scmp.eq.s32.totalorder %s34, 3
      %p537 = por %p535, %p536
      %p538 = scmp.ne.s32.totalorder %s530, %s533
      %p539 = scmp.eq.s32.totalorder %s34, 0
      %p540 = por %p538, %p539
      %p541 = scmp.ne.s32.totalorder %s530, %s533
      %p542 = scmp.eq.s32.totalorder %s39, 3
      %p543 = por %p541, %p542
      %p544 = scmp.ne.s32.totalorder %s533, %s534
      %p545 = scmp.eq.s32.totalorder %s39, 0
      %p546 = por %p544, %p545
      %p547 = scmp.ne.s32.totalorder %s533, %s534
      %p548 = scmp.eq.s32.totalorder %s40, 3
      %p549 = por %p547, %p548
      %p551 = scmp.ne.s32.totalorder %s534, %s550
      %p552 = scmp.eq.s32.totalorder %s40, 0
      %p553 = por %p551, %p552
      %s554 = ssub.s32 %s42, %s49
      %p555 = scmp.eq.s32.totalorder %s554, 0
      %s557 = sadd.s32 %s556, 1
      %s558 = scalar_select %p555, %s556, %s557
      %p561 = pneg %p555
      %p562 = scmp.eq.s32.totalorder %s34, 3
      %p563 = por %p561, %p562
      %p564 = scmp.ne.s32.totalorder %s556, %s559
      %p565 = scmp.eq.s32.totalorder %s34, 0
      %p566 = por %p564, %p565
      %p567 = scmp.ne.s32.totalorder %s556, %s559
      %p568 = scmp.eq.s32.totalorder %s39, 3
      %p569 = por %p567, %p568
      %p570 = scmp.ne.s32.totalorder %s559, %s560
      %p571 = scmp.eq.s32.totalorder %s39, 0
      %p572 = por %p570, %p571
      %p573 = scmp.ne.s32.totalorder %s559, %s560
      %p574 = scmp.eq.s32.totalorder %s40, 3
      %p575 = por %p573, %p574
      %p577 = scmp.ne.s32.totalorder %s560, %s576
      %p578 = scmp.eq.s32.totalorder %s40, 0
      %p579 = por %p577, %p578
      %s580 = ssub.s32 %s42, %s49
      %p581 = scmp.eq.s32.totalorder %s580, 0
      %s583 = sadd.s32 %s582, 1
      %s584 = scalar_select %p581, %s582, %s583
      %p587 = pneg %p581
      %p588 = scmp.eq.s32.totalorder %s34, 3
      %p589 = por %p587, %p588
      %p590 = scmp.ne.s32.totalorder %s582, %s585
      %p591 = scmp.eq.s32.totalorder %s34, 0
      %p592 = por %p590, %p591
      %p593 = scmp.ne.s32.totalorder %s582, %s585
      %p594 = scmp.eq.s32.totalorder %s39, 3
      %p595 = por %p593, %p594
      %p596 = scmp.ne.s32.totalorder %s585, %s586
      %p597 = scmp.eq.s32.totalorder %s39, 0
      %p598 = por %p596, %p597
      %p599 = scmp.ne.s32.totalorder %s585, %s586
      %p600 = scmp.eq.s32.totalorder %s40, 3
      %p601 = por %p599, %p600
      %p603 = scmp.ne.s32.totalorder %s586, %s602
      %p604 = scmp.eq.s32.totalorder %s40, 0
      %p605 = por %p603, %p604
      %s606 = ssub.s32 %s42, %s49
      %p607 = scmp.eq.s32.totalorder %s606, 0
      %s609 = sadd.s32 %s608, 1
      %s610 = scalar_select %p607, %s608, %s609
      %p613 = pneg %p607
      %p614 = scmp.eq.s32.totalorder %s34, 3
      %p615 = por %p613, %p614
      %p616 = scmp.ne.s32.totalorder %s608, %s611
      %p617 = scmp.eq.s32.totalorder %s34, 0
      %p618 = por %p616, %p617
      %p619 = scmp.ne.s32.totalorder %s608, %s611
      %p620 = scmp.eq.s32.totalorder %s39, 3
      %p621 = por %p619, %p620
      %p622 = scmp.ne.s32.totalorder %s611, %s612
      %p623 = scmp.eq.s32.totalorder %s39, 0
      %p624 = por %p622, %p623
      %p625 = scmp.ne.s32.totalorder %s611, %s612
      %p626 = scmp.eq.s32.totalorder %s40, 3
      %p627 = por %p625, %p626
      %p629 = scmp.ne.s32.totalorder %s612, %s628
      %p630 = scmp.eq.s32.totalorder %s40, 0
      %p631 = por %p629, %p630
      %s633 = sadd.s32 %s632, 1
      %p636 = scmp.eq.s32.totalorder %s34, 3
      %p637 = scmp.ne.s32.totalorder %s632, %s634
      %p638 = scmp.eq.s32.totalorder %s34, 0
      %p639 = por %p637, %p638
      %p640 = scmp.ne.s32.totalorder %s632, %s634
      %p641 = scmp.eq.s32.totalorder %s39, 3
      %p642 = por %p640, %p641
      %p643 = scmp.ne.s32.totalorder %s634, %s635
      %p644 = scmp.eq.s32.totalorder %s39, 0
      %p645 = por %p643, %p644
      %p646 = scmp.ne.s32.totalorder %s634, %s635
      %p647 = scmp.eq.s32.totalorder %s40, 3
      %p648 = por %p646, %p647
      %p650 = scmp.ne.s32.totalorder %s635, %s649
      %p651 = scmp.eq.s32.totalorder %s40, 0
      %p652 = por %p650, %p651
      %s654 = sadd.s32 %s653, 1
      %p657 = scmp.eq.s32.totalorder %s34, 3
      %p658 = scmp.ne.s32.totalorder %s653, %s655
      %p659 = scmp.eq.s32.totalorder %s34, 0
      %p660 = por %p658, %p659
      %p661 = scmp.ne.s32.totalorder %s653, %s655
      %p662 = scmp.eq.s32.totalorder %s39, 3
      %p663 = por %p661, %p662
      %p664 = scmp.ne.s32.totalorder %s655, %s656
      %p665 = scmp.eq.s32.totalorder %s39, 0
      %p666 = por %p664, %p665
      %p667 = scmp.ne.s32.totalorder %s655, %s656
      %p668 = scmp.eq.s32.totalorder %s40, 3
      %p669 = por %p667, %p668
      %p671 = scmp.ne.s32.totalorder %s656, %s670
      %p672 = scmp.eq.s32.totalorder %s40, 0
      %p673 = por %p671, %p672
      %s674 = ssub.s32 %s41, %s53
      %p675 = scmp.eq.s32.totalorder %s674, 0
      %s677 = sadd.s32 %s676, 1
      %s678 = scalar_select %p675, %s676, %s677
      %p681 = pneg %p675
      %p682 = scmp.eq.s32.totalorder %s34, 3
      %p683 = por %p681, %p682
      %p684 = scmp.ne.s32.totalorder %s676, %s679
      %p685 = scmp.eq.s32.totalorder %s34, 0
      %p686 = por %p684, %p685
      %p687 = scmp.ne.s32.totalorder %s676, %s679
      %p688 = scmp.eq.s32.totalorder %s39, 3
      %p689 = por %p687, %p688
      %p690 = scmp.ne.s32.totalorder %s679, %s680
      %p691 = scmp.eq.s32.totalorder %s39, 0
      %p692 = por %p690, %p691
      %p693 = scmp.ne.s32.totalorder %s679, %s680
      %p694 = scmp.eq.s32.totalorder %s40, 3
      %p695 = por %p693, %p694
      %p697 = scmp.ne.s32.totalorder %s680, %s696
      %p698 = scmp.eq.s32.totalorder %s40, 0
      %p699 = por %p697, %p698
      %p700 = scmp.le.s32.totalorder 1, %s34
      %p701 = scmp.lt.s32.totalorder %s34, 5
      %p702 = pnand %p700, %p701
      %p703 = pneg %p702
      // Predicated region
      $region9: #{tpu_custom_call.1} parent=5 // pred_check
        _
      $region10: #{tpu_custom_call.1} parent=5 // pred_check_branch
        %705 = sbr.rel (%p702) target = $region12
      $region11: #{tpu_custom_call.1} parent=5 // pred_region
        %s706 = ssub.s32 %s34, 1
        // Predicated region
        $region13: #{tpu_custom_call.1} parent=11 // pred_check
          %p707 = pneg %p145
        $region14: #{tpu_custom_call.1} parent=11 // pred_check_branch
          %709 = sbr.rel (%p707) target = $region16
        $region15: #{tpu_custom_call.1} parent=11 // pred_region
          _
        $region16: #{tpu_custom_call.1} parent=11 // pred_fallthru
          _
        // Predicated region
        $region17: #{tpu_custom_call.1} parent=11 // pred_check
          %p710 = pneg %p166
        $region18: #{tpu_custom_call.1} parent=11 // pred_check_branch
          %712 = sbr.rel (%p710) target = $region20
        $region19: #{tpu_custom_call.1} parent=11 // pred_region
          _
        $region20: #{tpu_custom_call.1} parent=11 // pred_fallthru
          _
        // Predicated region
        $region21: #{tpu_custom_call.1} parent=11 // pred_check
          %p713 = pneg %p187
        $region22: #{tpu_custom_call.1} parent=11 // pred_check_branch
          %715 = sbr.rel (%p713) target = $region24
        $region23: #{tpu_custom_call.1} parent=11 // pred_region
          _
        $region24: #{tpu_custom_call.1} parent=11 // pred_fallthru
          _
        // Predicated region
        $region25: #{tpu_custom_call.1} parent=11 // pred_check
          %p716 = pneg %p208
        $region26: #{tpu_custom_call.1} parent=11 // pred_check_branch
          %718 = sbr.rel (%p716) target = $region28
        $region27: #{tpu_custom_call.1} parent=11 // pred_region
          _
        $region28: #{tpu_custom_call.1} parent=11 // pred_fallthru
          _
        // Predicated region
        $region29: #{tpu_custom_call.1} parent=11 // pred_check
          %p719 = pneg %p645
        $region30: #{tpu_custom_call.1} parent=11 // pred_check_branch
          %721 = sbr.rel (%p719) target = $region32
        $region31: #{tpu_custom_call.1} parent=11 // pred_region
          _
        $region32: #{tpu_custom_call.1} parent=11 // pred_fallthru
          _
        // Predicated region
        $region33: #{tpu_custom_call.1} parent=11 // pred_check
          %p722 = pneg %p666
        $region34: #{tpu_custom_call.1} parent=11 // pred_check_branch
          %724 = sbr.rel (%p722) target = $region36
        $region35: #{tpu_custom_call.1} parent=11 // pred_region
          _
        $region36: #{tpu_custom_call.1} parent=11 // pred_fallthru
          _
      $region12: #{tpu_custom_call.1} parent=5 // pred_fallthru
        _
      %p725 = scmp.lt.s32.totalorder %s34, 4
      // Predicated region
      $region37: #{tpu_custom_call.1} parent=5 // pred_check
        %p726 = pneg %p725
      $region38: #{tpu_custom_call.1} parent=5 // pred_check_branch
        %728 = sbr.rel (%p726) target = $region40
      $region39: #{tpu_custom_call.1} parent=5 // pred_region
        // Predicated region
        $region41: #{tpu_custom_call.1} parent=39 // pred_check
          %p729 = pneg %p66
        $region42: #{tpu_custom_call.1} parent=39 // pred_check_branch
          %731 = sbr.rel (%p729) target = $region44
        $region43: #{tpu_custom_call.1} parent=39 // pred_region
          %p732 = scmp.lt.s32.totalorder %s41, 1
          %s733 = scalar_select %p732, %s41, 1
          %s734 = smul.addr %s733, 8
          %s735 = scalar_lea.vmem %s0, %s734
        $region44: #{tpu_custom_call.1} parent=39 // pred_fallthru
          _
        // Predicated region
        $region45: #{tpu_custom_call.1} parent=39 // pred_check
          %p736 = pneg %p92
        $region46: #{tpu_custom_call.1} parent=39 // pred_check_branch
          %738 = sbr.rel (%p736) target = $region48
        $region47: #{tpu_custom_call.1} parent=39 // pred_region
          %p739 = scmp.lt.s32.totalorder %s41, 1
          %s740 = scalar_select %p739, %s41, 1
          %s741 = scalar_lea.vmem %s1, %s740
        $region48: #{tpu_custom_call.1} parent=39 // pred_fallthru
          _
        // Predicated region
        $region49: #{tpu_custom_call.1} parent=39 // pred_check
          %p742 = pneg %p118
        $region50: #{tpu_custom_call.1} parent=39 // pred_check_branch
          %744 = sbr.rel (%p742) target = $region52
        $region51: #{tpu_custom_call.1} parent=39 // pred_region
          %p745 = scmp.lt.s32.totalorder %s41, 1
          %s746 = scalar_select %p745, %s41, 1
          %s747 = scalar_lea.vmem %s2, %s746
        $region52: #{tpu_custom_call.1} parent=39 // pred_fallthru
          _
        // Predicated region
        $region53: #{tpu_custom_call.1} parent=39 // pred_check
          %p748 = pneg %p228
        $region54: #{tpu_custom_call.1} parent=39 // pred_check_branch
          %750 = sbr.rel (%p748) target = $region56
        $region55: #{tpu_custom_call.1} parent=39 // pred_region
          %p751 = scmp.lt.s32.totalorder %s42, 1
          %s752 = scalar_select %p751, %s42, 1
          %s753 = smul.addr %s752, 4
          %s754 = smul.addr %s753, 4
          %s755 = scalar_lea.vmem %s7, %s754
        $region56: #{tpu_custom_call.1} parent=39 // pred_fallthru
          _
        // Predicated region
        $region57: #{tpu_custom_call.1} parent=39 // pred_check
          %p756 = pneg %p254
        $region58: #{tpu_custom_call.1} parent=39 // pred_check_branch
          %758 = sbr.rel (%p756) target = $region60
        $region59: #{tpu_custom_call.1} parent=39 // pred_region
          %p759 = scmp.lt.s32.totalorder %s42, 1
          %s760 = scalar_select %p759, %s42, 1
          %s761 = scalar_lea.vmem %s8, %s760
        $region60: #{tpu_custom_call.1} parent=39 // pred_fallthru
          _
        // Predicated region
        $region61: #{tpu_custom_call.1} parent=39 // pred_check
          %p762 = pneg %p280
        $region62: #{tpu_custom_call.1} parent=39 // pred_check_branch
          %764 = sbr.rel (%p762) target = $region64
        $region63: #{tpu_custom_call.1} parent=39 // pred_region
          %p765 = scmp.lt.s32.totalorder %s42, 1
          %s766 = scalar_select %p765, %s42, 1
          %s767 = smul.addr %s766, 4
          %s768 = smul.addr %s767, 4
          %s769 = scalar_lea.vmem %s9, %s768
        $region64: #{tpu_custom_call.1} parent=39 // pred_fallthru
          _
        // Predicated region
        $region65: #{tpu_custom_call.1} parent=39 // pred_check
          %p770 = pneg %p306
        $region66: #{tpu_custom_call.1} parent=39 // pred_check_branch
          %772 = sbr.rel (%p770) target = $region68
        $region67: #{tpu_custom_call.1} parent=39 // pred_region
          %p773 = scmp.lt.s32.totalorder %s42, 1
          %s774 = scalar_select %p773, %s42, 1
          %s775 = scalar_lea.vmem %s10, %s774
        $region68: #{tpu_custom_call.1} parent=39 // pred_fallthru
          _
        // Predicated region
        $region69: #{tpu_custom_call.1} parent=39 // pred_check
          %p776 = pneg %p332
        $region70: #{tpu_custom_call.1} parent=39 // pred_check_branch
          %778 = sbr.rel (%p776) target = $region72
        $region71: #{tpu_custom_call.1} parent=39 // pred_region
          %p779 = scmp.lt.s32.totalorder %s42, 1
          %s780 = scalar_select %p779, %s42, 1
          %s781 = smul.addr %s780, 4
          %s782 = smul.addr %s781, 4
          %s783 = scalar_lea.vmem %s11, %s782
        $region72: #{tpu_custom_call.1} parent=39 // pred_fallthru
          _
        // Predicated region
        $region73: #{tpu_custom_call.1} parent=39 // pred_check
          %p784 = pneg %p358
        $region74: #{tpu_custom_call.1} parent=39 // pred_check_branch
          %786 = sbr.rel (%p784) target = $region76
        $region75: #{tpu_custom_call.1} parent=39 // pred_region
          %p787 = scmp.lt.s32.totalorder %s42, 1
          %s788 = scalar_select %p787, %s42, 1
          %s789 = scalar_lea.vmem %s12, %s788
        $region76: #{tpu_custom_call.1} parent=39 // pred_fallthru
          _
        // Predicated region
        $region77: #{tpu_custom_call.1} parent=39 // pred_check
          %p790 = pneg %p384
        $region78: #{tpu_custom_call.1} parent=39 // pred_check_branch
          %792 = sbr.rel (%p790) target = $region80
        $region79: #{tpu_custom_call.1} parent=39 // pred_region
          %p793 = scmp.lt.s32.totalorder %s42, 1
          %s794 = scalar_select %p793, %s42, 1
          %s795 = smul.addr %s794, 4
          %s796 = smul.addr %s795, 4
          %s797 = scalar_lea.vmem %s13, %s796
        $region80: #{tpu_custom_call.1} parent=39 // pred_fallthru
          _
        // Predicated region
        $region81: #{tpu_custom_call.1} parent=39 // pred_check
          %p798 = pneg %p410
        $region82: #{tpu_custom_call.1} parent=39 // pred_check_branch
          %800 = sbr.rel (%p798) target = $region84
        $region83: #{tpu_custom_call.1} parent=39 // pred_region
          %p801 = scmp.lt.s32.totalorder %s42, 1
          %s802 = scalar_select %p801, %s42, 1
          %s803 = scalar_lea.vmem %s14, %s802
        $region84: #{tpu_custom_call.1} parent=39 // pred_fallthru
          _
        // Predicated region
        $region85: #{tpu_custom_call.1} parent=39 // pred_check
          %p804 = pneg %p436
        $region86: #{tpu_custom_call.1} parent=39 // pred_check_branch
          %806 = sbr.rel (%p804) target = $region88
        $region87: #{tpu_custom_call.1} parent=39 // pred_region
          %p807 = scmp.lt.s32.totalorder %s42, 1
          %s808 = scalar_select %p807, %s42, 1
          %s809 = scalar_lea.vmem %s15, %s808
        $region88: #{tpu_custom_call.1} parent=39 // pred_fallthru
          _
        // Predicated region
        $region89: #{tpu_custom_call.1} parent=39 // pred_check
          %p810 = pneg %p462
        $region90: #{tpu_custom_call.1} parent=39 // pred_check_branch
          %812 = sbr.rel (%p810) target = $region92
        $region91: #{tpu_custom_call.1} parent=39 // pred_region
          %p813 = scmp.lt.s32.totalorder %s42, 1
          %s814 = scalar_select %p813, %s42, 1
          %s815 = scalar_lea.vmem %s16, %s814
        $region92: #{tpu_custom_call.1} parent=39 // pred_fallthru
          _
        // Predicated region
        $region93: #{tpu_custom_call.1} parent=39 // pred_check
          %p816 = pneg %p488
        $region94: #{tpu_custom_call.1} parent=39 // pred_check_branch
          %818 = sbr.rel (%p816) target = $region96
        $region95: #{tpu_custom_call.1} parent=39 // pred_region
          %p819 = scmp.lt.s32.totalorder %s42, 1
          %s820 = scalar_select %p819, %s42, 1
          %s821 = smul.addr %s820, 64
          %s822 = smul.addr %s821, 4
          %s823 = scalar_lea.vmem %s17, %s822
        $region96: #{tpu_custom_call.1} parent=39 // pred_fallthru
          _
        // Predicated region
        $region97: #{tpu_custom_call.1} parent=39 // pred_check
          %p824 = pneg %p514
        $region98: #{tpu_custom_call.1} parent=39 // pred_check_branch
          %826 = sbr.rel (%p824) target = $region100
        $region99: #{tpu_custom_call.1} parent=39 // pred_region
          %p827 = scmp.lt.s32.totalorder %s42, 1
          %s828 = scalar_select %p827, %s42, 1
          %s829 = smul.addr %s828, 16
          %s830 = scalar_lea.vmem %s18, %s829
        $region100: #{tpu_custom_call.1} parent=39 // pred_fallthru
          _
        // Predicated region
        $region101: #{tpu_custom_call.1} parent=39 // pred_check
          %p831 = pneg %p540
        $region102: #{tpu_custom_call.1} parent=39 // pred_check_branch
          %833 = sbr.rel (%p831) target = $region104
        $region103: #{tpu_custom_call.1} parent=39 // pred_region
          %p834 = scmp.lt.s32.totalorder %s42, 1
          %s835 = scalar_select %p834, %s42, 1
          %s836 = smul.addr %s835, 256
          %s837 = smul.addr %s836, 4
          %s838 = scalar_lea.vmem %s19, %s837
        $region104: #{tpu_custom_call.1} parent=39 // pred_fallthru
          _
        // Predicated region
        $region105: #{tpu_custom_call.1} parent=39 // pred_check
          %p839 = pneg %p566
        $region106: #{tpu_custom_call.1} parent=39 // pred_check_branch
          %841 = sbr.rel (%p839) target = $region108
        $region107: #{tpu_custom_call.1} parent=39 // pred_region
          %p842 = scmp.lt.s32.totalorder %s42, 1
          %s843 = scalar_select %p842, %s42, 1
          %s844 = scalar_lea.vmem %s20, %s843
        $region108: #{tpu_custom_call.1} parent=39 // pred_fallthru
          _
        // Predicated region
        $region109: #{tpu_custom_call.1} parent=39 // pred_check
          %p845 = pneg %p592
        $region110: #{tpu_custom_call.1} parent=39 // pred_check_branch
          %847 = sbr.rel (%p845) target = $region112
        $region111: #{tpu_custom_call.1} parent=39 // pred_region
          %p848 = scmp.lt.s32.totalorder %s42, 1
          %s849 = scalar_select %p848, %s42, 1
          %s850 = scalar_lea.vmem %s21, %s849
        $region112: #{tpu_custom_call.1} parent=39 // pred_fallthru
          _
        // Predicated region
        $region113: #{tpu_custom_call.1} parent=39 // pred_check
          %p851 = pneg %p618
        $region114: #{tpu_custom_call.1} parent=39 // pred_check_branch
          %853 = sbr.rel (%p851) target = $region116
        $region115: #{tpu_custom_call.1} parent=39 // pred_region
          %p854 = scmp.lt.s32.totalorder %s42, 1
          %s855 = scalar_select %p854, %s42, 1
          %s856 = scalar_lea.vmem %s22, %s855
        $region116: #{tpu_custom_call.1} parent=39 // pred_fallthru
          _
      $region40: #{tpu_custom_call.1} parent=5 // pred_fallthru
        _
      %p857 = scmp.le.s32.totalorder 1, %s34
      %p858 = scmp.lt.s32.totalorder %s34, 5
      %p859 = pnand %p857, %p858
      %p860 = pneg %p859
      // Predicated region
      $region117: #{tpu_custom_call.1} parent=5 // pred_check
        _
      $region118: #{tpu_custom_call.1} parent=5 // pred_check_branch
        %862 = sbr.rel (%p859) target = $region120
      $region119: #{tpu_custom_call.1} parent=5 // pred_region
        %s863 = ssub.s32 %s34, 1
        %p864 = scmp.lt.s32.totalorder %s43, 1
        %s865 = scalar_select %p864, %s43, 1
        %s866 = smul.addr %s865, 8
        %s867 = scalar_lea.vmem %s0, %s866
        %p868 = pneg %p72
        %p869 = pneg %p69
        %p870 = scmp.lt.s32.totalorder %s43, 1
        %s871 = scalar_select %p870, %s43, 1
        %s872 = scalar_lea.vmem %s1, %s871
        %p873 = pneg %p98
        %p874 = pneg %p95
        %p875 = scmp.lt.s32.totalorder %s43, 1
        %s876 = scalar_select %p875, %s43, 1
        %s877 = scalar_lea.vmem %s2, %s876
        %p878 = pneg %p124
        %p879 = pneg %p121
        %p880 = pneg %p145
        %p881 = pneg %p142
        %p882 = pneg %p166
        %p883 = pneg %p163
        %p884 = pneg %p187
        %p885 = pneg %p184
        %p886 = pneg %p208
        %p887 = pneg %p205
        %p888 = scmp.lt.s32.totalorder %s44, 1
        %s889 = scalar_select %p888, %s44, 1
        %s890 = smul.addr %s889, 4
        %s891 = smul.addr %s890, 4
        %s892 = scalar_lea.vmem %s7, %s891
        %p893 = pneg %p234
        %p894 = pneg %p231
        %p895 = scmp.lt.s32.totalorder %s44, 1
        %s896 = scalar_select %p895, %s44, 1
        %s897 = scalar_lea.vmem %s8, %s896
        %p898 = pneg %p260
        %p899 = pneg %p257
        %p900 = scmp.lt.s32.totalorder %s44, 1
        %s901 = scalar_select %p900, %s44, 1
        %s902 = smul.addr %s901, 4
        %s903 = smul.addr %s902, 4
        %s904 = scalar_lea.vmem %s9, %s903
        %p905 = pneg %p286
        %p906 = pneg %p283
        %p907 = scmp.lt.s32.totalorder %s44, 1
        %s908 = scalar_select %p907, %s44, 1
        %s909 = scalar_lea.vmem %s10, %s908
        %p910 = pneg %p312
        %p911 = pneg %p309
        %p912 = scmp.lt.s32.totalorder %s44, 1
        %s913 = scalar_select %p912, %s44, 1
        %s914 = smul.addr %s913, 4
        %s915 = smul.addr %s914, 4
        %s916 = scalar_lea.vmem %s11, %s915
        %p917 = pneg %p338
        %p918 = pneg %p335
        %p919 = scmp.lt.s32.totalorder %s44, 1
        %s920 = scalar_select %p919, %s44, 1
        %s921 = scalar_lea.vmem %s12, %s920
        %p922 = pneg %p364
        %p923 = pneg %p361
        %p924 = scmp.lt.s32.totalorder %s44, 1
        %s925 = scalar_select %p924, %s44, 1
        %s926 = smul.addr %s925, 4
        %s927 = smul.addr %s926, 4
        %s928 = scalar_lea.vmem %s13, %s927
        %p929 = pneg %p390
        %p930 = pneg %p387
        %p931 = scmp.lt.s32.totalorder %s44, 1
        %s932 = scalar_select %p931, %s44, 1
        %s933 = scalar_lea.vmem %s14, %s932
        %p934 = pneg %p416
        %p935 = pneg %p413
        %p936 = scmp.lt.s32.totalorder %s44, 1
        %s937 = scalar_select %p936, %s44, 1
        %s938 = scalar_lea.vmem %s15, %s937
        %p939 = pneg %p442
        %p940 = pneg %p439
        %p941 = scmp.lt.s32.totalorder %s44, 1
        %s942 = scalar_select %p941, %s44, 1
        %s943 = scalar_lea.vmem %s16, %s942
        %p944 = pneg %p468
        %p945 = pneg %p465
        %p946 = scmp.lt.s32.totalorder %s44, 1
        %s947 = scalar_select %p946, %s44, 1
        %s948 = smul.addr %s947, 64
        %s949 = smul.addr %s948, 4
        %s950 = scalar_lea.vmem %s17, %s949
        %p951 = pneg %p494
        %p952 = pneg %p491
        %p953 = scmp.lt.s32.totalorder %s44, 1
        %s954 = scalar_select %p953, %s44, 1
        %s955 = smul.addr %s954, 16
        %s956 = scalar_lea.vmem %s18, %s955
        %p957 = pneg %p520
        %p958 = pneg %p517
        %p959 = scmp.lt.s32.totalorder %s44, 1
        %s960 = scalar_select %p959, %s44, 1
        %s961 = smul.addr %s960, 256
        %s962 = smul.addr %s961, 4
        %s963 = scalar_lea.vmem %s19, %s962
        %p964 = pneg %p546
        %p965 = pneg %p543
        %p966 = scmp.lt.s32.totalorder %s44, 1
        %s967 = scalar_select %p966, %s44, 1
        %s968 = scalar_lea.vmem %s20, %s967
        %p969 = pneg %p572
        %p970 = pneg %p569
        %p971 = scmp.lt.s32.totalorder %s44, 1
        %s972 = scalar_select %p971, %s44, 1
        %s973 = scalar_lea.vmem %s21, %s972
        %p974 = pneg %p598
        %p975 = pneg %p595
        %p976 = scmp.lt.s32.totalorder %s44, 1
        %s977 = scalar_select %p976, %s44, 1
        %s978 = scalar_lea.vmem %s22, %s977
        %p979 = pneg %p624
        %p980 = pneg %p621
        %p981 = pneg %p645
        %p982 = pneg %p642
        %p983 = pneg %p666
        %p984 = pneg %p663
        %p985 = pneg %p692
        %p986 = pneg %p689
        %s987 = sand.u32 %s679, 1
        %s988 = scalar_lea.sflag [#allocation4], %s987
        %s989 = sand.u32 %s679, 1
        %s990 = scalar_lea.vmem [#allocation3], %s989
        %p991 = scmp.lt.s32.totalorder %s43, 1
        %s992 = scalar_select %p991, %s43, 1
        %s993 = smul.addr %s992, 8
        %s994 = scalar_lea.vmem %s0, %s993
        %p995 = scmp.lt.s32.totalorder %s43, 1
        %s996 = scalar_select %p995, %s43, 1
        %s997 = scalar_lea.vmem %s1, %s996
        %p998 = scmp.lt.s32.totalorder %s43, 1
        %s999 = scalar_select %p998, %s43, 1
        %s1000 = scalar_lea.vmem %s2, %s999
        %p1001 = scmp.lt.s32.totalorder %s44, 1
        %s1002 = scalar_select %p1001, %s44, 1
        %s1003 = smul.addr %s1002, 4
        %s1004 = smul.addr %s1003, 4
        %s1005 = scalar_lea.vmem %s7, %s1004
        %p1006 = scmp.lt.s32.totalorder %s44, 1
        %s1007 = scalar_select %p1006, %s44, 1
        %s1008 = scalar_lea.vmem %s8, %s1007
        %p1009 = scmp.lt.s32.totalorder %s44, 1
        %s1010 = scalar_select %p1009, %s44, 1
        %s1011 = smul.addr %s1010, 4
        %s1012 = smul.addr %s1011, 4
        %s1013 = scalar_lea.vmem %s9, %s1012
        %p1014 = scmp.lt.s32.totalorder %s44, 1
        %s1015 = scalar_select %p1014, %s44, 1
        %s1016 = scalar_lea.vmem %s10, %s1015
        %p1017 = scmp.lt.s32.totalorder %s44, 1
        %s1018 = scalar_select %p1017, %s44, 1
        %s1019 = smul.addr %s1018, 4
        %s1020 = smul.addr %s1019, 4
        %s1021 = scalar_lea.vmem %s11, %s1020
        %p1022 = scmp.lt.s32.totalorder %s44, 1
        %s1023 = scalar_select %p1022, %s44, 1
        %s1024 = scalar_lea.vmem %s12, %s1023
        %p1025 = scmp.lt.s32.totalorder %s44, 1
        %s1026 = scalar_select %p1025, %s44, 1
        %s1027 = smul.addr %s1026, 4
        %s1028 = smul.addr %s1027, 4
        %s1029 = scalar_lea.vmem %s13, %s1028
        %p1030 = scmp.lt.s32.totalorder %s44, 1
        %s1031 = scalar_select %p1030, %s44, 1
        %s1032 = scalar_lea.vmem %s14, %s1031
        %p1033 = scmp.lt.s32.totalorder %s44, 1
        %s1034 = scalar_select %p1033, %s44, 1
        %s1035 = scalar_lea.vmem %s15, %s1034
        %p1036 = scmp.lt.s32.totalorder %s44, 1
        %s1037 = scalar_select %p1036, %s44, 1
        %s1038 = scalar_lea.vmem %s16, %s1037
        %p1039 = scmp.lt.s32.totalorder %s44, 1
        %s1040 = scalar_select %p1039, %s44, 1
        %s1041 = smul.addr %s1040, 64
        %s1042 = smul.addr %s1041, 4
        %s1043 = scalar_lea.vmem %s17, %s1042
        %p1044 = scmp.lt.s32.totalorder %s44, 1
        %s1045 = scalar_select %p1044, %s44, 1
        %s1046 = smul.addr %s1045, 16
        %s1047 = scalar_lea.vmem %s18, %s1046
        %p1048 = scmp.lt.s32.totalorder %s44, 1
        %s1049 = scalar_select %p1048, %s44, 1
        %s1050 = smul.addr %s1049, 256
        %s1051 = smul.addr %s1050, 4
        %s1052 = scalar_lea.vmem %s19, %s1051
        %p1053 = scmp.lt.s32.totalorder %s44, 1
        %s1054 = scalar_select %p1053, %s44, 1
        %s1055 = scalar_lea.vmem %s20, %s1054
        %p1056 = scmp.lt.s32.totalorder %s44, 1
        %s1057 = scalar_select %p1056, %s44, 1
        %s1058 = scalar_lea.vmem %s21, %s1057
        %p1059 = scmp.lt.s32.totalorder %s44, 1
        %s1060 = scalar_select %p1059, %s44, 1
        %s1061 = scalar_lea.vmem %s22, %s1060
        %p1063 = scmp.eq.s32.totalorder %s44, 0
        // Predicated region
        $region121: #{tpu_custom_call.1} parent=119 // pred_check
          %p1064 = pneg %p1063
        $region122: #{tpu_custom_call.1} parent=119 // pred_check_branch
          %1066 = sbr.rel (%p1064) target = $region124
        $region123: #{tpu_custom_call.1} parent=119 // pred_region
          %v1067 = vld [vmem:[%s994] sm:$0xff]
          %v1068 = vpack.c.bf16 %v1067, %v1067
          %v1069 = vld [vmem:[%s3] sm:$0xf]
          %v1070 = vld [vmem:[%s3 + $0x4] sm:$0xf]
          %v1071 = vld [vmem:[%s3 + $0x8] sm:$0xf]
          %v1072 = vld [vmem:[%s3 + $0xc] sm:$0xf]
          %v1073 = vld [vmem:[%s3 + $0x10] sm:$0xf]
          %v1074 = vld [vmem:[%s3 + $0x14] sm:$0xf]
          %v1075 = vld [vmem:[%s3 + $0x18] sm:$0xf]
          %v1076 = vld [vmem:[%s3 + $0x1c] sm:$0xf]
          %v1077 = vld [vmem:[%s3 + $0x20] sm:$0xf]
          %v1078 = vld [vmem:[%s3 + $0x24] sm:$0xf]
          %v1079 = vld [vmem:[%s3 + $0x28] sm:$0xf]
          %v1080 = vld [vmem:[%s3 + $0x2c] sm:$0xf]
          %v1081 = vld [vmem:[%s3 + $0x30] sm:$0xf]
          %v1082 = vld [vmem:[%s3 + $0x34] sm:$0xf]
          %v1083 = vld [vmem:[%s3 + $0x38] sm:$0xf]
          %v1084 = vld [vmem:[%s3 + $0x3c] sm:$0xf]
          %v1085 = vld [vmem:[%s4] sm:$0x1]
          %v1087 = vperm.slane %v1085, 0
          %v1105 = vunpack.c.l.b16 %v1069
          %v1106 = vunpack.c.l.b16 %v1070
          %v1107 = vunpack.c.l.b16 %v1071
          %v1108 = vunpack.c.l.b16 %v1072
          %v1109 = vunpack.c.l.b16 %v1073
          %v1110 = vunpack.c.l.b16 %v1074
          %v1111 = vunpack.c.l.b16 %v1075
          %v1112 = vunpack.c.l.b16 %v1076
          %v1113 = vunpack.c.l.b16 %v1077
          %v1114 = vunpack.c.l.b16 %v1078
          %v1115 = vunpack.c.l.b16 %v1079
          %v1116 = vunpack.c.l.b16 %v1080
          %v1117 = vunpack.c.l.b16 %v1081
          %v1118 = vunpack.c.l.b16 %v1082
          %v1119 = vunpack.c.l.b16 %v1083
          %v1120 = vunpack.c.l.b16 %v1084
          %v1121 = vpack.c.b16 %v1106, %v1105
          %v1122 = vpack.c.b16 %v1108, %v1107
          %v1123 = vpack.c.b16 %v1110, %v1109
          %v1124 = vpack.c.b16 %v1112, %v1111
          %v1125 = vpack.c.b16 %v1114, %v1113
          %v1126 = vpack.c.b16 %v1116, %v1115
          %v1127 = vpack.c.b16 %v1118, %v1117
          %v1128 = vpack.c.b16 %v1120, %v1119
          %1137 = vmatpush.bf16.msra.mxu0 %v1128
          %1138 = vmatpush.bf16.msra.mxu0 %v1127
          %1139 = vmatpush.bf16.msra.mxu0 %v1126
          %1140 = vmatpush.bf16.msra.mxu0 %v1125
          %1141 = vmatpush.bf16.msra.mxu0 %v1124
          %1142 = vmatpush.bf16.msra.mxu0 %v1123
          %1143 = vmatpush.bf16.msra.mxu0 %v1122
          %1144 = vmatpush.bf16.msra.mxu0 %v1121
          %1145 = vmatmul.bf16.gmra.mxu0 %v1068
          %v1146 = vpop.f32.mrf.mxu0
          %v1147 = vadd.f32 %v1087, %v1146
          %v1148 = vpop.f32.mrf.mxu0
          %1149 = vdwg.mxu0
          %v1150 = vld [vmem:[%s997] sm:$0x1]
          %v1151 = vpack.c.bf16 %v1150, %v1150
          %v1152 = vld [vmem:[%s5] sm:$0xf]
          %v1153 = vld [vmem:[%s5 + $0x4] sm:$0xf]
          %v1154 = vld [vmem:[%s5 + $0x8] sm:$0xf]
          %v1155 = vld [vmem:[%s5 + $0xc] sm:$0xf]
          %v1156 = vld [vmem:[%s5 + $0x10] sm:$0xf]
          %v1157 = vld [vmem:[%s5 + $0x14] sm:$0xf]
          %v1158 = vld [vmem:[%s5 + $0x18] sm:$0xf]
          %v1159 = vld [vmem:[%s5 + $0x1c] sm:$0xf]
          %v1160 = vld [vmem:[%s5 + $0x20] sm:$0xf]
          %v1161 = vld [vmem:[%s5 + $0x24] sm:$0xf]
          %v1162 = vld [vmem:[%s5 + $0x28] sm:$0xf]
          %v1163 = vld [vmem:[%s5 + $0x2c] sm:$0xf]
          %v1164 = vld [vmem:[%s5 + $0x30] sm:$0xf]
          %v1165 = vld [vmem:[%s5 + $0x34] sm:$0xf]
          %v1166 = vld [vmem:[%s5 + $0x38] sm:$0xf]
          %v1167 = vld [vmem:[%s5 + $0x3c] sm:$0xf]
          %v1168 = vld [vmem:[%s6] sm:$0x1]
          %v1185 = vunpack.c.l.b16 %v1152
          %v1186 = vunpack.c.l.b16 %v1153
          %v1187 = vunpack.c.l.b16 %v1154
          %v1188 = vunpack.c.l.b16 %v1155
          %v1189 = vunpack.c.l.b16 %v1156
          %v1190 = vunpack.c.l.b16 %v1157
          %v1191 = vunpack.c.l.b16 %v1158
          %v1192 = vunpack.c.l.b16 %v1159
          %v1193 = vunpack.c.l.b16 %v1160
          %v1194 = vunpack.c.l.b16 %v1161
          %v1195 = vunpack.c.l.b16 %v1162
          %v1196 = vunpack.c.l.b16 %v1163
          %v1197 = vunpack.c.l.b16 %v1164
          %v1198 = vunpack.c.l.b16 %v1165
          %v1199 = vunpack.c.l.b16 %v1166
          %v1200 = vunpack.c.l.b16 %v1167
          %v1201 = vpack.c.b16 %v1186, %v1185
          %v1202 = vpack.c.b16 %v1188, %v1187
          %v1203 = vpack.c.b16 %v1190, %v1189
          %v1204 = vpack.c.b16 %v1192, %v1191
          %v1205 = vpack.c.b16 %v1194, %v1193
          %v1206 = vpack.c.b16 %v1196, %v1195
          %v1207 = vpack.c.b16 %v1198, %v1197
          %v1208 = vpack.c.b16 %v1200, %v1199
          %1217 = vmatpush.bf16.msra.mxu0 %v1208
          %1218 = vmatpush.bf16.msra.mxu0 %v1207
          %1219 = vmatpush.bf16.msra.mxu0 %v1206
          %1220 = vmatpush.bf16.msra.mxu0 %v1205
          %1221 = vmatpush.bf16.msra.mxu0 %v1204
          %1222 = vmatpush.bf16.msra.mxu0 %v1203
          %1223 = vmatpush.bf16.msra.mxu0 %v1202
          %1224 = vmatpush.bf16.msra.mxu0 %v1201
          %1225 = vmatmul.bf16.gmra.mxu0 %v1151
          %v1226 = vpop.f32.mrf.mxu0
          %v1227 = vadd.f32 %v1168, %v1226
          %v1228 = vpop.f32.mrf.mxu0
          %1229 = vdwg.mxu0
          %v1230 = vperm.slane %v1227, 0
          %v1231 = vadd.f32 %v1147, %v1230
          %v1232 = vld [vmem:[%s1000] sm:$0x1]
          %v1234 = vperm.slane %v1232, 0
          %v1236 = vadd.f32 %v1231, %v1234
          %v1237 = vtanh.pop %v1236
          %vm1238 = vcmask 261120
          %1239 = vst.msk [vmem:[#allocation2] sm:$0xff] %vm1238, %v1237
        $region124: #{tpu_custom_call.1} parent=119 // pred_fallthru
          _
        %v1240 = vld [vmem:[#allocation2] sm:$0xff]
        %v1241 = vpack.c.bf16 %v1240, %v1240
        %v1242 = vld [vmem:[%s1005] sm:$0xf]
        %v1243 = vld [vmem:[%s1005 + $0x4] sm:$0xf]
        %v1244 = vld [vmem:[%s1005 + $0x8] sm:$0xf]
        %v1245 = vld [vmem:[%s1005 + $0xc] sm:$0xf]
        %v1246 = vld [vmem:[%s1008] sm:$0x1]
        %v1248 = vperm.slane %v1246, 0
        %v1254 = vunpack.c.l.b16 %v1242
        %v1255 = vunpack.c.l.b16 %v1243
        %v1256 = vunpack.c.l.b16 %v1244
        %v1257 = vunpack.c.l.b16 %v1245
        %v1258 = vpack.c.b16 %v1255, %v1254
        %v1259 = vpack.c.b16 %v1257, %v1256
        %vm1262 = vcmask 261120
        %v1264 = vsel %vm1262, %v1241, 0
        %1266 = vmatpush.bf16.msra.mxu0 0
        %1267 = vmatpush.bf16.msra.mxu0 0
        %1268 = vmatpush.bf16.msra.mxu0 0
        %1269 = vmatpush.bf16.msra.mxu0 0
        %1270 = vmatpush.bf16.msra.mxu0 0
        %1271 = vmatpush.bf16.msra.mxu0 0
        %1272 = vmatpush.bf16.msra.mxu0 %v1259
        %1273 = vmatpush.bf16.msra.mxu0 %v1258
        %1274 = vmatmul.bf16.gmra.mxu0 %v1264
        %v1275 = vpop.f32.mrf.mxu0
        %v1276 = vadd.f32 %v1248, %v1275
        %v1277 = vpop.f32.mrf.mxu0
        %1278 = vdwg.mxu0
        %v1279 = vmul.f32 %v1276, 0.35355338
        %v1280 = vld [vmem:[%s1013] sm:$0xf]
        %v1281 = vld [vmem:[%s1013 + $0x4] sm:$0xf]
        %v1282 = vld [vmem:[%s1013 + $0x8] sm:$0xf]
        %v1283 = vld [vmem:[%s1013 + $0xc] sm:$0xf]
        %v1284 = vld [vmem:[%s1016] sm:$0x1]
        %v1286 = vperm.slane %v1284, 0
        %v1292 = vunpack.c.l.b16 %v1280
        %v1293 = vunpack.c.l.b16 %v1281
        %v1294 = vunpack.c.l.b16 %v1282
        %v1295 = vunpack.c.l.b16 %v1283
        %v1296 = vpack.c.b16 %v1293, %v1292
        %v1297 = vpack.c.b16 %v1295, %v1294
        %1300 = vmatpush.bf16.msra.mxu0 0
        %1301 = vmatpush.bf16.msra.mxu0 0
        %1302 = vmatpush.bf16.msra.mxu0 0
        %1303 = vmatpush.bf16.msra.mxu0 0
        %1304 = vmatpush.bf16.msra.mxu0 0
        %1305 = vmatpush.bf16.msra.mxu0 0
        %1306 = vmatpush.bf16.msra.mxu0 %v1297
        %1307 = vmatpush.bf16.msra.mxu0 %v1296
        %1308 = vmatmul.bf16.gmra.mxu0 %v1264
        %v1309 = vpop.f32.mrf.mxu0
        %v1310 = vadd.f32 %v1286, %v1309
        %v1311 = vpop.f32.mrf.mxu0
        %1312 = vdwg.mxu0
        %v1313 = vld [vmem:[%s1021] sm:$0xf]
        %v1314 = vld [vmem:[%s1021 + $0x4] sm:$0xf]
        %v1315 = vld [vmem:[%s1021 + $0x8] sm:$0xf]
        %v1316 = vld [vmem:[%s1021 + $0xc] sm:$0xf]
        %v1317 = vld [vmem:[%s1024] sm:$0x1]
        %v1319 = vperm.slane %v1317, 0
        %v1325 = vunpack.c.l.b16 %v1313
        %v1326 = vunpack.c.l.b16 %v1314
        %v1327 = vunpack.c.l.b16 %v1315
        %v1328 = vunpack.c.l.b16 %v1316
        %v1329 = vpack.c.b16 %v1326, %v1325
        %v1330 = vpack.c.b16 %v1328, %v1327
        %1333 = vmatpush.bf16.msra.mxu0 0
        %1334 = vmatpush.bf16.msra.mxu0 0
        %1335 = vmatpush.bf16.msra.mxu0 0
        %1336 = vmatpush.bf16.msra.mxu0 0
        %1337 = vmatpush.bf16.msra.mxu0 0
        %1338 = vmatpush.bf16.msra.mxu0 0
        %1339 = vmatpush.bf16.msra.mxu0 %v1330
        %1340 = vmatpush.bf16.msra.mxu0 %v1329
        %1341 = vmatmul.bf16.gmra.mxu0 %v1264
        %v1342 = vpop.f32.mrf.mxu0
        %v1343 = vadd.f32 %v1319, %v1342
        %v1344 = vpop.f32.mrf.mxu0
        %1345 = vdwg.mxu0
        %v1346 = vld [vmem:[%s1029] sm:$0xf]
        %v1347 = vld [vmem:[%s1029 + $0x4] sm:$0xf]
        %v1348 = vld [vmem:[%s1029 + $0x8] sm:$0xf]
        %v1349 = vld [vmem:[%s1029 + $0xc] sm:$0xf]
        %v1350 = vpack.c.bf16 %v1279, %v1279
        %v1351 = vpack.c.bf16 %v1310, %v1310
        %v1352 = vpack.c.bf16 %v1343, %v1343
        %vm1353 = vcmask 64512
        %v1355 = vsel %vm1353, %v1350, 0
        %v1358 = vsel %vm1353, %v1351, 0
        %1360 = vmatpush.bf16.xpose.msra.mxu0 0
        %1361 = vmatpush.bf16.xpose.msra.mxu0 0
        %1362 = vmatpush.bf16.xpose.msra.mxu0 0
        %1363 = vmatpush.bf16.xpose.msra.mxu0 0
        %1364 = vmatpush.bf16.xpose.msra.mxu0 0
        %1365 = vmatpush.bf16.xpose.msra.mxu0 0
        %1366 = vmatpush.bf16.xpose.msra.mxu0 0
        %1367 = vmatpush.bf16.xpose.msra.mxu0 %v1358
        %1368 = vmatmul.bf16.gmra.mxu0 %v1355
        %v1369 = vpop.f32.mrf.mxu0
        %v1370 = vadd.f32 0.0, %v1369
        %v1371 = vpop.f32.mrf.mxu0
        %1372 = vdwg.mxu0
        %v1373 = vsel %vm1353, %v1370, -inf
        %1374 = vmax.xlane.f32.xlu0 %v1373
        %v1375 = vpop.xlane.xlu0 %1374
        %v1376 = vsub.f32 %v1370, %v1375
        %v1377 = vmul.f32 %v1376, 1.442695
        %v1378 = vpow.pop %v1377
        %v1379 = vsel %vm1353, %v1378, 0.0
        %1380 = vadd.xlane.f32.xlu0 %v1379
        %v1381 = vpop.xlane.xlu0 %1380
        %v1382 = vrcp.pop %v1381
        %v1383 = vpack.c.bf16 %v1378, %v1378
        %v1385 = vsel %vm1353, %v1383, 0
        %vm1387 = vcmask 1043456
        %v1389 = vsel %vm1387, %v1352, 0
        %1391 = vmatpush.bf16.msra.mxu0 0
        %1392 = vmatpush.bf16.msra.mxu0 0
        %1393 = vmatpush.bf16.msra.mxu0 0
        %1394 = vmatpush.bf16.msra.mxu0 0
        %1395 = vmatpush.bf16.msra.mxu0 0
        %1396 = vmatpush.bf16.msra.mxu0 0
        %1397 = vmatpush.bf16.msra.mxu0 0
        %1398 = vmatpush.bf16.msra.mxu0 %v1389
        %1399 = vmatmul.bf16.gmra.mxu0 %v1385
        %v1400 = vpop.f32.mrf.mxu0
        %v1401 = vadd.f32 0.0, %v1400
        %v1402 = vpop.f32.mrf.mxu0
        %1403 = vdwg.mxu0
        %v1404 = vmul.f32 %v1401, %v1382
        %v1405 = vpack.c.bf16 %v1404, %v1404
        %v1407 = vunpack.c.l.b16 %v1350
        %v1408 = vpack.c.b16 %v1407, %v1407
        %1409 = vrot.lane.b32.xlu0 %v1408, 120
        %v1410 = vpop.permute.xlu0 %1409
        %v1412 = vunpack.c.l.b16 %v1351
        %v1413 = vpack.c.b16 %v1412, %v1412
        %1414 = vrot.lane.b32.xlu0 %v1413, 120
        %v1415 = vpop.permute.xlu0 %1414
        %v1417 = vsel %vm1353, %v1410, 0
        %v1420 = vsel %vm1353, %v1415, 0
        %1422 = vmatpush.bf16.xpose.msra.mxu0 0
        %1423 = vmatpush.bf16.xpose.msra.mxu0 0
        %1424 = vmatpush.bf16.xpose.msra.mxu0 0
        %1425 = vmatpush.bf16.xpose.msra.mxu0 0
        %1426 = vmatpush.bf16.xpose.msra.mxu0 0
        %1427 = vmatpush.bf16.xpose.msra.mxu0 0
        %1428 = vmatpush.bf16.xpose.msra.mxu0 0
        %1429 = vmatpush.bf16.xpose.msra.mxu0 %v1420
        %1430 = vmatmul.bf16.gmra.mxu0 %v1417
        %v1431 = vpop.f32.mrf.mxu0
        %v1432 = vadd.f32 0.0, %v1431
        %v1433 = vpop.f32.mrf.mxu0
        %1434 = vdwg.mxu0
        %v1435 = vsel %vm1353, %v1432, -inf
        %1436 = vmax.xlane.f32.xlu0 %v1435
        %v1437 = vpop.xlane.xlu0 %1436
        %v1438 = vsub.f32 %v1432, %v1437
        %v1439 = vmul.f32 %v1438, 1.442695
        %v1440 = vpow.pop %v1439
        %v1441 = vsel %vm1353, %v1440, 0.0
        %1442 = vadd.xlane.f32.xlu0 %v1441
        %v1443 = vpop.xlane.xlu0 %1442
        %v1444 = vrcp.pop %v1443
        %v1445 = vpack.c.bf16 %v1440, %v1440
        %v1447 = vunpack.c.l.b16 %v1352
        %v1448 = vpack.c.b16 %v1447, %v1447
        %1449 = vrot.lane.b32.xlu0 %v1448, 120
        %v1450 = vpop.permute.xlu0 %1449
        %v1452 = vsel %vm1353, %v1445, 0
        %v1455 = vsel %vm1387, %v1450, 0
        %1457 = vmatpush.bf16.msra.mxu0 0
        %1458 = vmatpush.bf16.msra.mxu0 0
        %1459 = vmatpush.bf16.msra.mxu0 0
        %1460 = vmatpush.bf16.msra.mxu0 0
        %1461 = vmatpush.bf16.msra.mxu0 0
        %1462 = vmatpush.bf16.msra.mxu0 0
        %1463 = vmatpush.bf16.msra.mxu0 0
        %1464 = vmatpush.bf16.msra.mxu0 %v1455
        %1465 = vmatmul.bf16.gmra.mxu0 %v1452
        %v1466 = vpop.f32.mrf.mxu0
        %v1467 = vadd.f32 0.0, %v1466
        %v1468 = vpop.f32.mrf.mxu0
        %1469 = vdwg.mxu0
        %v1470 = vmul.f32 %v1467, %v1444
        %v1471 = vpack.c.bf16 %v1470, %v1470
        %v1473 = vsel %vm1353, %v1471, 0
        %v1476 = vsel %vm1387, %v1347, 0
        %1478 = vmatpush.bf16.msra.mxu0 0
        %1479 = vmatpush.bf16.msra.mxu0 0
        %1480 = vmatpush.bf16.msra.mxu0 0
        %1481 = vmatpush.bf16.msra.mxu0 0
        %1482 = vmatpush.bf16.msra.mxu0 0
        %1483 = vmatpush.bf16.msra.mxu0 0
        %1484 = vmatpush.bf16.msra.mxu0 0
        %1485 = vmatpush.bf16.msra.mxu0 %v1476
        %1486 = vmatmul.bf16.gmra.mxu0 %v1473
        %v1487 = vpop.f32.mrf.mxu0
        %v1488 = vadd.f32 0.0, %v1487
        %v1489 = vpop.f32.mrf.mxu0
        %1490 = vdwg.mxu0
        %v1492 = vsel %vm1353, %v1405, 0
        %v1495 = vsel %vm1387, %v1346, 0
        %1497 = vmatpush.bf16.msra.mxu0 0
        %1498 = vmatpush.bf16.msra.mxu0 0
        %1499 = vmatpush.bf16.msra.mxu0 0
        %1500 = vmatpush.bf16.msra.mxu0 0
        %1501 = vmatpush.bf16.msra.mxu0 0
        %1502 = vmatpush.bf16.msra.mxu0 0
        %1503 = vmatpush.bf16.msra.mxu0 0
        %1504 = vmatpush.bf16.msra.mxu0 %v1495
        %1505 = vmatmul.bf16.gmra.mxu0 %v1492
        %v1506 = vpop.f32.mrf.mxu0
        %v1507 = vadd.f32 %v1488, %v1506
        %v1508 = vpop.f32.mrf.mxu0
        %1509 = vdwg.mxu0
        %1510 = vrot.lane.b32.xlu0 %v1408, 112
        %v1511 = vpop.permute.xlu0 %1510
        %1512 = vrot.lane.b32.xlu0 %v1413, 112
        %v1513 = vpop.permute.xlu0 %1512
        %v1515 = vsel %vm1353, %v1511, 0
        %v1518 = vsel %vm1353, %v1513, 0
        %1520 = vmatpush.bf16.xpose.msra.mxu0 0
        %1521 = vmatpush.bf16.xpose.msra.mxu0 0
        %1522 = vmatpush.bf16.xpose.msra.mxu0 0
        %1523 = vmatpush.bf16.xpose.msra.mxu0 0
        %1524 = vmatpush.bf16.xpose.msra.mxu0 0
        %1525 = vmatpush.bf16.xpose.msra.mxu0 0
        %1526 = vmatpush.bf16.xpose.msra.mxu0 0
        %1527 = vmatpush.bf16.xpose.msra.mxu0 %v1518
        %1528 = vmatmul.bf16.gmra.mxu0 %v1515
        %v1529 = vpop.f32.mrf.mxu0
        %v1530 = vadd.f32 0.0, %v1529
        %v1531 = vpop.f32.mrf.mxu0
        %1532 = vdwg.mxu0
        %v1533 = vsel %vm1353, %v1530, -inf
        %1534 = vmax.xlane.f32.xlu0 %v1533
        %v1535 = vpop.xlane.xlu0 %1534
        %v1536 = vsub.f32 %v1530, %v1535
        %v1537 = vmul.f32 %v1536, 1.442695
        %v1538 = vpow.pop %v1537
        %v1539 = vsel %vm1353, %v1538, 0.0
        %1540 = vadd.xlane.f32.xlu0 %v1539
        %v1541 = vpop.xlane.xlu0 %1540
        %v1542 = vrcp.pop %v1541
        %v1543 = vpack.c.bf16 %v1538, %v1538
        %1544 = vrot.lane.b32.xlu0 %v1448, 112
        %v1545 = vpop.permute.xlu0 %1544
        %v1547 = vsel %vm1353, %v1543, 0
        %v1550 = vsel %vm1387, %v1545, 0
        %1552 = vmatpush.bf16.msra.mxu0 0
        %1553 = vmatpush.bf16.msra.mxu0 0
        %1554 = vmatpush.bf16.msra.mxu0 0
        %1555 = vmatpush.bf16.msra.mxu0 0
        %1556 = vmatpush.bf16.msra.mxu0 0
        %1557 = vmatpush.bf16.msra.mxu0 0
        %1558 = vmatpush.bf16.msra.mxu0 0
        %1559 = vmatpush.bf16.msra.mxu0 %v1550
        %1560 = vmatmul.bf16.gmra.mxu0 %v1547
        %v1561 = vpop.f32.mrf.mxu0
        %v1562 = vadd.f32 0.0, %v1561
        %v1563 = vpop.f32.mrf.mxu0
        %1564 = vdwg.mxu0
        %v1565 = vmul.f32 %v1562, %v1542
        %v1566 = vpack.c.bf16 %v1565, %v1565
        %v1568 = vsel %vm1353, %v1566, 0
        %v1571 = vsel %vm1387, %v1348, 0
        %1573 = vmatpush.bf16.msra.mxu0 0
        %1574 = vmatpush.bf16.msra.mxu0 0
        %1575 = vmatpush.bf16.msra.mxu0 0
        %1576 = vmatpush.bf16.msra.mxu0 0
        %1577 = vmatpush.bf16.msra.mxu0 0
        %1578 = vmatpush.bf16.msra.mxu0 0
        %1579 = vmatpush.bf16.msra.mxu0 0
        %1580 = vmatpush.bf16.msra.mxu0 %v1571
        %1581 = vmatmul.bf16.gmra.mxu0 %v1568
        %v1582 = vpop.f32.mrf.mxu0
        %v1583 = vadd.f32 0.0, %v1582
        %v1584 = vpop.f32.mrf.mxu0
        %1585 = vdwg.mxu0
        %v1586 = vadd.f32 %v1507, %v1583
        %1587 = vrot.lane.b32.xlu0 %v1408, 104
        %v1588 = vpop.permute.xlu0 %1587
        %1589 = vrot.lane.b32.xlu0 %v1413, 104
        %v1590 = vpop.permute.xlu0 %1589
        %v1592 = vsel %vm1353, %v1588, 0
        %v1595 = vsel %vm1353, %v1590, 0
        %1597 = vmatpush.bf16.xpose.msra.mxu0 0
        %1598 = vmatpush.bf16.xpose.msra.mxu0 0
        %1599 = vmatpush.bf16.xpose.msra.mxu0 0
        %1600 = vmatpush.bf16.xpose.msra.mxu0 0
        %1601 = vmatpush.bf16.xpose.msra.mxu0 0
        %1602 = vmatpush.bf16.xpose.msra.mxu0 0
        %1603 = vmatpush.bf16.xpose.msra.mxu0 0
        %1604 = vmatpush.bf16.xpose.msra.mxu0 %v1595
        %1605 = vmatmul.bf16.gmra.mxu0 %v1592
        %v1606 = vpop.f32.mrf.mxu0
        %v1607 = vadd.f32 0.0, %v1606
        %v1608 = vpop.f32.mrf.mxu0
        %1609 = vdwg.mxu0
        %v1610 = vsel %vm1353, %v1607, -inf
        %1611 = vmax.xlane.f32.xlu0 %v1610
        %v1612 = vpop.xlane.xlu0 %1611
        %v1613 = vsub.f32 %v1607, %v1612
        %v1614 = vmul.f32 %v1613, 1.442695
        %v1615 = vpow.pop %v1614
        %v1616 = vsel %vm1353, %v1615, 0.0
        %1617 = vadd.xlane.f32.xlu0 %v1616
        %v1618 = vpop.xlane.xlu0 %1617
        %v1619 = vrcp.pop %v1618
        %v1620 = vpack.c.bf16 %v1615, %v1615
        %1621 = vrot.lane.b32.xlu0 %v1448, 104
        %v1622 = vpop.permute.xlu0 %1621
        %v1624 = vsel %vm1353, %v1620, 0
        %v1627 = vsel %vm1387, %v1622, 0
        %1629 = vmatpush.bf16.msra.mxu0 0
        %1630 = vmatpush.bf16.msra.mxu0 0
        %1631 = vmatpush.bf16.msra.mxu0 0
        %1632 = vmatpush.bf16.msra.mxu0 0
        %1633 = vmatpush.bf16.msra.mxu0 0
        %1634 = vmatpush.bf16.msra.mxu0 0
        %1635 = vmatpush.bf16.msra.mxu0 0
        %1636 = vmatpush.bf16.msra.mxu0 %v1627
        %1637 = vmatmul.bf16.gmra.mxu0 %v1624
        %v1638 = vpop.f32.mrf.mxu0
        %v1639 = vadd.f32 0.0, %v1638
        %v1640 = vpop.f32.mrf.mxu0
        %1641 = vdwg.mxu0
        %v1642 = vmul.f32 %v1639, %v1619
        %v1643 = vpack.c.bf16 %v1642, %v1642
        %v1645 = vsel %vm1353, %v1643, 0
        %v1648 = vsel %vm1387, %v1349, 0
        %1650 = vmatpush.bf16.msra.mxu0 0
        %1651 = vmatpush.bf16.msra.mxu0 0
        %1652 = vmatpush.bf16.msra.mxu0 0
        %1653 = vmatpush.bf16.msra.mxu0 0
        %1654 = vmatpush.bf16.msra.mxu0 0
        %1655 = vmatpush.bf16.msra.mxu0 0
        %1656 = vmatpush.bf16.msra.mxu0 0
        %1657 = vmatpush.bf16.msra.mxu0 %v1648
        %1658 = vmatmul.bf16.gmra.mxu0 %v1645
        %v1659 = vpop.f32.mrf.mxu0
        %v1660 = vadd.f32 0.0, %v1659
        %v1661 = vpop.f32.mrf.mxu0
        %1662 = vdwg.mxu0
        %v1663 = vadd.f32 %v1586, %v1660
        %v1664 = vld [vmem:[%s1032] sm:$0x1]
        %v1666 = vperm.slane %v1664, 0
        %v1668 = vadd.f32 %v1663, %v1666
        %v1669 = vadd.f32 %v1240, %v1668
        %v1670 = vld [vmem:[%s1035] sm:$0x1]
        %v1671 = vld [vmem:[%s1038] sm:$0x1]
        %v1672 = vsel %vm1262, %v1669, 0.0
        %1673 = vadd.xlane.f32.xlu0 %v1672
        %v1674 = vpop.xlane.xlu0 %1673
        %v1675 = vrcp.pop 32.0
        %v1676 = vmul.f32 32.0, %v1675
        %v1677 = vsub.f32 1.0, %v1676
        %v1678 = vmul.f32 %v1675, %v1677
        %v1679 = vadd.f32 %v1675, %v1678
        %vm1680 = vweird.f32 %v1675
        %v1681 = vsel %vm1680, %v1675, %v1679
        %v1682 = vmul.f32 %v1674, %v1681
        %v1683 = vsub.f32 %v1669, %v1682
        %v1684 = vmul.f32 %v1683, %v1683
        %v1685 = vsel %vm1262, %v1684, 0.0
        %1686 = vadd.xlane.f32.xlu0 %v1685
        %v1687 = vpop.xlane.xlu0 %1686
        %v1688 = vmul.f32 %v1687, %v1681
        %v1689 = vadd.f32 %v1688, 1e-05
        %v1690 = vrsqrt.pop %v1689
        %v1691 = vmul.f32 %v1690, %v1689
        %v1692 = vmul.f32 %v1691, %v1690
        %v1693 = vmul.f32 0.5, %v1692
        %v1694 = vsub.f32 1.5, %v1693
        %v1695 = vmul.f32 %v1690, %v1694
        %vm1696 = vweird.f32 %v1689
        %vm1697 = vweird.f32 %v1690
        %vm1698 = vmor %vm1696, %vm1697
        %v1699 = vsel %vm1698, %v1690, %v1695
        %v1700 = vmul.f32 %v1683, %v1699
        %v1702 = vperm.slane %v1670, 0
        %v1704 = vmul.f32 %v1700, %v1702
        %v1706 = vperm.slane %v1671, 0
        %v1708 = vadd.f32 %v1704, %v1706
        %v1709 = vpack.c.bf16 %v1708, %v1708
        %v1710 = vld [vmem:[%s1043] sm:$0xff]
        %v1711 = vld [vmem:[%s1043 + $0x8] sm:$0xff]
        %v1712 = vld [vmem:[%s1043 + $0x10] sm:$0xff]
        %v1713 = vld [vmem:[%s1043 + $0x18] sm:$0xff]
        %v1714 = vld [vmem:[%s1043 + $0x20] sm:$0xff]
        %v1715 = vld [vmem:[%s1043 + $0x28] sm:$0xff]
        %v1716 = vld [vmem:[%s1043 + $0x30] sm:$0xff]
        %v1717 = vld [vmem:[%s1043 + $0x38] sm:$0xff]
        %v1718 = vld [vmem:[%s1043 + $0x40] sm:$0xff]
        %v1719 = vld [vmem:[%s1043 + $0x48] sm:$0xff]
        %v1720 = vld [vmem:[%s1043 + $0x50] sm:$0xff]
        %v1721 = vld [vmem:[%s1043 + $0x58] sm:$0xff]
        %v1722 = vld [vmem:[%s1043 + $0x60] sm:$0xff]
        %v1723 = vld [vmem:[%s1043 + $0x68] sm:$0xff]
        %v1724 = vld [vmem:[%s1043 + $0x70] sm:$0xff]
        %v1725 = vld [vmem:[%s1043 + $0x78] sm:$0xff]
        %v1726 = vld [vmem:[%s1043 + $0x80] sm:$0xff]
        %v1727 = vld [vmem:[%s1043 + $0x88] sm:$0xff]
        %v1728 = vld [vmem:[%s1043 + $0x90] sm:$0xff]
        %v1729 = vld [vmem:[%s1043 + $0x98] sm:$0xff]
        %v1730 = vld [vmem:[%s1043 + $0xa0] sm:$0xff]
        %v1731 = vld [vmem:[%s1043 + $0xa8] sm:$0xff]
        %v1732 = vld [vmem:[%s1043 + $0xb0] sm:$0xff]
        %v1733 = vld [vmem:[%s1043 + $0xb8] sm:$0xff]
        %v1734 = vld [vmem:[%s1043 + $0xc0] sm:$0xff]
        %v1735 = vld [vmem:[%s1043 + $0xc8] sm:$0xff]
        %v1736 = vld [vmem:[%s1043 + $0xd0] sm:$0xff]
        %v1737 = vld [vmem:[%s1043 + $0xd8] sm:$0xff]
        %v1738 = vld [vmem:[%s1043 + $0xe0] sm:$0xff]
        %v1739 = vld [vmem:[%s1043 + $0xe8] sm:$0xff]
        %v1740 = vld [vmem:[%s1043 + $0xf0] sm:$0xff]
        %v1741 = vld [vmem:[%s1043 + $0xf8] sm:$0xff]
        %v1742 = vld [vmem:[%s1047] sm:$0xff]
        %v1743 = vld [vmem:[%s1047 + $0x8] sm:$0xff]
        %v1746 = vperm.slane %v1742, 0
        %v1747 = vperm.slane %v1742, 1
        %v1748 = vperm.slane %v1742, 2
        %v1749 = vperm.slane %v1742, 3
        %v1750 = vperm.slane %v1742, 4
        %v1751 = vperm.slane %v1742, 5
        %v1752 = vperm.slane %v1742, 6
        %v1753 = vperm.slane %v1742, 7
        %v1754 = vperm.slane %v1743, 0
        %v1755 = vperm.slane %v1743, 1
        %v1756 = vperm.slane %v1743, 2
        %v1757 = vperm.slane %v1743, 3
        %v1758 = vperm.slane %v1743, 4
        %v1759 = vperm.slane %v1743, 5
        %v1760 = vperm.slane %v1743, 6
        %v1761 = vperm.slane %v1743, 7
        %v1810 = vunpack.c.l.b16 %v1710
        %v1811 = vunpack.c.h.b16 %v1710
        %v1812 = vunpack.c.l.b16 %v1711
        %v1813 = vunpack.c.h.b16 %v1711
        %v1814 = vunpack.c.l.b16 %v1712
        %v1815 = vunpack.c.h.b16 %v1712
        %v1816 = vunpack.c.l.b16 %v1713
        %v1817 = vunpack.c.h.b16 %v1713
        %v1818 = vunpack.c.l.b16 %v1714
        %v1819 = vunpack.c.h.b16 %v1714
        %v1820 = vunpack.c.l.b16 %v1715
        %v1821 = vunpack.c.h.b16 %v1715
        %v1822 = vunpack.c.l.b16 %v1716
        %v1823 = vunpack.c.h.b16 %v1716
        %v1824 = vunpack.c.l.b16 %v1717
        %v1825 = vunpack.c.h.b16 %v1717
        %v1826 = vunpack.c.l.b16 %v1718
        %v1827 = vunpack.c.h.b16 %v1718
        %v1828 = vunpack.c.l.b16 %v1719
        %v1829 = vunpack.c.h.b16 %v1719
        %v1830 = vunpack.c.l.b16 %v1720
        %v1831 = vunpack.c.h.b16 %v1720
        %v1832 = vunpack.c.l.b16 %v1721
        %v1833 = vunpack.c.h.b16 %v1721
        %v1834 = vunpack.c.l.b16 %v1722
        %v1835 = vunpack.c.h.b16 %v1722
        %v1836 = vunpack.c.l.b16 %v1723
        %v1837 = vunpack.c.h.b16 %v1723
        %v1838 = vunpack.c.l.b16 %v1724
        %v1839 = vunpack.c.h.b16 %v1724
        %v1840 = vunpack.c.l.b16 %v1725
        %v1841 = vunpack.c.h.b16 %v1725
        %v1842 = vunpack.c.l.b16 %v1726
        %v1843 = vunpack.c.h.b16 %v1726
        %v1844 = vunpack.c.l.b16 %v1727
        %v1845 = vunpack.c.h.b16 %v1727
        %v1846 = vunpack.c.l.b16 %v1728
        %v1847 = vunpack.c.h.b16 %v1728
        %v1848 = vunpack.c.l.b16 %v1729
        %v1849 = vunpack.c.h.b16 %v1729
        %v1850 = vunpack.c.l.b16 %v1730
        %v1851 = vunpack.c.h.b16 %v1730
        %v1852 = vunpack.c.l.b16 %v1731
        %v1853 = vunpack.c.h.b16 %v1731
        %v1854 = vunpack.c.l.b16 %v1732
        %v1855 = vunpack.c.h.b16 %v1732
        %v1856 = vunpack.c.l.b16 %v1733
        %v1857 = vunpack.c.h.b16 %v1733
        %v1858 = vunpack.c.l.b16 %v1734
        %v1859 = vunpack.c.h.b16 %v1734
        %v1860 = vunpack.c.l.b16 %v1735
        %v1861 = vunpack.c.h.b16 %v1735
        %v1862 = vunpack.c.l.b16 %v1736
        %v1863 = vunpack.c.h.b16 %v1736
        %v1864 = vunpack.c.l.b16 %v1737
        %v1865 = vunpack.c.h.b16 %v1737
        %v1866 = vunpack.c.l.b16 %v1738
        %v1867 = vunpack.c.h.b16 %v1738
        %v1868 = vunpack.c.l.b16 %v1739
        %v1869 = vunpack.c.h.b16 %v1739
        %v1870 = vunpack.c.l.b16 %v1740
        %v1871 = vunpack.c.h.b16 %v1740
        %v1872 = vunpack.c.l.b16 %v1741
        %v1873 = vunpack.c.h.b16 %v1741
        %v1874 = vpack.c.b16 %v1826, %v1810
        %v1875 = vpack.c.b16 %v1827, %v1811
        %v1876 = vpack.c.b16 %v1828, %v1812
        %v1877 = vpack.c.b16 %v1829, %v1813
        %v1878 = vpack.c.b16 %v1830, %v1814
        %v1879 = vpack.c.b16 %v1831, %v1815
        %v1880 = vpack.c.b16 %v1832, %v1816
        %v1881 = vpack.c.b16 %v1833, %v1817
        %v1882 = vpack.c.b16 %v1834, %v1818
        %v1883 = vpack.c.b16 %v1835, %v1819
        %v1884 = vpack.c.b16 %v1836, %v1820
        %v1885 = vpack.c.b16 %v1837, %v1821
        %v1886 = vpack.c.b16 %v1838, %v1822
        %v1887 = vpack.c.b16 %v1839, %v1823
        %v1888 = vpack.c.b16 %v1840, %v1824
        %v1889 = vpack.c.b16 %v1841, %v1825
        %v1890 = vpack.c.b16 %v1858, %v1842
        %v1891 = vpack.c.b16 %v1859, %v1843
        %v1892 = vpack.c.b16 %v1860, %v1844
        %v1893 = vpack.c.b16 %v1861, %v1845
        %v1894 = vpack.c.b16 %v1862, %v1846
        %v1895 = vpack.c.b16 %v1863, %v1847
        %v1896 = vpack.c.b16 %v1864, %v1848
        %v1897 = vpack.c.b16 %v1865, %v1849
        %v1898 = vpack.c.b16 %v1866, %v1850
        %v1899 = vpack.c.b16 %v1867, %v1851
        %v1900 = vpack.c.b16 %v1868, %v1852
        %v1901 = vpack.c.b16 %v1869, %v1853
        %v1902 = vpack.c.b16 %v1870, %v1854
        %v1903 = vpack.c.b16 %v1871, %v1855
        %v1904 = vpack.c.b16 %v1872, %v1856
        %v1905 = vpack.c.b16 %v1873, %v1857
        %v1939 = vsel %vm1262, %v1709, 0
        %1941 = vmatpush.bf16.msra.mxu0 0
        %1942 = vmatpush.bf16.msra.mxu0 0
        %1943 = vmatpush.bf16.msra.mxu0 0
        %1944 = vmatpush.bf16.msra.mxu0 0
        %1945 = vmatpush.bf16.msra.mxu0 0
        %1946 = vmatpush.bf16.msra.mxu0 0
        %1947 = vmatpush.bf16.msra.mxu0 %v1890
        %1948 = vmatpush.bf16.msra.mxu0 %v1874
        %1949 = vmatmul.bf16.gmra.mxu0 %v1939
        %v1950 = vpop.f32.mrf.mxu0
        %v1951 = vadd.f32 %v1746, %v1950
        %v1952 = vpop.f32.mrf.mxu0
        %1953 = vdwg.mxu0
        %1954 = vmatpush.bf16.msra.mxu0 0
        %1955 = vmatpush.bf16.msra.mxu0 0
        %1956 = vmatpush.bf16.msra.mxu0 0
        %1957 = vmatpush.bf16.msra.mxu0 0
        %1958 = vmatpush.bf16.msra.mxu0 0
        %1959 = vmatpush.bf16.msra.mxu0 0
        %1960 = vmatpush.bf16.msra.mxu0 %v1891
        %1961 = vmatpush.bf16.msra.mxu0 %v1875
        %1962 = vmatmul.bf16.gmra.mxu0 %v1939
        %v1963 = vpop.f32.mrf.mxu0
        %v1964 = vadd.f32 %v1747, %v1963
        %v1965 = vpop.f32.mrf.mxu0
        %1966 = vdwg.mxu0
        %1967 = vmatpush.bf16.msra.mxu0 0
        %1968 = vmatpush.bf16.msra.mxu0 0
        %1969 = vmatpush.bf16.msra.mxu0 0
        %1970 = vmatpush.bf16.msra.mxu0 0
        %1971 = vmatpush.bf16.msra.mxu0 0
        %1972 = vmatpush.bf16.msra.mxu0 0
        %1973 = vmatpush.bf16.msra.mxu0 %v1892
        %1974 = vmatpush.bf16.msra.mxu0 %v1876
        %1975 = vmatmul.bf16.gmra.mxu0 %v1939
        %v1976 = vpop.f32.mrf.mxu0
        %v1977 = vadd.f32 %v1748, %v1976
        %v1978 = vpop.f32.mrf.mxu0
        %1979 = vdwg.mxu0
        %1980 = vmatpush.bf16.msra.mxu0 0
        %1981 = vmatpush.bf16.msra.mxu0 0
        %1982 = vmatpush.bf16.msra.mxu0 0
        %1983 = vmatpush.bf16.msra.mxu0 0
        %1984 = vmatpush.bf16.msra.mxu0 0
        %1985 = vmatpush.bf16.msra.mxu0 0
        %1986 = vmatpush.bf16.msra.mxu0 %v1893
        %1987 = vmatpush.bf16.msra.mxu0 %v1877
        %1988 = vmatmul.bf16.gmra.mxu0 %v1939
        %v1989 = vpop.f32.mrf.mxu0
        %v1990 = vadd.f32 %v1749, %v1989
        %v1991 = vpop.f32.mrf.mxu0
        %1992 = vdwg.mxu0
        %1993 = vmatpush.bf16.msra.mxu0 0
        %1994 = vmatpush.bf16.msra.mxu0 0
        %1995 = vmatpush.bf16.msra.mxu0 0
        %1996 = vmatpush.bf16.msra.mxu0 0
        %1997 = vmatpush.bf16.msra.mxu0 0
        %1998 = vmatpush.bf16.msra.mxu0 0
        %1999 = vmatpush.bf16.msra.mxu0 %v1894
        %2000 = vmatpush.bf16.msra.mxu0 %v1878
        %2001 = vmatmul.bf16.gmra.mxu0 %v1939
        %v2002 = vpop.f32.mrf.mxu0
        %v2003 = vadd.f32 %v1750, %v2002
        %v2004 = vpop.f32.mrf.mxu0
        %2005 = vdwg.mxu0
        %2006 = vmatpush.bf16.msra.mxu0 0
        %2007 = vmatpush.bf16.msra.mxu0 0
        %2008 = vmatpush.bf16.msra.mxu0 0
        %2009 = vmatpush.bf16.msra.mxu0 0
        %2010 = vmatpush.bf16.msra.mxu0 0
        %2011 = vmatpush.bf16.msra.mxu0 0
        %2012 = vmatpush.bf16.msra.mxu0 %v1895
        %2013 = vmatpush.bf16.msra.mxu0 %v1879
        %2014 = vmatmul.bf16.gmra.mxu0 %v1939
        %v2015 = vpop.f32.mrf.mxu0
        %v2016 = vadd.f32 %v1751, %v2015
        %v2017 = vpop.f32.mrf.mxu0
        %2018 = vdwg.mxu0
        %2019 = vmatpush.bf16.msra.mxu0 0
        %2020 = vmatpush.bf16.msra.mxu0 0
        %2021 = vmatpush.bf16.msra.mxu0 0
        %2022 = vmatpush.bf16.msra.mxu0 0
        %2023 = vmatpush.bf16.msra.mxu0 0
        %2024 = vmatpush.bf16.msra.mxu0 0
        %2025 = vmatpush.bf16.msra.mxu0 %v1896
        %2026 = vmatpush.bf16.msra.mxu0 %v1880
        %2027 = vmatmul.bf16.gmra.mxu0 %v1939
        %v2028 = vpop.f32.mrf.mxu0
        %v2029 = vadd.f32 %v1752, %v2028
        %v2030 = vpop.f32.mrf.mxu0
        %2031 = vdwg.mxu0
        %2032 = vmatpush.bf16.msra.mxu0 0
        %2033 = vmatpush.bf16.msra.mxu0 0
        %2034 = vmatpush.bf16.msra.mxu0 0
        %2035 = vmatpush.bf16.msra.mxu0 0
        %2036 = vmatpush.bf16.msra.mxu0 0
        %2037 = vmatpush.bf16.msra.mxu0 0
        %2038 = vmatpush.bf16.msra.mxu0 %v1897
        %2039 = vmatpush.bf16.msra.mxu0 %v1881
        %2040 = vmatmul.bf16.gmra.mxu0 %v1939
        %v2041 = vpop.f32.mrf.mxu0
        %v2042 = vadd.f32 %v1753, %v2041
        %v2043 = vpop.f32.mrf.mxu0
        %2044 = vdwg.mxu0
        %2045 = vmatpush.bf16.msra.mxu0 0
        %2046 = vmatpush.bf16.msra.mxu0 0
        %2047 = vmatpush.bf16.msra.mxu0 0
        %2048 = vmatpush.bf16.msra.mxu0 0
        %2049 = vmatpush.bf16.msra.mxu0 0
        %2050 = vmatpush.bf16.msra.mxu0 0
        %2051 = vmatpush.bf16.msra.mxu0 %v1898
        %2052 = vmatpush.bf16.msra.mxu0 %v1882
        %2053 = vmatmul.bf16.gmra.mxu0 %v1939
        %v2054 = vpop.f32.mrf.mxu0
        %v2055 = vadd.f32 %v1754, %v2054
        %v2056 = vpop.f32.mrf.mxu0
        %2057 = vdwg.mxu0
        %2058 = vmatpush.bf16.msra.mxu0 0
        %2059 = vmatpush.bf16.msra.mxu0 0
        %2060 = vmatpush.bf16.msra.mxu0 0
        %2061 = vmatpush.bf16.msra.mxu0 0
        %2062 = vmatpush.bf16.msra.mxu0 0
        %2063 = vmatpush.bf16.msra.mxu0 0
        %2064 = vmatpush.bf16.msra.mxu0 %v1899
        %2065 = vmatpush.bf16.msra.mxu0 %v1883
        %2066 = vmatmul.bf16.gmra.mxu0 %v1939
        %v2067 = vpop.f32.mrf.mxu0
        %v2068 = vadd.f32 %v1755, %v2067
        %v2069 = vpop.f32.mrf.mxu0
        %2070 = vdwg.mxu0
        %2071 = vmatpush.bf16.msra.mxu0 0
        %2072 = vmatpush.bf16.msra.mxu0 0
        %2073 = vmatpush.bf16.msra.mxu0 0
        %2074 = vmatpush.bf16.msra.mxu0 0
        %2075 = vmatpush.bf16.msra.mxu0 0
        %2076 = vmatpush.bf16.msra.mxu0 0
        %2077 = vmatpush.bf16.msra.mxu0 %v1900
        %2078 = vmatpush.bf16.msra.mxu0 %v1884
        %2079 = vmatmul.bf16.gmra.mxu0 %v1939
        %v2080 = vpop.f32.mrf.mxu0
        %v2081 = vadd.f32 %v1756, %v2080
        %v2082 = vpop.f32.mrf.mxu0
        %2083 = vdwg.mxu0
        %2084 = vmatpush.bf16.msra.mxu0 0
        %2085 = vmatpush.bf16.msra.mxu0 0
        %2086 = vmatpush.bf16.msra.mxu0 0
        %2087 = vmatpush.bf16.msra.mxu0 0
        %2088 = vmatpush.bf16.msra.mxu0 0
        %2089 = vmatpush.bf16.msra.mxu0 0
        %2090 = vmatpush.bf16.msra.mxu0 %v1901
        %2091 = vmatpush.bf16.msra.mxu0 %v1885
        %2092 = vmatmul.bf16.gmra.mxu0 %v1939
        %v2093 = vpop.f32.mrf.mxu0
        %v2094 = vadd.f32 %v1757, %v2093
        %v2095 = vpop.f32.mrf.mxu0
        %2096 = vdwg.mxu0
        %2097 = vmatpush.bf16.msra.mxu0 0
        %2098 = vmatpush.bf16.msra.mxu0 0
        %2099 = vmatpush.bf16.msra.mxu0 0
        %2100 = vmatpush.bf16.msra.mxu0 0
        %2101 = vmatpush.bf16.msra.mxu0 0
        %2102 = vmatpush.bf16.msra.mxu0 0
        %2103 = vmatpush.bf16.msra.mxu0 %v1902
        %2104 = vmatpush.bf16.msra.mxu0 %v1886
        %2105 = vmatmul.bf16.gmra.mxu0 %v1939
        %v2106 = vpop.f32.mrf.mxu0
        %v2107 = vadd.f32 %v1758, %v2106
        %v2108 = vpop.f32.mrf.mxu0
        %2109 = vdwg.mxu0
        %2110 = vmatpush.bf16.msra.mxu0 0
        %2111 = vmatpush.bf16.msra.mxu0 0
        %2112 = vmatpush.bf16.msra.mxu0 0
        %2113 = vmatpush.bf16.msra.mxu0 0
        %2114 = vmatpush.bf16.msra.mxu0 0
        %2115 = vmatpush.bf16.msra.mxu0 0
        %2116 = vmatpush.bf16.msra.mxu0 %v1903
        %2117 = vmatpush.bf16.msra.mxu0 %v1887
        %2118 = vmatmul.bf16.gmra.mxu0 %v1939
        %v2119 = vpop.f32.mrf.mxu0
        %v2120 = vadd.f32 %v1759, %v2119
        %v2121 = vpop.f32.mrf.mxu0
        %2122 = vdwg.mxu0
        %2123 = vmatpush.bf16.msra.mxu0 0
        %2124 = vmatpush.bf16.msra.mxu0 0
        %2125 = vmatpush.bf16.msra.mxu0 0
        %2126 = vmatpush.bf16.msra.mxu0 0
        %2127 = vmatpush.bf16.msra.mxu0 0
        %2128 = vmatpush.bf16.msra.mxu0 0
        %2129 = vmatpush.bf16.msra.mxu0 %v1904
        %2130 = vmatpush.bf16.msra.mxu0 %v1888
        %2131 = vmatmul.bf16.gmra.mxu0 %v1939
        %v2132 = vpop.f32.mrf.mxu0
        %v2133 = vadd.f32 %v1760, %v2132
        %v2134 = vpop.f32.mrf.mxu0
        %2135 = vdwg.mxu0
        %2136 = vmatpush.bf16.msra.mxu0 0
        %2137 = vmatpush.bf16.msra.mxu0 0
        %2138 = vmatpush.bf16.msra.mxu0 0
        %2139 = vmatpush.bf16.msra.mxu0 0
        %2140 = vmatpush.bf16.msra.mxu0 0
        %2141 = vmatpush.bf16.msra.mxu0 0
        %2142 = vmatpush.bf16.msra.mxu0 %v1905
        %2143 = vmatpush.bf16.msra.mxu0 %v1889
        %2144 = vmatmul.bf16.gmra.mxu0 %v1939
        %v2145 = vpop.f32.mrf.mxu0
        %v2146 = vadd.f32 %v1761, %v2145
        %v2147 = vpop.f32.mrf.mxu0
        %2148 = vdwg.mxu0
        %v2149 = vmax.f32 %v1951, 0.0
        %v2150 = vmax.f32 %v1964, 0.0
        %v2151 = vmax.f32 %v1977, 0.0
        %v2152 = vmax.f32 %v1990, 0.0
        %v2153 = vmax.f32 %v2003, 0.0
        %v2154 = vmax.f32 %v2016, 0.0
        %v2155 = vmax.f32 %v2029, 0.0
        %v2156 = vmax.f32 %v2042, 0.0
        %v2157 = vmax.f32 %v2055, 0.0
        %v2158 = vmax.f32 %v2068, 0.0
        %v2159 = vmax.f32 %v2081, 0.0
        %v2160 = vmax.f32 %v2094, 0.0
        %v2161 = vmax.f32 %v2107, 0.0
        %v2162 = vmax.f32 %v2120, 0.0
        %v2163 = vmax.f32 %v2133, 0.0
        %v2164 = vmax.f32 %v2146, 0.0
        %v2165 = vpack.c.bf16 %v2149, %v2149
        %v2166 = vpack.c.bf16 %v2150, %v2150
        %v2167 = vpack.c.bf16 %v2151, %v2151
        %v2168 = vpack.c.bf16 %v2152, %v2152
        %v2169 = vpack.c.bf16 %v2153, %v2153
        %v2170 = vpack.c.bf16 %v2154, %v2154
        %v2171 = vpack.c.bf16 %v2155, %v2155
        %v2172 = vpack.c.bf16 %v2156, %v2156
        %v2173 = vpack.c.bf16 %v2157, %v2157
        %v2174 = vpack.c.bf16 %v2158, %v2158
        %v2175 = vpack.c.bf16 %v2159, %v2159
        %v2176 = vpack.c.bf16 %v2160, %v2160
        %v2177 = vpack.c.bf16 %v2161, %v2161
        %v2178 = vpack.c.bf16 %v2162, %v2162
        %v2179 = vpack.c.bf16 %v2163, %v2163
        %v2180 = vpack.c.bf16 %v2164, %v2164
        %v2181 = vld [vmem:[%s1052] sm:$0xf]
        %v2182 = vld [vmem:[%s1052 + $0x4] sm:$0xf]
        %v2183 = vld [vmem:[%s1052 + $0x8] sm:$0xf]
        %v2184 = vld [vmem:[%s1052 + $0xc] sm:$0xf]
        %v2185 = vld [vmem:[%s1052 + $0x10] sm:$0xf]
        %v2186 = vld [vmem:[%s1052 + $0x14] sm:$0xf]
        %v2187 = vld [vmem:[%s1052 + $0x18] sm:$0xf]
        %v2188 = vld [vmem:[%s1052 + $0x1c] sm:$0xf]
        %v2189 = vld [vmem:[%s1052 + $0x20] sm:$0xf]
        %v2190 = vld [vmem:[%s1052 + $0x24] sm:$0xf]
        %v2191 = vld [vmem:[%s1052 + $0x28] sm:$0xf]
        %v2192 = vld [vmem:[%s1052 + $0x2c] sm:$0xf]
        %v2193 = vld [vmem:[%s1052 + $0x30] sm:$0xf]
        %v2194 = vld [vmem:[%s1052 + $0x34] sm:$0xf]
        %v2195 = vld [vmem:[%s1052 + $0x38] sm:$0xf]
        %v2196 = vld [vmem:[%s1052 + $0x3c] sm:$0xf]
        %v2197 = vld [vmem:[%s1052 + $0x40] sm:$0xf]
        %v2198 = vld [vmem:[%s1052 + $0x44] sm:$0xf]
        %v2199 = vld [vmem:[%s1052 + $0x48] sm:$0xf]
        %v2200 = vld [vmem:[%s1052 + $0x4c] sm:$0xf]
        %v2201 = vld [vmem:[%s1052 + $0x50] sm:$0xf]
        %v2202 = vld [vmem:[%s1052 + $0x54] sm:$0xf]
        %v2203 = vld [vmem:[%s1052 + $0x58] sm:$0xf]
        %v2204 = vld [vmem:[%s1052 + $0x5c] sm:$0xf]
        %v2205 = vld [vmem:[%s1052 + $0x60] sm:$0xf]
        %v2206 = vld [vmem:[%s1052 + $0x64] sm:$0xf]
        %v2207 = vld [vmem:[%s1052 + $0x68] sm:$0xf]
        %v2208 = vld [vmem:[%s1052 + $0x6c] sm:$0xf]
        %v2209 = vld [vmem:[%s1052 + $0x70] sm:$0xf]
        %v2210 = vld [vmem:[%s1052 + $0x74] sm:$0xf]
        %v2211 = vld [vmem:[%s1052 + $0x78] sm:$0xf]
        %v2212 = vld [vmem:[%s1052 + $0x7c] sm:$0xf]
        %v2213 = vld [vmem:[%s1052 + $0x80] sm:$0xf]
        %v2214 = vld [vmem:[%s1052 + $0x84] sm:$0xf]
        %v2215 = vld [vmem:[%s1052 + $0x88] sm:$0xf]
        %v2216 = vld [vmem:[%s1052 + $0x8c] sm:$0xf]
        %v2217 = vld [vmem:[%s1052 + $0x90] sm:$0xf]
        %v2218 = vld [vmem:[%s1052 + $0x94] sm:$0xf]
        %v2219 = vld [vmem:[%s1052 + $0x98] sm:$0xf]
        %v2220 = vld [vmem:[%s1052 + $0x9c] sm:$0xf]
        %v2221 = vld [vmem:[%s1052 + $0xa0] sm:$0xf]
        %v2222 = vld [vmem:[%s1052 + $0xa4] sm:$0xf]
        %v2223 = vld [vmem:[%s1052 + $0xa8] sm:$0xf]
        %v2224 = vld [vmem:[%s1052 + $0xac] sm:$0xf]
        %v2225 = vld [vmem:[%s1052 + $0xb0] sm:$0xf]
        %v2226 = vld [vmem:[%s1052 + $0xb4] sm:$0xf]
        %v2227 = vld [vmem:[%s1052 + $0xb8] sm:$0xf]
        %v2228 = vld [vmem:[%s1052 + $0xbc] sm:$0xf]
        %v2229 = vld [vmem:[%s1052 + $0xc0] sm:$0xf]
        %v2230 = vld [vmem:[%s1052 + $0xc4] sm:$0xf]
        %v2231 = vld [vmem:[%s1052 + $0xc8] sm:$0xf]
        %v2232 = vld [vmem:[%s1052 + $0xcc] sm:$0xf]
        %v2233 = vld [vmem:[%s1052 + $0xd0] sm:$0xf]
        %v2234 = vld [vmem:[%s1052 + $0xd4] sm:$0xf]
        %v2235 = vld [vmem:[%s1052 + $0xd8] sm:$0xf]
        %v2236 = vld [vmem:[%s1052 + $0xdc] sm:$0xf]
        %v2237 = vld [vmem:[%s1052 + $0xe0] sm:$0xf]
        %v2238 = vld [vmem:[%s1052 + $0xe4] sm:$0xf]
        %v2239 = vld [vmem:[%s1052 + $0xe8] sm:$0xf]
        %v2240 = vld [vmem:[%s1052 + $0xec] sm:$0xf]
        %v2241 = vld [vmem:[%s1052 + $0xf0] sm:$0xf]
        %v2242 = vld [vmem:[%s1052 + $0xf4] sm:$0xf]
        %v2243 = vld [vmem:[%s1052 + $0xf8] sm:$0xf]
        %v2244 = vld [vmem:[%s1052 + $0xfc] sm:$0xf]
        %v2245 = vld [vmem:[%s1052 + $0x100] sm:$0xf]
        %v2246 = vld [vmem:[%s1052 + $0x104] sm:$0xf]
        %v2247 = vld [vmem:[%s1052 + $0x108] sm:$0xf]
        %v2248 = vld [vmem:[%s1052 + $0x10c] sm:$0xf]
        %v2249 = vld [vmem:[%s1052 + $0x110] sm:$0xf]
        %v2250 = vld [vmem:[%s1052 + $0x114] sm:$0xf]
        %v2251 = vld [vmem:[%s1052 + $0x118] sm:$0xf]
        %v2252 = vld [vmem:[%s1052 + $0x11c] sm:$0xf]
        %v2253 = vld [vmem:[%s1052 + $0x120] sm:$0xf]
        %v2254 = vld [vmem:[%s1052 + $0x124] sm:$0xf]
        %v2255 = vld [vmem:[%s1052 + $0x128] sm:$0xf]
        %v2256 = vld [vmem:[%s1052 + $0x12c] sm:$0xf]
        %v2257 = vld [vmem:[%s1052 + $0x130] sm:$0xf]
        %v2258 = vld [vmem:[%s1052 + $0x134] sm:$0xf]
        %v2259 = vld [vmem:[%s1052 + $0x138] sm:$0xf]
        %v2260 = vld [vmem:[%s1052 + $0x13c] sm:$0xf]
        %v2261 = vld [vmem:[%s1052 + $0x140] sm:$0xf]
        %v2262 = vld [vmem:[%s1052 + $0x144] sm:$0xf]
        %v2263 = vld [vmem:[%s1052 + $0x148] sm:$0xf]
        %v2264 = vld [vmem:[%s1052 + $0x14c] sm:$0xf]
        %v2265 = vld [vmem:[%s1052 + $0x150] sm:$0xf]
        %v2266 = vld [vmem:[%s1052 + $0x154] sm:$0xf]
        %v2267 = vld [vmem:[%s1052 + $0x158] sm:$0xf]
        %v2268 = vld [vmem:[%s1052 + $0x15c] sm:$0xf]
        %v2269 = vld [vmem:[%s1052 + $0x160] sm:$0xf]
        %v2270 = vld [vmem:[%s1052 + $0x164] sm:$0xf]
        %v2271 = vld [vmem:[%s1052 + $0x168] sm:$0xf]
        %v2272 = vld [vmem:[%s1052 + $0x16c] sm:$0xf]
        %v2273 = vld [vmem:[%s1052 + $0x170] sm:$0xf]
        %v2274 = vld [vmem:[%s1052 + $0x174] sm:$0xf]
        %v2275 = vld [vmem:[%s1052 + $0x178] sm:$0xf]
        %v2276 = vld [vmem:[%s1052 + $0x17c] sm:$0xf]
        %v2277 = vld [vmem:[%s1052 + $0x180] sm:$0xf]
        %v2278 = vld [vmem:[%s1052 + $0x184] sm:$0xf]
        %v2279 = vld [vmem:[%s1052 + $0x188] sm:$0xf]
        %v2280 = vld [vmem:[%s1052 + $0x18c] sm:$0xf]
        %v2281 = vld [vmem:[%s1052 + $0x190] sm:$0xf]
        %v2282 = vld [vmem:[%s1052 + $0x194] sm:$0xf]
        %v2283 = vld [vmem:[%s1052 + $0x198] sm:$0xf]
        %v2284 = vld [vmem:[%s1052 + $0x19c] sm:$0xf]
        %v2285 = vld [vmem:[%s1052 + $0x1a0] sm:$0xf]
        %v2286 = vld [vmem:[%s1052 + $0x1a4] sm:$0xf]
        %v2287 = vld [vmem:[%s1052 + $0x1a8] sm:$0xf]
        %v2288 = vld [vmem:[%s1052 + $0x1ac] sm:$0xf]
        %v2289 = vld [vmem:[%s1052 + $0x1b0] sm:$0xf]
        %v2290 = vld [vmem:[%s1052 + $0x1b4] sm:$0xf]
        %v2291 = vld [vmem:[%s1052 + $0x1b8] sm:$0xf]
        %v2292 = vld [vmem:[%s1052 + $0x1bc] sm:$0xf]
        %v2293 = vld [vmem:[%s1052 + $0x1c0] sm:$0xf]
        %v2294 = vld [vmem:[%s1052 + $0x1c4] sm:$0xf]
        %v2295 = vld [vmem:[%s1052 + $0x1c8] sm:$0xf]
        %v2296 = vld [vmem:[%s1052 + $0x1cc] sm:$0xf]
        %v2297 = vld [vmem:[%s1052 + $0x1d0] sm:$0xf]
        %v2298 = vld [vmem:[%s1052 + $0x1d4] sm:$0xf]
        %v2299 = vld [vmem:[%s1052 + $0x1d8] sm:$0xf]
        %v2300 = vld [vmem:[%s1052 + $0x1dc] sm:$0xf]
        %v2301 = vld [vmem:[%s1052 + $0x1e0] sm:$0xf]
        %v2302 = vld [vmem:[%s1052 + $0x1e4] sm:$0xf]
        %v2303 = vld [vmem:[%s1052 + $0x1e8] sm:$0xf]
        %v2304 = vld [vmem:[%s1052 + $0x1ec] sm:$0xf]
        %v2305 = vld [vmem:[%s1052 + $0x1f0] sm:$0xf]
        %v2306 = vld [vmem:[%s1052 + $0x1f4] sm:$0xf]
        %v2307 = vld [vmem:[%s1052 + $0x1f8] sm:$0xf]
        %v2308 = vld [vmem:[%s1052 + $0x1fc] sm:$0xf]
        %v2309 = vld [vmem:[%s1052 + $0x200] sm:$0xf]
        %v2310 = vld [vmem:[%s1052 + $0x204] sm:$0xf]
        %v2311 = vld [vmem:[%s1052 + $0x208] sm:$0xf]
        %v2312 = vld [vmem:[%s1052 + $0x20c] sm:$0xf]
        %v2313 = vld [vmem:[%s1052 + $0x210] sm:$0xf]
        %v2314 = vld [vmem:[%s1052 + $0x214] sm:$0xf]
        %v2315 = vld [vmem:[%s1052 + $0x218] sm:$0xf]
        %v2316 = vld [vmem:[%s1052 + $0x21c] sm:$0xf]
        %v2317 = vld [vmem:[%s1052 + $0x220] sm:$0xf]
        %v2318 = vld [vmem:[%s1052 + $0x224] sm:$0xf]
        %v2319 = vld [vmem:[%s1052 + $0x228] sm:$0xf]
        %v2320 = vld [vmem:[%s1052 + $0x22c] sm:$0xf]
        %v2321 = vld [vmem:[%s1052 + $0x230] sm:$0xf]
        %v2322 = vld [vmem:[%s1052 + $0x234] sm:$0xf]
        %v2323 = vld [vmem:[%s1052 + $0x238] sm:$0xf]
        %v2324 = vld [vmem:[%s1052 + $0x23c] sm:$0xf]
        %v2325 = vld [vmem:[%s1052 + $0x240] sm:$0xf]
        %v2326 = vld [vmem:[%s1052 + $0x244] sm:$0xf]
        %v2327 = vld [vmem:[%s1052 + $0x248] sm:$0xf]
        %v2328 = vld [vmem:[%s1052 + $0x24c] sm:$0xf]
        %v2329 = vld [vmem:[%s1052 + $0x250] sm:$0xf]
        %v2330 = vld [vmem:[%s1052 + $0x254] sm:$0xf]
        %v2331 = vld [vmem:[%s1052 + $0x258] sm:$0xf]
        %v2332 = vld [vmem:[%s1052 + $0x25c] sm:$0xf]
        %v2333 = vld [vmem:[%s1052 + $0x260] sm:$0xf]
        %v2334 = vld [vmem:[%s1052 + $0x264] sm:$0xf]
        %v2335 = vld [vmem:[%s1052 + $0x268] sm:$0xf]
        %v2336 = vld [vmem:[%s1052 + $0x26c] sm:$0xf]
        %v2337 = vld [vmem:[%s1052 + $0x270] sm:$0xf]
        %v2338 = vld [vmem:[%s1052 + $0x274] sm:$0xf]
        %v2339 = vld [vmem:[%s1052 + $0x278] sm:$0xf]
        %v2340 = vld [vmem:[%s1052 + $0x27c] sm:$0xf]
        %v2341 = vld [vmem:[%s1052 + $0x280] sm:$0xf]
        %v2342 = vld [vmem:[%s1052 + $0x284] sm:$0xf]
        %v2343 = vld [vmem:[%s1052 + $0x288] sm:$0xf]
        %v2344 = vld [vmem:[%s1052 + $0x28c] sm:$0xf]
        %v2345 = vld [vmem:[%s1052 + $0x290] sm:$0xf]
        %v2346 = vld [vmem:[%s1052 + $0x294] sm:$0xf]
        %v2347 = vld [vmem:[%s1052 + $0x298] sm:$0xf]
        %v2348 = vld [vmem:[%s1052 + $0x29c] sm:$0xf]
        %v2349 = vld [vmem:[%s1052 + $0x2a0] sm:$0xf]
        %v2350 = vld [vmem:[%s1052 + $0x2a4] sm:$0xf]
        %v2351 = vld [vmem:[%s1052 + $0x2a8] sm:$0xf]
        %v2352 = vld [vmem:[%s1052 + $0x2ac] sm:$0xf]
        %v2353 = vld [vmem:[%s1052 + $0x2b0] sm:$0xf]
        %v2354 = vld [vmem:[%s1052 + $0x2b4] sm:$0xf]
        %v2355 = vld [vmem:[%s1052 + $0x2b8] sm:$0xf]
        %v2356 = vld [vmem:[%s1052 + $0x2bc] sm:$0xf]
        %v2357 = vld [vmem:[%s1052 + $0x2c0] sm:$0xf]
        %v2358 = vld [vmem:[%s1052 + $0x2c4] sm:$0xf]
        %v2359 = vld [vmem:[%s1052 + $0x2c8] sm:$0xf]
        %v2360 = vld [vmem:[%s1052 + $0x2cc] sm:$0xf]
        %v2361 = vld [vmem:[%s1052 + $0x2d0] sm:$0xf]
        %v2362 = vld [vmem:[%s1052 + $0x2d4] sm:$0xf]
        %v2363 = vld [vmem:[%s1052 + $0x2d8] sm:$0xf]
        %v2364 = vld [vmem:[%s1052 + $0x2dc] sm:$0xf]
        %v2365 = vld [vmem:[%s1052 + $0x2e0] sm:$0xf]
        %v2366 = vld [vmem:[%s1052 + $0x2e4] sm:$0xf]
        %v2367 = vld [vmem:[%s1052 + $0x2e8] sm:$0xf]
        %v2368 = vld [vmem:[%s1052 + $0x2ec] sm:$0xf]
        %v2369 = vld [vmem:[%s1052 + $0x2f0] sm:$0xf]
        %v2370 = vld [vmem:[%s1052 + $0x2f4] sm:$0xf]
        %v2371 = vld [vmem:[%s1052 + $0x2f8] sm:$0xf]
        %v2372 = vld [vmem:[%s1052 + $0x2fc] sm:$0xf]
        %v2373 = vld [vmem:[%s1052 + $0x300] sm:$0xf]
        %v2374 = vld [vmem:[%s1052 + $0x304] sm:$0xf]
        %v2375 = vld [vmem:[%s1052 + $0x308] sm:$0xf]
        %v2376 = vld [vmem:[%s1052 + $0x30c] sm:$0xf]
        %v2377 = vld [vmem:[%s1052 + $0x310] sm:$0xf]
        %v2378 = vld [vmem:[%s1052 + $0x314] sm:$0xf]
        %v2379 = vld [vmem:[%s1052 + $0x318] sm:$0xf]
        %v2380 = vld [vmem:[%s1052 + $0x31c] sm:$0xf]
        %v2381 = vld [vmem:[%s1052 + $0x320] sm:$0xf]
        %v2382 = vld [vmem:[%s1052 + $0x324] sm:$0xf]
        %v2383 = vld [vmem:[%s1052 + $0x328] sm:$0xf]
        %v2384 = vld [vmem:[%s1052 + $0x32c] sm:$0xf]
        %v2385 = vld [vmem:[%s1052 + $0x330] sm:$0xf]
        %v2386 = vld [vmem:[%s1052 + $0x334] sm:$0xf]
        %v2387 = vld [vmem:[%s1052 + $0x338] sm:$0xf]
        %v2388 = vld [vmem:[%s1052 + $0x33c] sm:$0xf]
        %v2389 = vld [vmem:[%s1052 + $0x340] sm:$0xf]
        %v2390 = vld [vmem:[%s1052 + $0x344] sm:$0xf]
        %v2391 = vld [vmem:[%s1052 + $0x348] sm:$0xf]
        %v2392 = vld [vmem:[%s1052 + $0x34c] sm:$0xf]
        %v2393 = vld [vmem:[%s1052 + $0x350] sm:$0xf]
        %v2394 = vld [vmem:[%s1052 + $0x354] sm:$0xf]
        %v2395 = vld [vmem:[%s1052 + $0x358] sm:$0xf]
        %v2396 = vld [vmem:[%s1052 + $0x35c] sm:$0xf]
        %v2397 = vld [vmem:[%s1052 + $0x360] sm:$0xf]
        %v2398 = vld [vmem:[%s1052 + $0x364] sm:$0xf]
        %v2399 = vld [vmem:[%s1052 + $0x368] sm:$0xf]
        %v2400 = vld [vmem:[%s1052 + $0x36c] sm:$0xf]
        %v2401 = vld [vmem:[%s1052 + $0x370] sm:$0xf]
        %v2402 = vld [vmem:[%s1052 + $0x374] sm:$0xf]
        %v2403 = vld [vmem:[%s1052 + $0x378] sm:$0xf]
        %v2404 = vld [vmem:[%s1052 + $0x37c] sm:$0xf]
        %v2405 = vld [vmem:[%s1052 + $0x380] sm:$0xf]
        %v2406 = vld [vmem:[%s1052 + $0x384] sm:$0xf]
        %v2407 = vld [vmem:[%s1052 + $0x388] sm:$0xf]
        %v2408 = vld [vmem:[%s1052 + $0x38c] sm:$0xf]
        %v2409 = vld [vmem:[%s1052 + $0x390] sm:$0xf]
        %v2410 = vld [vmem:[%s1052 + $0x394] sm:$0xf]
        %v2411 = vld [vmem:[%s1052 + $0x398] sm:$0xf]
        %v2412 = vld [vmem:[%s1052 + $0x39c] sm:$0xf]
        %v2413 = vld [vmem:[%s1052 + $0x3a0] sm:$0xf]
        %v2414 = vld [vmem:[%s1052 + $0x3a4] sm:$0xf]
        %v2415 = vld [vmem:[%s1052 + $0x3a8] sm:$0xf]
        %v2416 = vld [vmem:[%s1052 + $0x3ac] sm:$0xf]
        %v2417 = vld [vmem:[%s1052 + $0x3b0] sm:$0xf]
        %v2418 = vld [vmem:[%s1052 + $0x3b4] sm:$0xf]
        %v2419 = vld [vmem:[%s1052 + $0x3b8] sm:$0xf]
        %v2420 = vld [vmem:[%s1052 + $0x3bc] sm:$0xf]
        %v2421 = vld [vmem:[%s1052 + $0x3c0] sm:$0xf]
        %v2422 = vld [vmem:[%s1052 + $0x3c4] sm:$0xf]
        %v2423 = vld [vmem:[%s1052 + $0x3c8] sm:$0xf]
        %v2424 = vld [vmem:[%s1052 + $0x3cc] sm:$0xf]
        %v2425 = vld [vmem:[%s1052 + $0x3d0] sm:$0xf]
        %v2426 = vld [vmem:[%s1052 + $0x3d4] sm:$0xf]
        %v2427 = vld [vmem:[%s1052 + $0x3d8] sm:$0xf]
        %v2428 = vld [vmem:[%s1052 + $0x3dc] sm:$0xf]
        %v2429 = vld [vmem:[%s1052 + $0x3e0] sm:$0xf]
        %v2430 = vld [vmem:[%s1052 + $0x3e4] sm:$0xf]
        %v2431 = vld [vmem:[%s1052 + $0x3e8] sm:$0xf]
        %v2432 = vld [vmem:[%s1052 + $0x3ec] sm:$0xf]
        %v2433 = vld [vmem:[%s1052 + $0x3f0] sm:$0xf]
        %v2434 = vld [vmem:[%s1052 + $0x3f4] sm:$0xf]
        %v2435 = vld [vmem:[%s1052 + $0x3f8] sm:$0xf]
        %v2436 = vld [vmem:[%s1052 + $0x3fc] sm:$0xf]
        %v2437 = vld [vmem:[%s1055] sm:$0x1]
        %v2439 = vperm.slane %v2437, 0
        %v2697 = vunpack.c.l.b16 %v2181
        %v2698 = vunpack.c.l.b16 %v2182
        %v2699 = vunpack.c.l.b16 %v2183
        %v2700 = vunpack.c.l.b16 %v2184
        %v2701 = vunpack.c.l.b16 %v2185
        %v2702 = vunpack.c.l.b16 %v2186
        %v2703 = vunpack.c.l.b16 %v2187
        %v2704 = vunpack.c.l.b16 %v2188
        %v2705 = vunpack.c.l.b16 %v2189
        %v2706 = vunpack.c.l.b16 %v2190
        %v2707 = vunpack.c.l.b16 %v2191
        %v2708 = vunpack.c.l.b16 %v2192
        %v2709 = vunpack.c.l.b16 %v2193
        %v2710 = vunpack.c.l.b16 %v2194
        %v2711 = vunpack.c.l.b16 %v2195
        %v2712 = vunpack.c.l.b16 %v2196
        %v2713 = vunpack.c.l.b16 %v2197
        %v2714 = vunpack.c.l.b16 %v2198
        %v2715 = vunpack.c.l.b16 %v2199
        %v2716 = vunpack.c.l.b16 %v2200
        %v2717 = vunpack.c.l.b16 %v2201
        %v2718 = vunpack.c.l.b16 %v2202
        %v2719 = vunpack.c.l.b16 %v2203
        %v2720 = vunpack.c.l.b16 %v2204
        %v2721 = vunpack.c.l.b16 %v2205
        %v2722 = vunpack.c.l.b16 %v2206
        %v2723 = vunpack.c.l.b16 %v2207
        %v2724 = vunpack.c.l.b16 %v2208
        %v2725 = vunpack.c.l.b16 %v2209
        %v2726 = vunpack.c.l.b16 %v2210
        %v2727 = vunpack.c.l.b16 %v2211
        %v2728 = vunpack.c.l.b16 %v2212
        %v2729 = vunpack.c.l.b16 %v2213
        %v2730 = vunpack.c.l.b16 %v2214
        %v2731 = vunpack.c.l.b16 %v2215
        %v2732 = vunpack.c.l.b16 %v2216
        %v2733 = vunpack.c.l.b16 %v2217
        %v2734 = vunpack.c.l.b16 %v2218
        %v2735 = vunpack.c.l.b16 %v2219
        %v2736 = vunpack.c.l.b16 %v2220
        %v2737 = vunpack.c.l.b16 %v2221
        %v2738 = vunpack.c.l.b16 %v2222
        %v2739 = vunpack.c.l.b16 %v2223
        %v2740 = vunpack.c.l.b16 %v2224
        %v2741 = vunpack.c.l.b16 %v2225
        %v2742 = vunpack.c.l.b16 %v2226
        %v2743 = vunpack.c.l.b16 %v2227
        %v2744 = vunpack.c.l.b16 %v2228
        %v2745 = vunpack.c.l.b16 %v2229
        %v2746 = vunpack.c.l.b16 %v2230
        %v2747 = vunpack.c.l.b16 %v2231
        %v2748 = vunpack.c.l.b16 %v2232
        %v2749 = vunpack.c.l.b16 %v2233
        %v2750 = vunpack.c.l.b16 %v2234
        %v2751 = vunpack.c.l.b16 %v2235
        %v2752 = vunpack.c.l.b16 %v2236
        %v2753 = vunpack.c.l.b16 %v2237
        %v2754 = vunpack.c.l.b16 %v2238
        %v2755 = vunpack.c.l.b16 %v2239
        %v2756 = vunpack.c.l.b16 %v2240
        %v2757 = vunpack.c.l.b16 %v2241
        %v2758 = vunpack.c.l.b16 %v2242
        %v2759 = vunpack.c.l.b16 %v2243
        %v2760 = vunpack.c.l.b16 %v2244
        %v2761 = vunpack.c.l.b16 %v2245
        %v2762 = vunpack.c.l.b16 %v2246
        %v2763 = vunpack.c.l.b16 %v2247
        %v2764 = vunpack.c.l.b16 %v2248
        %v2765 = vunpack.c.l.b16 %v2249
        %v2766 = vunpack.c.l.b16 %v2250
        %v2767 = vunpack.c.l.b16 %v2251
        %v2768 = vunpack.c.l.b16 %v2252
        %v2769 = vunpack.c.l.b16 %v2253
        %v2770 = vunpack.c.l.b16 %v2254
        %v2771 = vunpack.c.l.b16 %v2255
        %v2772 = vunpack.c.l.b16 %v2256
        %v2773 = vunpack.c.l.b16 %v2257
        %v2774 = vunpack.c.l.b16 %v2258
        %v2775 = vunpack.c.l.b16 %v2259
        %v2776 = vunpack.c.l.b16 %v2260
        %v2777 = vunpack.c.l.b16 %v2261
        %v2778 = vunpack.c.l.b16 %v2262
        %v2779 = vunpack.c.l.b16 %v2263
        %v2780 = vunpack.c.l.b16 %v2264
        %v2781 = vunpack.c.l.b16 %v2265
        %v2782 = vunpack.c.l.b16 %v2266
        %v2783 = vunpack.c.l.b16 %v2267
        %v2784 = vunpack.c.l.b16 %v2268
        %v2785 = vunpack.c.l.b16 %v2269
        %v2786 = vunpack.c.l.b16 %v2270
        %v2787 = vunpack.c.l.b16 %v2271
        %v2788 = vunpack.c.l.b16 %v2272
        %v2789 = vunpack.c.l.b16 %v2273
        %v2790 = vunpack.c.l.b16 %v2274
        %v2791 = vunpack.c.l.b16 %v2275
        %v2792 = vunpack.c.l.b16 %v2276
        %v2793 = vunpack.c.l.b16 %v2277
        %v2794 = vunpack.c.l.b16 %v2278
        %v2795 = vunpack.c.l.b16 %v2279
        %v2796 = vunpack.c.l.b16 %v2280
        %v2797 = vunpack.c.l.b16 %v2281
        %v2798 = vunpack.c.l.b16 %v2282
        %v2799 = vunpack.c.l.b16 %v2283
        %v2800 = vunpack.c.l.b16 %v2284
        %v2801 = vunpack.c.l.b16 %v2285
        %v2802 = vunpack.c.l.b16 %v2286
        %v2803 = vunpack.c.l.b16 %v2287
        %v2804 = vunpack.c.l.b16 %v2288
        %v2805 = vunpack.c.l.b16 %v2289
        %v2806 = vunpack.c.l.b16 %v2290
        %v2807 = vunpack.c.l.b16 %v2291
        %v2808 = vunpack.c.l.b16 %v2292
        %v2809 = vunpack.c.l.b16 %v2293
        %v2810 = vunpack.c.l.b16 %v2294
        %v2811 = vunpack.c.l.b16 %v2295
        %v2812 = vunpack.c.l.b16 %v2296
        %v2813 = vunpack.c.l.b16 %v2297
        %v2814 = vunpack.c.l.b16 %v2298
        %v2815 = vunpack.c.l.b16 %v2299
        %v2816 = vunpack.c.l.b16 %v2300
        %v2817 = vunpack.c.l.b16 %v2301
        %v2818 = vunpack.c.l.b16 %v2302
        %v2819 = vunpack.c.l.b16 %v2303
        %v2820 = vunpack.c.l.b16 %v2304
        %v2821 = vunpack.c.l.b16 %v2305
        %v2822 = vunpack.c.l.b16 %v2306
        %v2823 = vunpack.c.l.b16 %v2307
        %v2824 = vunpack.c.l.b16 %v2308
        %v2825 = vunpack.c.l.b16 %v2309
        %v2826 = vunpack.c.l.b16 %v2310
        %v2827 = vunpack.c.l.b16 %v2311
        %v2828 = vunpack.c.l.b16 %v2312
        %v2829 = vunpack.c.l.b16 %v2313
        %v2830 = vunpack.c.l.b16 %v2314
        %v2831 = vunpack.c.l.b16 %v2315
        %v2832 = vunpack.c.l.b16 %v2316
        %v2833 = vunpack.c.l.b16 %v2317
        %v2834 = vunpack.c.l.b16 %v2318
        %v2835 = vunpack.c.l.b16 %v2319
        %v2836 = vunpack.c.l.b16 %v2320
        %v2837 = vunpack.c.l.b16 %v2321
        %v2838 = vunpack.c.l.b16 %v2322
        %v2839 = vunpack.c.l.b16 %v2323
        %v2840 = vunpack.c.l.b16 %v2324
        %v2841 = vunpack.c.l.b16 %v2325
        %v2842 = vunpack.c.l.b16 %v2326
        %v2843 = vunpack.c.l.b16 %v2327
        %v2844 = vunpack.c.l.b16 %v2328
        %v2845 = vunpack.c.l.b16 %v2329
        %v2846 = vunpack.c.l.b16 %v2330
        %v2847 = vunpack.c.l.b16 %v2331
        %v2848 = vunpack.c.l.b16 %v2332
        %v2849 = vunpack.c.l.b16 %v2333
        %v2850 = vunpack.c.l.b16 %v2334
        %v2851 = vunpack.c.l.b16 %v2335
        %v2852 = vunpack.c.l.b16 %v2336
        %v2853 = vunpack.c.l.b16 %v2337
        %v2854 = vunpack.c.l.b16 %v2338
        %v2855 = vunpack.c.l.b16 %v2339
        %v2856 = vunpack.c.l.b16 %v2340
        %v2857 = vunpack.c.l.b16 %v2341
        %v2858 = vunpack.c.l.b16 %v2342
        %v2859 = vunpack.c.l.b16 %v2343
        %v2860 = vunpack.c.l.b16 %v2344
        %v2861 = vunpack.c.l.b16 %v2345
        %v2862 = vunpack.c.l.b16 %v2346
        %v2863 = vunpack.c.l.b16 %v2347
        %v2864 = vunpack.c.l.b16 %v2348
        %v2865 = vunpack.c.l.b16 %v2349
        %v2866 = vunpack.c.l.b16 %v2350
        %v2867 = vunpack.c.l.b16 %v2351
        %v2868 = vunpack.c.l.b16 %v2352
        %v2869 = vunpack.c.l.b16 %v2353
        %v2870 = vunpack.c.l.b16 %v2354
        %v2871 = vunpack.c.l.b16 %v2355
        %v2872 = vunpack.c.l.b16 %v2356
        %v2873 = vunpack.c.l.b16 %v2357
        %v2874 = vunpack.c.l.b16 %v2358
        %v2875 = vunpack.c.l.b16 %v2359
        %v2876 = vunpack.c.l.b16 %v2360
        %v2877 = vunpack.c.l.b16 %v2361
        %v2878 = vunpack.c.l.b16 %v2362
        %v2879 = vunpack.c.l.b16 %v2363
        %v2880 = vunpack.c.l.b16 %v2364
        %v2881 = vunpack.c.l.b16 %v2365
        %v2882 = vunpack.c.l.b16 %v2366
        %v2883 = vunpack.c.l.b16 %v2367
        %v2884 = vunpack.c.l.b16 %v2368
        %v2885 = vunpack.c.l.b16 %v2369
        %v2886 = vunpack.c.l.b16 %v2370
        %v2887 = vunpack.c.l.b16 %v2371
        %v2888 = vunpack.c.l.b16 %v2372
        %v2889 = vunpack.c.l.b16 %v2373
        %v2890 = vunpack.c.l.b16 %v2374
        %v2891 = vunpack.c.l.b16 %v2375
        %v2892 = vunpack.c.l.b16 %v2376
        %v2893 = vunpack.c.l.b16 %v2377
        %v2894 = vunpack.c.l.b16 %v2378
        %v2895 = vunpack.c.l.b16 %v2379
        %v2896 = vunpack.c.l.b16 %v2380
        %v2897 = vunpack.c.l.b16 %v2381
        %v2898 = vunpack.c.l.b16 %v2382
        %v2899 = vunpack.c.l.b16 %v2383
        %v2900 = vunpack.c.l.b16 %v2384
        %v2901 = vunpack.c.l.b16 %v2385
        %v2902 = vunpack.c.l.b16 %v2386
        %v2903 = vunpack.c.l.b16 %v2387
        %v2904 = vunpack.c.l.b16 %v2388
        %v2905 = vunpack.c.l.b16 %v2389
        %v2906 = vunpack.c.l.b16 %v2390
        %v2907 = vunpack.c.l.b16 %v2391
        %v2908 = vunpack.c.l.b16 %v2392
        %v2909 = vunpack.c.l.b16 %v2393
        %v2910 = vunpack.c.l.b16 %v2394
        %v2911 = vunpack.c.l.b16 %v2395
        %v2912 = vunpack.c.l.b16 %v2396
        %v2913 = vunpack.c.l.b16 %v2397
        %v2914 = vunpack.c.l.b16 %v2398
        %v2915 = vunpack.c.l.b16 %v2399
        %v2916 = vunpack.c.l.b16 %v2400
        %v2917 = vunpack.c.l.b16 %v2401
        %v2918 = vunpack.c.l.b16 %v2402
        %v2919 = vunpack.c.l.b16 %v2403
        %v2920 = vunpack.c.l.b16 %v2404
        %v2921 = vunpack.c.l.b16 %v2405
        %v2922 = vunpack.c.l.b16 %v2406
        %v2923 = vunpack.c.l.b16 %v2407
        %v2924 = vunpack.c.l.b16 %v2408
        %v2925 = vunpack.c.l.b16 %v2409
        %v2926 = vunpack.c.l.b16 %v2410
        %v2927 = vunpack.c.l.b16 %v2411
        %v2928 = vunpack.c.l.b16 %v2412
        %v2929 = vunpack.c.l.b16 %v2413
        %v2930 = vunpack.c.l.b16 %v2414
        %v2931 = vunpack.c.l.b16 %v2415
        %v2932 = vunpack.c.l.b16 %v2416
        %v2933 = vunpack.c.l.b16 %v2417
        %v2934 = vunpack.c.l.b16 %v2418
        %v2935 = vunpack.c.l.b16 %v2419
        %v2936 = vunpack.c.l.b16 %v2420
        %v2937 = vunpack.c.l.b16 %v2421
        %v2938 = vunpack.c.l.b16 %v2422
        %v2939 = vunpack.c.l.b16 %v2423
        %v2940 = vunpack.c.l.b16 %v2424
        %v2941 = vunpack.c.l.b16 %v2425
        %v2942 = vunpack.c.l.b16 %v2426
        %v2943 = vunpack.c.l.b16 %v2427
        %v2944 = vunpack.c.l.b16 %v2428
        %v2945 = vunpack.c.l.b16 %v2429
        %v2946 = vunpack.c.l.b16 %v2430
        %v2947 = vunpack.c.l.b16 %v2431
        %v2948 = vunpack.c.l.b16 %v2432
        %v2949 = vunpack.c.l.b16 %v2433
        %v2950 = vunpack.c.l.b16 %v2434
        %v2951 = vunpack.c.l.b16 %v2435
        %v2952 = vunpack.c.l.b16 %v2436
        %v2953 = vpack.c.b16 %v2698, %v2697
        %v2954 = vpack.c.b16 %v2700, %v2699
        %v2955 = vpack.c.b16 %v2702, %v2701
        %v2956 = vpack.c.b16 %v2704, %v2703
        %v2957 = vpack.c.b16 %v2706, %v2705
        %v2958 = vpack.c.b16 %v2708, %v2707
        %v2959 = vpack.c.b16 %v2710, %v2709
        %v2960 = vpack.c.b16 %v2712, %v2711
        %v2961 = vpack.c.b16 %v2714, %v2713
        %v2962 = vpack.c.b16 %v2716, %v2715
        %v2963 = vpack.c.b16 %v2718, %v2717
        %v2964 = vpack.c.b16 %v2720, %v2719
        %v2965 = vpack.c.b16 %v2722, %v2721
        %v2966 = vpack.c.b16 %v2724, %v2723
        %v2967 = vpack.c.b16 %v2726, %v2725
        %v2968 = vpack.c.b16 %v2728, %v2727
        %v2969 = vpack.c.b16 %v2730, %v2729
        %v2970 = vpack.c.b16 %v2732, %v2731
        %v2971 = vpack.c.b16 %v2734, %v2733
        %v2972 = vpack.c.b16 %v2736, %v2735
        %v2973 = vpack.c.b16 %v2738, %v2737
        %v2974 = vpack.c.b16 %v2740, %v2739
        %v2975 = vpack.c.b16 %v2742, %v2741
        %v2976 = vpack.c.b16 %v2744, %v2743
        %v2977 = vpack.c.b16 %v2746, %v2745
        %v2978 = vpack.c.b16 %v2748, %v2747
        %v2979 = vpack.c.b16 %v2750, %v2749
        %v2980 = vpack.c.b16 %v2752, %v2751
        %v2981 = vpack.c.b16 %v2754, %v2753
        %v2982 = vpack.c.b16 %v2756, %v2755
        %v2983 = vpack.c.b16 %v2758, %v2757
        %v2984 = vpack.c.b16 %v2760, %v2759
        %v2985 = vpack.c.b16 %v2762, %v2761
        %v2986 = vpack.c.b16 %v2764, %v2763
        %v2987 = vpack.c.b16 %v2766, %v2765
        %v2988 = vpack.c.b16 %v2768, %v2767
        %v2989 = vpack.c.b16 %v2770, %v2769
        %v2990 = vpack.c.b16 %v2772, %v2771
        %v2991 = vpack.c.b16 %v2774, %v2773
        %v2992 = vpack.c.b16 %v2776, %v2775
        %v2993 = vpack.c.b16 %v2778, %v2777
        %v2994 = vpack.c.b16 %v2780, %v2779
        %v2995 = vpack.c.b16 %v2782, %v2781
        %v2996 = vpack.c.b16 %v2784, %v2783
        %v2997 = vpack.c.b16 %v2786, %v2785
        %v2998 = vpack.c.b16 %v2788, %v2787
        %v2999 = vpack.c.b16 %v2790, %v2789
        %v3000 = vpack.c.b16 %v2792, %v2791
        %v3001 = vpack.c.b16 %v2794, %v2793
        %v3002 = vpack.c.b16 %v2796, %v2795
        %v3003 = vpack.c.b16 %v2798, %v2797
        %v3004 = vpack.c.b16 %v2800, %v2799
        %v3005 = vpack.c.b16 %v2802, %v2801
        %v3006 = vpack.c.b16 %v2804, %v2803
        %v3007 = vpack.c.b16 %v2806, %v2805
        %v3008 = vpack.c.b16 %v2808, %v2807
        %v3009 = vpack.c.b16 %v2810, %v2809
        %v3010 = vpack.c.b16 %v2812, %v2811
        %v3011 = vpack.c.b16 %v2814, %v2813
        %v3012 = vpack.c.b16 %v2816, %v2815
        %v3013 = vpack.c.b16 %v2818, %v2817
        %v3014 = vpack.c.b16 %v2820, %v2819
        %v3015 = vpack.c.b16 %v2822, %v2821
        %v3016 = vpack.c.b16 %v2824, %v2823
        %v3017 = vpack.c.b16 %v2826, %v2825
        %v3018 = vpack.c.b16 %v2828, %v2827
        %v3019 = vpack.c.b16 %v2830, %v2829
        %v3020 = vpack.c.b16 %v2832, %v2831
        %v3021 = vpack.c.b16 %v2834, %v2833
        %v3022 = vpack.c.b16 %v2836, %v2835
        %v3023 = vpack.c.b16 %v2838, %v2837
        %v3024 = vpack.c.b16 %v2840, %v2839
        %v3025 = vpack.c.b16 %v2842, %v2841
        %v3026 = vpack.c.b16 %v2844, %v2843
        %v3027 = vpack.c.b16 %v2846, %v2845
        %v3028 = vpack.c.b16 %v2848, %v2847
        %v3029 = vpack.c.b16 %v2850, %v2849
        %v3030 = vpack.c.b16 %v2852, %v2851
        %v3031 = vpack.c.b16 %v2854, %v2853
        %v3032 = vpack.c.b16 %v2856, %v2855
        %v3033 = vpack.c.b16 %v2858, %v2857
        %v3034 = vpack.c.b16 %v2860, %v2859
        %v3035 = vpack.c.b16 %v2862, %v2861
        %v3036 = vpack.c.b16 %v2864, %v2863
        %v3037 = vpack.c.b16 %v2866, %v2865
        %v3038 = vpack.c.b16 %v2868, %v2867
        %v3039 = vpack.c.b16 %v2870, %v2869
        %v3040 = vpack.c.b16 %v2872, %v2871
        %v3041 = vpack.c.b16 %v2874, %v2873
        %v3042 = vpack.c.b16 %v2876, %v2875
        %v3043 = vpack.c.b16 %v2878, %v2877
        %v3044 = vpack.c.b16 %v2880, %v2879
        %v3045 = vpack.c.b16 %v2882, %v2881
        %v3046 = vpack.c.b16 %v2884, %v2883
        %v3047 = vpack.c.b16 %v2886, %v2885
        %v3048 = vpack.c.b16 %v2888, %v2887
        %v3049 = vpack.c.b16 %v2890, %v2889
        %v3050 = vpack.c.b16 %v2892, %v2891
        %v3051 = vpack.c.b16 %v2894, %v2893
        %v3052 = vpack.c.b16 %v2896, %v2895
        %v3053 = vpack.c.b16 %v2898, %v2897
        %v3054 = vpack.c.b16 %v2900, %v2899
        %v3055 = vpack.c.b16 %v2902, %v2901
        %v3056 = vpack.c.b16 %v2904, %v2903
        %v3057 = vpack.c.b16 %v2906, %v2905
        %v3058 = vpack.c.b16 %v2908, %v2907
        %v3059 = vpack.c.b16 %v2910, %v2909
        %v3060 = vpack.c.b16 %v2912, %v2911
        %v3061 = vpack.c.b16 %v2914, %v2913
        %v3062 = vpack.c.b16 %v2916, %v2915
        %v3063 = vpack.c.b16 %v2918, %v2917
        %v3064 = vpack.c.b16 %v2920, %v2919
        %v3065 = vpack.c.b16 %v2922, %v2921
        %v3066 = vpack.c.b16 %v2924, %v2923
        %v3067 = vpack.c.b16 %v2926, %v2925
        %v3068 = vpack.c.b16 %v2928, %v2927
        %v3069 = vpack.c.b16 %v2930, %v2929
        %v3070 = vpack.c.b16 %v2932, %v2931
        %v3071 = vpack.c.b16 %v2934, %v2933
        %v3072 = vpack.c.b16 %v2936, %v2935
        %v3073 = vpack.c.b16 %v2938, %v2937
        %v3074 = vpack.c.b16 %v2940, %v2939
        %v3075 = vpack.c.b16 %v2942, %v2941
        %v3076 = vpack.c.b16 %v2944, %v2943
        %v3077 = vpack.c.b16 %v2946, %v2945
        %v3078 = vpack.c.b16 %v2948, %v2947
        %v3079 = vpack.c.b16 %v2950, %v2949
        %v3080 = vpack.c.b16 %v2952, %v2951
        %3209 = vmatpush.bf16.msra.mxu0 %v2960
        %3210 = vmatpush.bf16.msra.mxu0 %v2959
        %3211 = vmatpush.bf16.msra.mxu0 %v2958
        %3212 = vmatpush.bf16.msra.mxu0 %v2957
        %3213 = vmatpush.bf16.msra.mxu0 %v2956
        %3214 = vmatpush.bf16.msra.mxu0 %v2955
        %3215 = vmatpush.bf16.msra.mxu0 %v2954
        %3216 = vmatpush.bf16.msra.mxu0 %v2953
        %3217 = vmatmul.bf16.gmra.mxu0 %v2165
        %v3218 = vpop.f32.mrf.mxu0
        %v3219 = vadd.f32 %v2439, %v3218
        %v3220 = vpop.f32.mrf.mxu0
        %3221 = vdwg.mxu0
        %3222 = vmatpush.bf16.msra.mxu0 %v2968
        %3223 = vmatpush.bf16.msra.mxu0 %v2967
        %3224 = vmatpush.bf16.msra.mxu0 %v2966
        %3225 = vmatpush.bf16.msra.mxu0 %v2965
        %3226 = vmatpush.bf16.msra.mxu0 %v2964
        %3227 = vmatpush.bf16.msra.mxu0 %v2963
        %3228 = vmatpush.bf16.msra.mxu0 %v2962
        %3229 = vmatpush.bf16.msra.mxu0 %v2961
        %3230 = vmatmul.bf16.gmra.mxu0 %v2166
        %v3231 = vpop.f32.mrf.mxu0
        %v3232 = vadd.f32 %v3219, %v3231
        %v3233 = vpop.f32.mrf.mxu0
        %3234 = vdwg.mxu0
        %3235 = vmatpush.bf16.msra.mxu0 %v2976
        %3236 = vmatpush.bf16.msra.mxu0 %v2975
        %3237 = vmatpush.bf16.msra.mxu0 %v2974
        %3238 = vmatpush.bf16.msra.mxu0 %v2973
        %3239 = vmatpush.bf16.msra.mxu0 %v2972
        %3240 = vmatpush.bf16.msra.mxu0 %v2971
        %3241 = vmatpush.bf16.msra.mxu0 %v2970
        %3242 = vmatpush.bf16.msra.mxu0 %v2969
        %3243 = vmatmul.bf16.gmra.mxu0 %v2167
        %v3244 = vpop.f32.mrf.mxu0
        %v3245 = vadd.f32 %v3232, %v3244
        %v3246 = vpop.f32.mrf.mxu0
        %3247 = vdwg.mxu0
        %3248 = vmatpush.bf16.msra.mxu0 %v2984
        %3249 = vmatpush.bf16.msra.mxu0 %v2983
        %3250 = vmatpush.bf16.msra.mxu0 %v2982
        %3251 = vmatpush.bf16.msra.mxu0 %v2981
        %3252 = vmatpush.bf16.msra.mxu0 %v2980
        %3253 = vmatpush.bf16.msra.mxu0 %v2979
        %3254 = vmatpush.bf16.msra.mxu0 %v2978
        %3255 = vmatpush.bf16.msra.mxu0 %v2977
        %3256 = vmatmul.bf16.gmra.mxu0 %v2168
        %v3257 = vpop.f32.mrf.mxu0
        %v3258 = vadd.f32 %v3245, %v3257
        %v3259 = vpop.f32.mrf.mxu0
        %3260 = vdwg.mxu0
        %3261 = vmatpush.bf16.msra.mxu0 %v2992
        %3262 = vmatpush.bf16.msra.mxu0 %v2991
        %3263 = vmatpush.bf16.msra.mxu0 %v2990
        %3264 = vmatpush.bf16.msra.mxu0 %v2989
        %3265 = vmatpush.bf16.msra.mxu0 %v2988
        %3266 = vmatpush.bf16.msra.mxu0 %v2987
        %3267 = vmatpush.bf16.msra.mxu0 %v2986
        %3268 = vmatpush.bf16.msra.mxu0 %v2985
        %3269 = vmatmul.bf16.gmra.mxu0 %v2169
        %v3270 = vpop.f32.mrf.mxu0
        %v3271 = vadd.f32 %v3258, %v3270
        %v3272 = vpop.f32.mrf.mxu0
        %3273 = vdwg.mxu0
        %3274 = vmatpush.bf16.msra.mxu0 %v3000
        %3275 = vmatpush.bf16.msra.mxu0 %v2999
        %3276 = vmatpush.bf16.msra.mxu0 %v2998
        %3277 = vmatpush.bf16.msra.mxu0 %v2997
        %3278 = vmatpush.bf16.msra.mxu0 %v2996
        %3279 = vmatpush.bf16.msra.mxu0 %v2995
        %3280 = vmatpush.bf16.msra.mxu0 %v2994
        %3281 = vmatpush.bf16.msra.mxu0 %v2993
        %3282 = vmatmul.bf16.gmra.mxu0 %v2170
        %v3283 = vpop.f32.mrf.mxu0
        %v3284 = vadd.f32 %v3271, %v3283
        %v3285 = vpop.f32.mrf.mxu0
        %3286 = vdwg.mxu0
        %3287 = vmatpush.bf16.msra.mxu0 %v3008
        %3288 = vmatpush.bf16.msra.mxu0 %v3007
        %3289 = vmatpush.bf16.msra.mxu0 %v3006
        %3290 = vmatpush.bf16.msra.mxu0 %v3005
        %3291 = vmatpush.bf16.msra.mxu0 %v3004
        %3292 = vmatpush.bf16.msra.mxu0 %v3003
        %3293 = vmatpush.bf16.msra.mxu0 %v3002
        %3294 = vmatpush.bf16.msra.mxu0 %v3001
        %3295 = vmatmul.bf16.gmra.mxu0 %v2171
        %v3296 = vpop.f32.mrf.mxu0
        %v3297 = vadd.f32 %v3284, %v3296
        %v3298 = vpop.f32.mrf.mxu0
        %3299 = vdwg.mxu0
        %3300 = vmatpush.bf16.msra.mxu0 %v3016
        %3301 = vmatpush.bf16.msra.mxu0 %v3015
        %3302 = vmatpush.bf16.msra.mxu0 %v3014
        %3303 = vmatpush.bf16.msra.mxu0 %v3013
        %3304 = vmatpush.bf16.msra.mxu0 %v3012
        %3305 = vmatpush.bf16.msra.mxu0 %v3011
        %3306 = vmatpush.bf16.msra.mxu0 %v3010
        %3307 = vmatpush.bf16.msra.mxu0 %v3009
        %3308 = vmatmul.bf16.gmra.mxu0 %v2172
        %v3309 = vpop.f32.mrf.mxu0
        %v3310 = vadd.f32 %v3297, %v3309
        %v3311 = vpop.f32.mrf.mxu0
        %3312 = vdwg.mxu0
        %3313 = vmatpush.bf16.msra.mxu0 %v3024
        %3314 = vmatpush.bf16.msra.mxu0 %v3023
        %3315 = vmatpush.bf16.msra.mxu0 %v3022
        %3316 = vmatpush.bf16.msra.mxu0 %v3021
        %3317 = vmatpush.bf16.msra.mxu0 %v3020
        %3318 = vmatpush.bf16.msra.mxu0 %v3019
        %3319 = vmatpush.bf16.msra.mxu0 %v3018
        %3320 = vmatpush.bf16.msra.mxu0 %v3017
        %3321 = vmatmul.bf16.gmra.mxu0 %v2173
        %v3322 = vpop.f32.mrf.mxu0
        %v3323 = vadd.f32 %v3310, %v3322
        %v3324 = vpop.f32.mrf.mxu0
        %3325 = vdwg.mxu0
        %3326 = vmatpush.bf16.msra.mxu0 %v3032
        %3327 = vmatpush.bf16.msra.mxu0 %v3031
        %3328 = vmatpush.bf16.msra.mxu0 %v3030
        %3329 = vmatpush.bf16.msra.mxu0 %v3029
        %3330 = vmatpush.bf16.msra.mxu0 %v3028
        %3331 = vmatpush.bf16.msra.mxu0 %v3027
        %3332 = vmatpush.bf16.msra.mxu0 %v3026
        %3333 = vmatpush.bf16.msra.mxu0 %v3025
        %3334 = vmatmul.bf16.gmra.mxu0 %v2174
        %v3335 = vpop.f32.mrf.mxu0
        %v3336 = vadd.f32 %v3323, %v3335
        %v3337 = vpop.f32.mrf.mxu0
        %3338 = vdwg.mxu0
        %3339 = vmatpush.bf16.msra.mxu0 %v3040
        %3340 = vmatpush.bf16.msra.mxu0 %v3039
        %3341 = vmatpush.bf16.msra.mxu0 %v3038
        %3342 = vmatpush.bf16.msra.mxu0 %v3037
        %3343 = vmatpush.bf16.msra.mxu0 %v3036
        %3344 = vmatpush.bf16.msra.mxu0 %v3035
        %3345 = vmatpush.bf16.msra.mxu0 %v3034
        %3346 = vmatpush.bf16.msra.mxu0 %v3033
        %3347 = vmatmul.bf16.gmra.mxu0 %v2175
        %v3348 = vpop.f32.mrf.mxu0
        %v3349 = vadd.f32 %v3336, %v3348
        %v3350 = vpop.f32.mrf.mxu0
        %3351 = vdwg.mxu0
        %3352 = vmatpush.bf16.msra.mxu0 %v3048
        %3353 = vmatpush.bf16.msra.mxu0 %v3047
        %3354 = vmatpush.bf16.msra.mxu0 %v3046
        %3355 = vmatpush.bf16.msra.mxu0 %v3045
        %3356 = vmatpush.bf16.msra.mxu0 %v3044
        %3357 = vmatpush.bf16.msra.mxu0 %v3043
        %3358 = vmatpush.bf16.msra.mxu0 %v3042
        %3359 = vmatpush.bf16.msra.mxu0 %v3041
        %3360 = vmatmul.bf16.gmra.mxu0 %v2176
        %v3361 = vpop.f32.mrf.mxu0
        %v3362 = vadd.f32 %v3349, %v3361
        %v3363 = vpop.f32.mrf.mxu0
        %3364 = vdwg.mxu0
        %3365 = vmatpush.bf16.msra.mxu0 %v3056
        %3366 = vmatpush.bf16.msra.mxu0 %v3055
        %3367 = vmatpush.bf16.msra.mxu0 %v3054
        %3368 = vmatpush.bf16.msra.mxu0 %v3053
        %3369 = vmatpush.bf16.msra.mxu0 %v3052
        %3370 = vmatpush.bf16.msra.mxu0 %v3051
        %3371 = vmatpush.bf16.msra.mxu0 %v3050
        %3372 = vmatpush.bf16.msra.mxu0 %v3049
        %3373 = vmatmul.bf16.gmra.mxu0 %v2177
        %v3374 = vpop.f32.mrf.mxu0
        %v3375 = vadd.f32 %v3362, %v3374
        %v3376 = vpop.f32.mrf.mxu0
        %3377 = vdwg.mxu0
        %3378 = vmatpush.bf16.msra.mxu0 %v3064
        %3379 = vmatpush.bf16.msra.mxu0 %v3063
        %3380 = vmatpush.bf16.msra.mxu0 %v3062
        %3381 = vmatpush.bf16.msra.mxu0 %v3061
        %3382 = vmatpush.bf16.msra.mxu0 %v3060
        %3383 = vmatpush.bf16.msra.mxu0 %v3059
        %3384 = vmatpush.bf16.msra.mxu0 %v3058
        %3385 = vmatpush.bf16.msra.mxu0 %v3057
        %3386 = vmatmul.bf16.gmra.mxu0 %v2178
        %v3387 = vpop.f32.mrf.mxu0
        %v3388 = vadd.f32 %v3375, %v3387
        %v3389 = vpop.f32.mrf.mxu0
        %3390 = vdwg.mxu0
        %3391 = vmatpush.bf16.msra.mxu0 %v3072
        %3392 = vmatpush.bf16.msra.mxu0 %v3071
        %3393 = vmatpush.bf16.msra.mxu0 %v3070
        %3394 = vmatpush.bf16.msra.mxu0 %v3069
        %3395 = vmatpush.bf16.msra.mxu0 %v3068
        %3396 = vmatpush.bf16.msra.mxu0 %v3067
        %3397 = vmatpush.bf16.msra.mxu0 %v3066
        %3398 = vmatpush.bf16.msra.mxu0 %v3065
        %3399 = vmatmul.bf16.gmra.mxu0 %v2179
        %v3400 = vpop.f32.mrf.mxu0
        %v3401 = vadd.f32 %v3388, %v3400
        %v3402 = vpop.f32.mrf.mxu0
        %3403 = vdwg.mxu0
        %3404 = vmatpush.bf16.msra.mxu0 %v3080
        %3405 = vmatpush.bf16.msra.mxu0 %v3079
        %3406 = vmatpush.bf16.msra.mxu0 %v3078
        %3407 = vmatpush.bf16.msra.mxu0 %v3077
        %3408 = vmatpush.bf16.msra.mxu0 %v3076
        %3409 = vmatpush.bf16.msra.mxu0 %v3075
        %3410 = vmatpush.bf16.msra.mxu0 %v3074
        %3411 = vmatpush.bf16.msra.mxu0 %v3073
        %3412 = vmatmul.bf16.gmra.mxu0 %v2180
        %v3413 = vpop.f32.mrf.mxu0
        %v3414 = vadd.f32 %v3401, %v3413
        %v3415 = vpop.f32.mrf.mxu0
        %3416 = vdwg.mxu0
        %v3417 = vadd.f32 %v1708, %v3414
        %v3418 = vld [vmem:[%s1058] sm:$0x1]
        %v3419 = vld [vmem:[%s1061] sm:$0x1]
        %v3420 = vsel %vm1262, %v3417, 0.0
        %3421 = vadd.xlane.f32.xlu0 %v3420
        %v3422 = vpop.xlane.xlu0 %3421
        %v3423 = vmul.f32 %v3422, %v1681
        %v3424 = vsub.f32 %v3417, %v3423
        %v3425 = vmul.f32 %v3424, %v3424
        %v3426 = vsel %vm1262, %v3425, 0.0
        %3427 = vadd.xlane.f32.xlu0 %v3426
        %v3428 = vpop.xlane.xlu0 %3427
        %v3429 = vmul.f32 %v3428, %v1681
        %v3430 = vadd.f32 %v3429, 1e-05
        %v3431 = vrsqrt.pop %v3430
        %v3432 = vmul.f32 %v3431, %v3430
        %v3433 = vmul.f32 %v3432, %v3431
        %v3434 = vmul.f32 0.5, %v3433
        %v3435 = vsub.f32 1.5, %v3434
        %v3436 = vmul.f32 %v3431, %v3435
        %vm3437 = vweird.f32 %v3430
        %vm3438 = vweird.f32 %v3431
        %vm3439 = vmor %vm3437, %vm3438
        %v3440 = vsel %vm3439, %v3431, %v3436
        %v3441 = vmul.f32 %v3424, %v3440
        %v3443 = vperm.slane %v3418, 0
        %v3445 = vmul.f32 %v3441, %v3443
        %v3447 = vperm.slane %v3419, 0
        %v3449 = vadd.f32 %v3445, %v3447
        %3450 = vst.msk [vmem:[#allocation2] sm:$0xff] %vm1262, %v3449
        %p3451 = scmp.eq.s32.totalorder %s44, 1
        // Predicated region
        $region125: #{tpu_custom_call.1} parent=119 // pred_check
          %p3452 = pneg %p3451
        $region126: #{tpu_custom_call.1} parent=119 // pred_check_branch
          %3454 = sbr.rel (%p3452) target = $region128
        $region127: #{tpu_custom_call.1} parent=119 // pred_region
          %v3455 = vsel %vm1262, %v3449, 0.0
          %v3456 = vrot.slane %v3455, 4
          %v3457 = vadd.f32 %v3455, %v3456
          %v3458 = vrot.slane %v3457, 2
          %v3459 = vadd.f32 %v3457, %v3458
          %v3460 = vrot.slane %v3459, 1
          %v3461 = vadd.f32 %v3459, %v3460
          %v3462 = vrcp.pop 8.0
          %v3463 = vmul.f32 8.0, %v3462
          %v3464 = vsub.f32 1.0, %v3463
          %v3465 = vmul.f32 %v3462, %v3464
          %v3466 = vadd.f32 %v3462, %v3465
          %vm3467 = vweird.f32 %v3462
          %v3468 = vsel %vm3467, %v3462, %v3466
          %v3469 = vmul.f32 %v3461, %v3468
          %v3470 = vpack.c.bf16 %v3469, %v3469
          %v3471 = vld [vmem:[%s23] sm:$0xf]
          %v3472 = vld [vmem:[%s23 + $0x4] sm:$0xf]
          %v3473 = vld [vmem:[%s23 + $0x8] sm:$0xf]
          %v3474 = vld [vmem:[%s23 + $0xc] sm:$0xf]
          %v3475 = vld [vmem:[%s24] sm:$0x1]
          %v3480 = vunpack.c.l.b16 %v3471
          %v3481 = vunpack.c.l.b16 %v3472
          %v3482 = vunpack.c.l.b16 %v3473
          %v3483 = vunpack.c.l.b16 %v3474
          %v3484 = vpack.c.b16 %v3481, %v3480
          %v3485 = vpack.c.b16 %v3483, %v3482
          %v3489 = vsel %vm1262, %v3470, 0
          %3491 = vmatpush.bf16.msra.mxu0 0
          %3492 = vmatpush.bf16.msra.mxu0 0
          %3493 = vmatpush.bf16.msra.mxu0 0
          %3494 = vmatpush.bf16.msra.mxu0 0
          %3495 = vmatpush.bf16.msra.mxu0 0
          %3496 = vmatpush.bf16.msra.mxu0 0
          %3497 = vmatpush.bf16.msra.mxu0 %v3485
          %3498 = vmatpush.bf16.msra.mxu0 %v3484
          %3499 = vmatmul.bf16.gmra.mxu0 %v3489
          %v3500 = vpop.f32.mrf.mxu0
          %v3501 = vadd.f32 %v3475, %v3500
          %v3502 = vpop.f32.mrf.mxu0
          %3503 = vdwg.mxu0
          %3504 = vst [vmem:[%s990] sm:$0x1] %v3501
        $region128: #{tpu_custom_call.1} parent=119 // pred_fallthru
          _
        %s3505 = sand.u32 %s679, 1
        %s3506 = scalar_lea.sflag [#allocation4], %s3505
        %s3507 = sand.u32 %s679, 1
        %s3508 = scalar_lea.vmem [#allocation3], %s3507
        // Predicated region
        $region129: #{tpu_custom_call.1} parent=119 // pred_check
          %p3509 = pneg %p689
        $region130: #{tpu_custom_call.1} parent=119 // pred_check_branch
          %3511 = sbr.rel (%p3509) target = $region132
        $region131: #{tpu_custom_call.1} parent=119 // pred_region
          %3513 = vsyncadd %s3506, 0
          %s3514 = scalar_lea.hbm %s25, %s43
          %s3516 = sshll.u32 %s3508, 4
          %s3517 = int_to_ptr.vmem [resolvable:$true] %s3516
          %s3518 = sshll.u32 %s3514, 4
          %s3519 = int_to_ptr.hbm [resolvable:$true] %s3518
          %3521 = dma.vmem_to_hbm [thread:$0]  %s3517, 16, %s3519, %s3506
        $region132: #{tpu_custom_call.1} parent=119 // pred_fallthru
          _
      $region120: #{tpu_custom_call.1} parent=5 // pred_fallthru
        _
      %p3522 = scmp.le.s32.totalorder 2, %s34
      // Predicated region
      $region133: #{tpu_custom_call.1} parent=5 // pred_check
        %p3523 = pneg %p3522
      $region134: #{tpu_custom_call.1} parent=5 // pred_check_branch
        %3525 = sbr.rel (%p3523) target = $region136
      $region135: #{tpu_custom_call.1} parent=5 // pred_region
        %s3526 = ssub.s32 %s34, 2
        // Predicated region
        $region137: #{tpu_custom_call.1} parent=135 // pred_check
          %p3527 = pneg %p695
        $region138: #{tpu_custom_call.1} parent=135 // pred_check_branch
          %3529 = sbr.rel (%p3527) target = $region140
        $region139: #{tpu_custom_call.1} parent=135 // pred_region
          %s3530 = sand.u32 %s680, 1
          %s3531 = scalar_lea.sflag [#allocation4], %s3530
          %s3532 = sand.u32 %s680, 1
          %s3533 = scalar_lea.vmem [#allocation3], %s3532
          %3535 = dma.done %s3531, 16
        $region140: #{tpu_custom_call.1} parent=135 // pred_fallthru
          _
      $region136: #{tpu_custom_call.1} parent=5 // pred_fallthru
        _
    $region6: #{tpu_custom_call.1} parent=1 // loop_footer
      %s38 = sadd.s32 1, %s34
    $region7: #{tpu_custom_call.1} parent=1 // loop_footer_branch
      %33 = sbr.rel target = $region3
    $region8: #{tpu_custom_call.1} parent=1 // loop_exit
      _
    %3536 = vsyncpa [#allocation4], 1
    %s3537 = scalar_lea.sflag [#allocation4], 1
    %3538 = vsyncpa %s3537, 1

</llo_original>
